<compile_context>
chip_gen: v7x
topology: tpu7x:2x2x1
jax: 0.10.0
libtpu: 0.0.40
codegen_flags: <defaults>
</compile_context>

<pallas_src>
import math

import numpy as np
import jax
import jax.numpy as jnp
from jax import lax
from jax.experimental import pallas as pl
from jax.experimental.pallas import tpu as pltpu

# ---- hyperparameters (small, consistent with the module's __init__ signature) ----
EMBED_DIM = 32
NUM_HEADS = 4
HEAD_DIM = EMBED_DIM // NUM_HEADS
FF_DIM = 64
NUM_LAYERS = 2
MAX_SEQ_LEN = 8
NUM_CLASSES = 2
GENE_VOCAB = 50
NUM_CELL_TYPES = 6
BATCH = 2
LN_EPS = 1e-5
NEG_INF = -1e9

B, S, D, H, HD = BATCH, MAX_SEQ_LEN, EMBED_DIM, NUM_HEADS, HEAD_DIM
FF, L, C = FF_DIM, NUM_LAYERS, NUM_CLASSES
T = B * S          # 16 tokens (batch folded into rows)
R = B * H * S      # 64 rows of the block-diagonal attention (b, h, s)

# ------------------------------------------------------------------
# Packed-slab layouts (static, 8-row aligned, lane offset always 0)
# ------------------------------------------------------------------
# per-call data slab: (DATA_ROWS, 64)
DATA_LANES = 64
BIAS_R0 = 0            # (R, R)  block-diagonal attention bias (grm + key-padding + cross-(b,h) mask)
XIN_R0 = R             # (T, D)  encoder input  (gene_emb*value + cell_emb)
POOL_R0 = R + T        # (B, T)  masked-mean pooling matrix
DATA_ROWS = 88         # 82 rounded up to a multiple of 8

# static weight slab: (W_ROWS, 128), packed once in pack_params
W_LANES = 128
REP_R0 = 0                       # (R, T)   token row -> (b,h,s) row replication (0/1)
REPT_R0 = R                      # (T, R)   REP^T (head merge)
HM_R0 = R + T                    # (R, D)   per-row head lane mask (0/1)
ENC_R0 = HM_R0 + R               # row +0: enc_gamma, +1: enc_beta, +2: cls_b
CLSW_R0 = ENC_R0 + 8             # (D, C)
LAYER_R0 = CLSW_R0 + D

OFF_WQKV = 0                     # (D, 3D)
OFF_WO = OFF_WQKV + D            # (D, D)
OFF_W1 = OFF_WO + D              # (D, FF)
OFF_W2 = OFF_W1 + D              # (FF, D)
OFF_VEC = OFF_W2 + FF            # 8 rows: bqkv, bo, ln1_g, ln1_b, b1, b2, ln2_g, ln2_b
LAYER_STRIDE = OFF_VEC + 8       # 168
W_ROWS = LAYER_R0 + L * LAYER_STRIDE   # 520


# ------------------------------------------------------------------
# Static constants (numpy, built once at import time)
# ------------------------------------------------------------------
def _build_constants():
    r = np.arange(R)
    b_of_r = r // (H * S)
    h_of_r = (r // S) % H
    s_of_r = r % S
    rep = np.zeros((R, T), np.float32)
    rep[r, b_of_r * S + s_of_r] = 1.0                                   # row replication
    headmask = (np.arange(D)[None, :] // HD == h_of_r[:, None]).astype(np.float32)
    blockdiag = np.kron(np.eye(B * H, dtype=np.float32), np.ones((S, S), np.float32))
    offdiag_neg = ((1.0 - blockdiag) * NEG_INF).astype(np.float32)      # mask cross-(b,h) blocks
    return rep, headmask, offdiag_neg


_REP_NP, _HEADMASK_NP, _OFFDIAG_NEG = _build_constants()


def _layernorm(h, gamma, beta):
    mu = jnp.mean(h, axis=-1, keepdims=True)
    var = jnp.mean((h - mu) ** 2, axis=-1, keepdims=True)
    return (h - mu) * lax.rsqrt(var + LN_EPS) * gamma + beta


# ------------------------------------------------------------------
# Single fused kernel: encoder LN + NUM_LAYERS transformer layers + pooling + classifier.
# ------------------------------------------------------------------
def fused_forward_kernel(data_ref, w_ref, logits_ref, attn_ref):
    f32 = jnp.float32

    # ---- per-call data ----
    bias_bd = data_ref[BIAS_R0:BIAS_R0 + R, 0:R]           # (64, 64)
    x = data_ref[XIN_R0:XIN_R0 + T, 0:D]                   # (16, 32)
    pool = data_ref[POOL_R0:POOL_R0 + B, 0:T]              # (2, 16)

    # ---- static constants / head-bookkeeping matrices ----
    rep = w_ref[REP_R0:REP_R0 + R, 0:T]                    # (64, 16)
    rept = w_ref[REPT_R0:REPT_R0 + T, 0:R]                 # (16, 64)
    hmask = w_ref[HM_R0:HM_R0 + R, 0:D]                    # (64, 32)
    enc_g = w_ref[ENC_R0:ENC_R0 + 1, 0:D]
    enc_b = w_ref[ENC_R0 + 1:ENC_R0 + 2, 0:D]
    cls_b = w_ref[ENC_R0 + 2:ENC_R0 + 3, 0:C]
    cls_w = w_ref[CLSW_R0:CLSW_R0 + D, 0:C]

    # ---- CellStateEncoder: (gene_emb * value + cell_type_emb) already summed in wrapper; LayerNorm here
    x = _layernorm(x, enc_g, enc_b)

    scale = 1.0 / math.sqrt(HD)
    for l in range(L):                                      # static layer loop (unrolled)
        base = LAYER_R0 + l * LAYER_STRIDE
        wqkv = w_ref[base + OFF_WQKV:base + OFF_WQKV + D, 0:3 * D]
        wo = w_ref[base + OFF_WO:base + OFF_WO + D, 0:D]
        w1 = w_ref[base + OFF_W1:base + OFF_W1 + D, 0:FF]
        w2 = w_ref[base + OFF_W2:base + OFF_W2 + FF, 0:D]
        v0 = base + OFF_VEC
        bqkv = w_ref[v0 + 0:v0 + 1, 0:3 * D]
        bo = w_ref[v0 + 1:v0 + 2, 0:D]
        ln1_g = w_ref[v0 + 2:v0 + 3, 0:D]
        ln1_b = w_ref[v0 + 3:v0 + 4, 0:D]
        b1 = w_ref[v0 + 4:v0 + 5, 0:FF]
        b2 = w_ref[v0 + 5:v0 + 6, 0:D]
        ln2_g = w_ref[v0 + 6:v0 + 7, 0:D]
        ln2_b = w_ref[v0 + 7:v0 + 8, 0:D]

        # fused QKV projection over the whole batch: (16,32)@(32,96)
        qkv = jnp.dot(x, wqkv, preferred_element_type=f32) + bqkv
        # replicate token rows head-major ((64,16)@(16,96)), then restrict each row to its head's lanes
        qkv_r = jnp.dot(rep, qkv, preferred_element_type=f32)          # (64, 96)
        q_e = qkv_r[:, 0:D] * hmask                                    # (64, 32)
        k_e = qkv_r[:, D:2 * D] * hmask
        v_e = qkv_r[:, 2 * D:3 * D] * hmask

        # all (batch, head) score blocks in ONE matmul; off-diagonal blocks masked by bias_bd (-1e9)
        s = lax.dot_general(q_e, k_e, (((1,), (1,)), ((), ())),
                            preferred_element_type=f32) * scale + bias_bd   # (64, 64)
        s = s - jnp.max(s, axis=-1, keepdims=True)
        e = jnp.exp(s)
        p = e * pl.reciprocal(jnp.sum(e, axis=-1, keepdims=True), approx=True)
        attn_ref[:, l * R:(l + 1) * R] = p                  # lane-dense (64, 128) output slab

        # context, head merge and output projection: 3 clean matmuls, no concat / relayout
        ctx_e = jnp.dot(p, v_e, preferred_element_type=f32)            # (64, 32)
        ctx = jnp.dot(rept, ctx_e, preferred_element_type=f32)         # (16, 32)
        attn_out = jnp.dot(ctx, wo, preferred_element_type=f32) + bo

        # residual + LN, FFN (ReLU), residual + LN
        h1 = _layernorm(x + attn_out, ln1_g, ln1_b)
        f = jnp.maximum(jnp.dot(h1, w1, preferred_element_type=f32) + b1, 0.0)
        f = jnp.dot(f, w2, preferred_element_type=f32) + b2
        x = _layernorm(h1 + f, ln2_g, ln2_b)

    # masked-mean pooling (block-diagonal pooling matmul) + classifier
    pooled = jnp.dot(pool, x, preferred_element_type=f32)              # (2, 32)
    logits_ref[...] = jnp.dot(pooled, cls_w, preferred_element_type=f32) + cls_b


# ------------------------------------------------------------------
# JAX wrapper (jitted): gathers + per-call slab build + pallas_call + attention unpack
# ------------------------------------------------------------------
def _forward_core(weights_slab, gene_emb, cell_emb, gene_indices, gene_values,
                  cell_type_indices, attention_mask, grm):
    f32 = jnp.float32
    attention_mask = attention_mask.astype(f32)
    grm = grm.astype(f32)

    # encoder input: data-dependent embedding gathers stay in XLA and fuse with the value scaling
    ge = jnp.take(gene_emb, gene_indices, axis=0)                       # (B, S, D)
    ce = jnp.take(cell_emb, cell_type_indices, axis=0)                  # (B, D)
    x_in = (ge * gene_values.astype(f32)[:, :, None] + ce[:, None, :]).reshape(T, D)

    # block-diagonal attention bias: regulatory matrix + key-padding bias + cross-(b,h) -inf mask
    mask_bias = (1.0 - attention_mask) * NEG_INF                        # (B, S)
    col_bias = jnp.broadcast_to(mask_bias[:, None, :], (B, H, S)).reshape(R)
    bias_bd = jnp.tile(grm, (B * H, B * H)) + col_bias[None, :] + _OFFDIAG_NEG   # (R, R)

    # masked-mean pooling matrix (block-diagonal over batch)
    cnt = jnp.maximum(jnp.sum(attention_mask, axis=1, keepdims=True), 1.0)
    pool = (np.eye(B, dtype=np.float32)[:, :, None]
            * (attention_mask / cnt)[None, :, :]).reshape(B, T)         # (B, B*S)

    # pack the per-call data into ONE slab -> a single input DMA stream
    data = jnp.zeros((DATA_ROWS, DATA_LANES), f32)
    data = lax.dynamic_update_slice(data, bias_bd, (BIAS_R0, 0))
    data = lax.dynamic_update_slice(data, x_in, (XIN_R0, 0))
    data = lax.dynamic_update_slice(data, pool, (POOL_R0, 0))

    logits, attn_bd = pl.pallas_call(
        fused_forward_kernel,
        out_shape=(jax.ShapeDtypeStruct((B, C), f32),
                   jax.ShapeDtypeStruct((R, L * R), f32)),
        in_specs=[pl.BlockSpec(memory_space=pltpu.MemorySpace.VMEM),
                  pl.BlockSpec(memory_space=pltpu.MemorySpace.VMEM)],
        out_specs=(pl.BlockSpec(memory_space=pltpu.MemorySpace.VMEM),
                   pl.BlockSpec(memory_space=pltpu.MemorySpace.VMEM)),
    )(data, weights_slab)

    # unpack per-layer (B, H, S, S) attention weights from the diagonal blocks of the lane-dense slab
    idx = jnp.arange(B * H)
    attn_weights = []
    for l in range(L):
        p_bd = attn_bd[:, l * R:(l + 1) * R].reshape(B * H, S, B * H, S)
        attn_weights.append(p_bd[idx, :, idx, :].reshape(B, H, S, S))
    return logits, attn_weights


_forward_jit = jax.jit(_forward_core)


def ad_prediction_forward(packed, gene_indices, gene_values, cell_type_indices,
                          attention_mask=None, gene_regulatory_matrix=None):
    Bq, Sq = gene_indices.shape
    if attention_mask is None:
        attention_mask = jnp.ones((Bq, Sq), jnp.float32)
    if gene_regulatory_matrix is None:
        gene_regulatory_matrix = jnp.zeros((Sq, Sq), jnp.float32)
    return _forward_jit(packed["weights_slab"], packed["gene_emb"], packed["cell_emb"],
                        gene_indices, gene_values, cell_type_indices,
                        attention_mask, gene_regulatory_matrix)


# ------------------------------------------------------------------
# One-time parameter packing (hoisted out of the per-call path)
# ------------------------------------------------------------------
def pack_params(params):
    W = np.zeros((W_ROWS, W_LANES), np.float32)

    def put(r0, arr):
        a = np.asarray(arr, np.float32)
        W[r0:r0 + a.shape[0], 0:a.shape[1]] = a

    put(REP_R0, _REP_NP)
    put(REPT_R0, _REP_NP.T)
    put(HM_R0, _HEADMASK_NP)
    put(ENC_R0 + 0, params["enc_gamma"])
    put(ENC_R0 + 1, params["enc_beta"])
    put(ENC_R0 + 2, params["cls_b"])
    put(CLSW_R0, params["cls_w"])
    for l, lp in enumerate(params["layers"]):
        base = LAYER_R0 + l * LAYER_STRIDE
        wqkv = np.concatenate([np.asarray(lp["wq"]), np.asarray(lp["wk"]),
                               np.asarray(lp["wv"])], axis=1)
        bqkv = np.concatenate([np.asarray(lp["bq"]), np.asarray(lp["bk"]),
                               np.asarray(lp["bv"])], axis=1)
        put(base + OFF_WQKV, wqkv)
        put(base + OFF_WO, lp["wo"])
        put(base + OFF_W1, lp["w1"])
        put(base + OFF_W2, lp["w2"])
        v0 = base + OFF_VEC
        put(v0 + 0, bqkv)
        put(v0 + 1, lp["bo"])
        put(v0 + 2, lp["ln1_g"])
        put(v0 + 3, lp["ln1_b"])
        put(v0 + 4, lp["b1"])
        put(v0 + 5, lp["b2"])
        put(v0 + 6, lp["ln2_g"])
        put(v0 + 7, lp["ln2_b"])
    return {"weights_slab": jnp.asarray(W),
            "gene_emb": params["gene_emb"],
            "cell_emb": params["cell_emb"]}


# ------------------------------------------------------------------
# Deterministic parameter initialization (synthetic; shapes from __init__)
# ------------------------------------------------------------------
def init_params(key):
    keys = iter(jax.random.split(key, 8 + 12 * NUM_LAYERS))

    def nrm(shape, scale=0.05):
        return scale * jax.random.normal(next(keys), shape, jnp.float32)

    params = {
        "gene_emb": nrm((GENE_VOCAB, EMBED_DIM)),
        "cell_emb": nrm((NUM_CELL_TYPES, EMBED_DIM)),
        "enc_gamma": jnp.ones((1, EMBED_DIM), jnp.float32),
        "enc_beta": jnp.zeros((1, EMBED_DIM), jnp.float32),
        "cls_w": nrm((EMBED_DIM, NUM_CLASSES)),
        "cls_b": jnp.zeros((1, NUM_CLASSES), jnp.float32),
        "layers": [],
    }
    for _ in range(NUM_LAYERS):
        params["layers"].append({
            "wq": nrm((EMBED_DIM, EMBED_DIM)), "bq": jnp.zeros((1, EMBED_DIM), jnp.float32),
            "wk": nrm((EMBED_DIM, EMBED_DIM)), "bk": jnp.zeros((1, EMBED_DIM), jnp.float32),
            "wv": nrm((EMBED_DIM, EMBED_DIM)), "bv": jnp.zeros((1, EMBED_DIM), jnp.float32),
            "wo": nrm((EMBED_DIM, EMBED_DIM)), "bo": jnp.zeros((1, EMBED_DIM), jnp.float32),
            "ln1_g": jnp.ones((1, EMBED_DIM), jnp.float32),
            "ln1_b": jnp.zeros((1, EMBED_DIM), jnp.float32),
            "w1": nrm((EMBED_DIM, FF_DIM)), "b1": jnp.zeros((1, FF_DIM), jnp.float32),
            "w2": nrm((FF_DIM, EMBED_DIM)), "b2": jnp.zeros((1, EMBED_DIM), jnp.float32),
            "ln2_g": jnp.ones((1, EMBED_DIM), jnp.float32),
            "ln2_b": jnp.zeros((1, EMBED_DIM), jnp.float32),
        })
    return params


if __name__ == "__main__":
    key = jax.random.PRNGKey(0)
    pkey, k1, k2, k3, k4, k5 = jax.random.split(key, 6)
    params = init_params(pkey)
    packed = pack_params(params)   # one-time weight packing (not per-call)

    gene_indices = jax.random.randint(k1, (BATCH, MAX_SEQ_LEN), 0, GENE_VOCAB, dtype=jnp.int32)
    gene_values = jax.random.uniform(k2, (BATCH, MAX_SEQ_LEN), jnp.float32)
    cell_type_indices = jax.random.randint(k3, (BATCH,), 0, NUM_CELL_TYPES, dtype=jnp.int32)
    attention_mask = (jax.random.uniform(k4, (BATCH, MAX_SEQ_LEN)) > 0.2).astype(jnp.float32)
    attention_mask = attention_mask.at[:, 0].set(1.0)   # at least one valid token per row
    gene_regulatory_matrix = 0.1 * jax.random.normal(k5, (MAX_SEQ_LEN, MAX_SEQ_LEN), jnp.float32)

    # TODO(synk): CellStateEncoder / ScRNATransformer internals are not given in the reference;
    # a standard gene-embedding * value + cell-type-embedding encoder and post-norm transformer
    # encoder with masked-mean pooling head is implemented. Dropout is identity (eval mode).
    logits, attn_weights = ad_prediction_forward(
        packed, gene_indices, gene_values, cell_type_indices,
        attention_mask, gene_regulatory_matrix)

    jax.block_until_ready(logits)
    for a in attn_weights:
        jax.block_until_ready(a)

    assert logits.shape == (BATCH, NUM_CLASSES)
    assert len(attn_weights) == NUM_LAYERS
    assert all(a.shape == (BATCH, NUM_HEADS, MAX_SEQ_LEN, MAX_SEQ_LEN) for a in attn_weights)
    print("KERNEL_OK")
</pallas_src>

<mosaic_0001>
module attributes {stable_mosaic.version = 11 : i64} {
  func.func @fused_forward_kernel(%arg0: memref<88x64xf32, #tpu.memory_space<vmem>>, %arg1: memref<520x128xf32, #tpu.memory_space<vmem>>, %arg2: memref<2x2xf32, #tpu.memory_space<vmem>>, %arg3: memref<64x128xf32, #tpu.memory_space<vmem>>) attributes {dimension_semantics = [], scalar_prefetch = 0 : i64, scratch_operands = 0 : i64, tpu.core_type = #tpu.core_type<tc>} {
    %c0 = arith.constant 0 : index
    %c0_0 = arith.constant 0 : index
    %0 = vector.load %arg0[%c0, %c0_0] : memref<88x64xf32, #tpu.memory_space<vmem>>, vector<64x64xf32>
    %c64 = arith.constant 64 : index
    %c0_1 = arith.constant 0 : index
    %1 = vector.load %arg0[%c64, %c0_1] : memref<88x64xf32, #tpu.memory_space<vmem>>, vector<16x32xf32>
    %c80 = arith.constant 80 : index
    %c0_2 = arith.constant 0 : index
    %2 = vector.load %arg0[%c80, %c0_2] : memref<88x64xf32, #tpu.memory_space<vmem>>, vector<2x16xf32>
    %c0_3 = arith.constant 0 : index
    %c0_4 = arith.constant 0 : index
    %3 = vector.load %arg1[%c0_3, %c0_4] : memref<520x128xf32, #tpu.memory_space<vmem>>, vector<64x16xf32>
    %c64_5 = arith.constant 64 : index
    %c0_6 = arith.constant 0 : index
    %4 = vector.load %arg1[%c64_5, %c0_6] : memref<520x128xf32, #tpu.memory_space<vmem>>, vector<16x64xf32>
    %c80_7 = arith.constant 80 : index
    %c0_8 = arith.constant 0 : index
    %5 = vector.load %arg1[%c80_7, %c0_8] : memref<520x128xf32, #tpu.memory_space<vmem>>, vector<64x32xf32>
    %c144 = arith.constant 144 : index
    %c0_9 = arith.constant 0 : index
    %6 = vector.load %arg1[%c144, %c0_9] : memref<520x128xf32, #tpu.memory_space<vmem>>, vector<1x32xf32>
    %c145 = arith.constant 145 : index
    %c0_10 = arith.constant 0 : index
    %7 = vector.load %arg1[%c145, %c0_10] : memref<520x128xf32, #tpu.memory_space<vmem>>, vector<1x32xf32>
    %c146 = arith.constant 146 : index
    %c0_11 = arith.constant 0 : index
    %8 = vector.load %arg1[%c146, %c0_11] : memref<520x128xf32, #tpu.memory_space<vmem>>, vector<1x2xf32>
    %c152 = arith.constant 152 : index
    %c0_12 = arith.constant 0 : index
    %9 = vector.load %arg1[%c152, %c0_12] : memref<520x128xf32, #tpu.memory_space<vmem>>, vector<32x2xf32>
    %cst = arith.constant dense<0.000000e+00> : vector<16xf32>
    %10 = vector.multi_reduction <add>, %1, %cst [1] : vector<16x32xf32> to vector<16xf32>
    %11 = vector.shape_cast %10 : vector<16xf32> to vector<16x1xf32>
    %cst_13 = arith.constant 3.200000e+01 : f32
    %12 = vector.broadcast %cst_13 : f32 to vector<16x1xf32>
    %13 = arith.divf %11, %12 : vector<16x1xf32>
    %14 = vector.broadcast %13 : vector<16x1xf32> to vector<16x32xf32>
    %15 = arith.subf %1, %14 : vector<16x32xf32>
    %16 = arith.mulf %15, %15 : vector<16x32xf32>
    %cst_14 = arith.constant dense<0.000000e+00> : vector<16xf32>
    %17 = vector.multi_reduction <add>, %16, %cst_14 [1] : vector<16x32xf32> to vector<16xf32>
    %18 = vector.shape_cast %17 : vector<16xf32> to vector<16x1xf32>
    %cst_15 = arith.constant 3.200000e+01 : f32
    %19 = vector.broadcast %cst_15 : f32 to vector<16x1xf32>
    %20 = arith.divf %18, %19 : vector<16x1xf32>
    %21 = vector.broadcast %13 : vector<16x1xf32> to vector<16x32xf32>
    %22 = arith.subf %1, %21 : vector<16x32xf32>
    %cst_16 = arith.constant 9.99999974E-6 : f32
    %23 = vector.broadcast %cst_16 : f32 to vector<16x1xf32>
    %24 = arith.addf %20, %23 : vector<16x1xf32>
    %25 = math.rsqrt %24 : vector<16x1xf32>
    %26 = vector.broadcast %25 : vector<16x1xf32> to vector<16x32xf32>
    %27 = arith.mulf %22, %26 : vector<16x32xf32>
    %28 = vector.broadcast %6 : vector<1x32xf32> to vector<16x32xf32>
    %29 = arith.mulf %27, %28 : vector<16x32xf32>
    %30 = vector.broadcast %7 : vector<1x32xf32> to vector<16x32xf32>
    %31 = arith.addf %29, %30 : vector<16x32xf32>
    %c184 = arith.constant 184 : index
    %c0_17 = arith.constant 0 : index
    %32 = vector.load %arg1[%c184, %c0_17] : memref<520x128xf32, #tpu.memory_space<vmem>>, vector<32x96xf32>
    %c216 = arith.constant 216 : index
    %c0_18 = arith.constant 0 : index
    %33 = vector.load %arg1[%c216, %c0_18] : memref<520x128xf32, #tpu.memory_space<vmem>>, vector<32x32xf32>
    %c248 = arith.constant 248 : index
    %c0_19 = arith.constant 0 : index
    %34 = vector.load %arg1[%c248, %c0_19] : memref<520x128xf32, #tpu.memory_space<vmem>>, vector<32x64xf32>
    %c280 = arith.constant 280 : index
    %c0_20 = arith.constant 0 : index
    %35 = vector.load %arg1[%c280, %c0_20] : memref<520x128xf32, #tpu.memory_space<vmem>>, vector<64x32xf32>
    %c344 = arith.constant 344 : index
    %c0_21 = arith.constant 0 : index
    %36 = vector.load %arg1[%c344, %c0_21] : memref<520x128xf32, #tpu.memory_space<vmem>>, vector<1x96xf32>
    %c345 = arith.constant 345 : index
    %c0_22 = arith.constant 0 : index
    %37 = vector.load %arg1[%c345, %c0_22] : memref<520x128xf32, #tpu.memory_space<vmem>>, vector<1x32xf32>
    %c346 = arith.constant 346 : index
    %c0_23 = arith.constant 0 : index
    %38 = vector.load %arg1[%c346, %c0_23] : memref<520x128xf32, #tpu.memory_space<vmem>>, vector<1x32xf32>
    %c347 = arith.constant 347 : index
    %c0_24 = arith.constant 0 : index
    %39 = vector.load %arg1[%c347, %c0_24] : memref<520x128xf32, #tpu.memory_space<vmem>>, vector<1x32xf32>
    %c348 = arith.constant 348 : index
    %c0_25 = arith.constant 0 : index
    %40 = vector.load %arg1[%c348, %c0_25] : memref<520x128xf32, #tpu.memory_space<vmem>>, vector<1x64xf32>
    %c349 = arith.constant 349 : index
    %c0_26 = arith.constant 0 : index
    %41 = vector.load %arg1[%c349, %c0_26] : memref<520x128xf32, #tpu.memory_space<vmem>>, vector<1x32xf32>
    %c350 = arith.constant 350 : index
    %c0_27 = arith.constant 0 : index
    %42 = vector.load %arg1[%c350, %c0_27] : memref<520x128xf32, #tpu.memory_space<vmem>>, vector<1x32xf32>
    %c351 = arith.constant 351 : index
    %c0_28 = arith.constant 0 : index
    %43 = vector.load %arg1[%c351, %c0_28] : memref<520x128xf32, #tpu.memory_space<vmem>>, vector<1x32xf32>
    %cst_29 = arith.constant dense<0.000000e+00> : vector<16x96xf32>
    %44 = tpu.matmul %31, %32, %cst_29 {dimension_numbers = #tpu.dot_dimension_numbers<[1], [0], [0], [1], [0, 0, 1, 1], [], []>} : vector<16x32xf32>, vector<32x96xf32>, vector<16x96xf32> -> vector<16x96xf32>
    %45 = vector.broadcast %36 : vector<1x96xf32> to vector<16x96xf32>
    %46 = arith.addf %44, %45 : vector<16x96xf32>
    %cst_30 = arith.constant dense<0.000000e+00> : vector<64x96xf32>
    %47 = tpu.matmul %3, %46, %cst_30 {dimension_numbers = #tpu.dot_dimension_numbers<[1], [0], [0], [1], [0, 0, 1, 1], [], []>} : vector<64x16xf32>, vector<16x96xf32>, vector<64x96xf32> -> vector<64x96xf32>
    %48 = vector.extract_strided_slice %47 {offsets = [0, 0], sizes = [64, 32], strides = [1, 1]} : vector<64x96xf32> to vector<64x32xf32>
    %49 = arith.mulf %48, %5 : vector<64x32xf32>
    %50 = vector.extract_strided_slice %47 {offsets = [0, 32], sizes = [64, 32], strides = [1, 1]} : vector<64x96xf32> to vector<64x32xf32>
    %51 = arith.mulf %50, %5 : vector<64x32xf32>
    %52 = vector.extract_strided_slice %47 {offsets = [0, 64], sizes = [64, 32], strides = [1, 1]} : vector<64x96xf32> to vector<64x32xf32>
    %53 = arith.mulf %52, %5 : vector<64x32xf32>
    %cst_31 = arith.constant dense<0.000000e+00> : vector<64x64xf32>
    %54 = tpu.matmul %49, %51, %cst_31 {dimension_numbers = #tpu.dot_dimension_numbers<[1], [1], [0], [0], [0, 0, 1, 0], [], []>} : vector<64x32xf32>, vector<64x32xf32>, vector<64x64xf32> -> vector<64x64xf32>
    %cst_32 = arith.constant 0.353553385 : f32
    %55 = vector.broadcast %cst_32 : f32 to vector<64x64xf32>
    %56 = arith.mulf %54, %55 : vector<64x64xf32>
    %57 = arith.addf %56, %0 : vector<64x64xf32>
    %cst_33 = arith.constant dense<0xFF800000> : vector<64xf32>
    %58 = vector.multi_reduction <maximumf>, %57, %cst_33 [1] : vector<64x64xf32> to vector<64xf32>
    %59 = vector.shape_cast %58 : vector<64xf32> to vector<64x1xf32>
    %60 = vector.broadcast %59 : vector<64x1xf32> to vector<64x64xf32>
    %61 = arith.subf %57, %60 : vector<64x64xf32>
    %62 = math.exp %61 : vector<64x64xf32>
    %cst_34 = arith.constant dense<0.000000e+00> : vector<64xf32>
    %63 = vector.multi_reduction <add>, %62, %cst_34 [1] : vector<64x64xf32> to vector<64xf32>
    %64 = vector.shape_cast %63 : vector<64xf32> to vector<64x1xf32>
    %65 = tpu.reciprocal %64 {approx = true} : vector<64x1xf32> -> vector<64x1xf32>
    %66 = vector.broadcast %65 : vector<64x1xf32> to vector<64x64xf32>
    %67 = arith.mulf %62, %66 : vector<64x64xf32>
    %c0_35 = arith.constant 0 : index
    %c0_36 = arith.constant 0 : index
    %68 = vector.load %arg3[%c0_35, %c0_36] : memref<64x128xf32, #tpu.memory_space<vmem>>, vector<64x64xf32>
    tpu.vector_store %arg3[%c0_35, %c0_36], %67 {strides = array<i32>} : memref<64x128xf32, #tpu.memory_space<vmem>>, vector<64x64xf32>,
    %cst_37 = arith.constant dense<0.000000e+00> : vector<64x32xf32>
    %69 = tpu.matmul %67, %53, %cst_37 {dimension_numbers = #tpu.dot_dimension_numbers<[1], [0], [0], [1], [0, 0, 1, 1], [], []>} : vector<64x64xf32>, vector<64x32xf32>, vector<64x32xf32> -> vector<64x32xf32>
    %cst_38 = arith.constant dense<0.000000e+00> : vector<16x32xf32>
    %70 = tpu.matmul %4, %69, %cst_38 {dimension_numbers = #tpu.dot_dimension_numbers<[1], [0], [0], [1], [0, 0, 1, 1], [], []>} : vector<16x64xf32>, vector<64x32xf32>, vector<16x32xf32> -> vector<16x32xf32>
    %cst_39 = arith.constant dense<0.000000e+00> : vector<16x32xf32>
    %71 = tpu.matmul %70, %33, %cst_39 {dimension_numbers = #tpu.dot_dimension_numbers<[1], [0], [0], [1], [0, 0, 1, 1], [], []>} : vector<16x32xf32>, vector<32x32xf32>, vector<16x32xf32> -> vector<16x32xf32>
    %72 = vector.broadcast %37 : vector<1x32xf32> to vector<16x32xf32>
    %73 = arith.addf %71, %72 : vector<16x32xf32>
    %74 = arith.addf %31, %73 : vector<16x32xf32>
    %cst_40 = arith.constant dense<0.000000e+00> : vector<16xf32>
    %75 = vector.multi_reduction <add>, %74, %cst_40 [1] : vector<16x32xf32> to vector<16xf32>
    %76 = vector.shape_cast %75 : vector<16xf32> to vector<16x1xf32>
    %cst_41 = arith.constant 3.200000e+01 : f32
    %77 = vector.broadcast %cst_41 : f32 to vector<16x1xf32>
    %78 = arith.divf %76, %77 : vector<16x1xf32>
    %79 = vector.broadcast %78 : vector<16x1xf32> to vector<16x32xf32>
    %80 = arith.subf %74, %79 : vector<16x32xf32>
    %81 = arith.mulf %80, %80 : vector<16x32xf32>
    %cst_42 = arith.constant dense<0.000000e+00> : vector<16xf32>
    %82 = vector.multi_reduction <add>, %81, %cst_42 [1] : vector<16x32xf32> to vector<16xf32>
    %83 = vector.shape_cast %82 : vector<16xf32> to vector<16x1xf32>
    %cst_43 = arith.constant 3.200000e+01 : f32
    %84 = vector.broadcast %cst_43 : f32 to vector<16x1xf32>
    %85 = arith.divf %83, %84 : vector<16x1xf32>
    %86 = vector.broadcast %78 : vector<16x1xf32> to vector<16x32xf32>
    %87 = arith.subf %74, %86 : vector<16x32xf32>
    %cst_44 = arith.constant 9.99999974E-6 : f32
    %88 = vector.broadcast %cst_44 : f32 to vector<16x1xf32>
    %89 = arith.addf %85, %88 : vector<16x1xf32>
    %90 = math.rsqrt %89 : vector<16x1xf32>
    %91 = vector.broadcast %90 : vector<16x1xf32> to vector<16x32xf32>
    %92 = arith.mulf %87, %91 : vector<16x32xf32>
    %93 = vector.broadcast %38 : vector<1x32xf32> to vector<16x32xf32>
    %94 = arith.mulf %92, %93 : vector<16x32xf32>
    %95 = vector.broadcast %39 : vector<1x32xf32> to vector<16x32xf32>
    %96 = arith.addf %94, %95 : vector<16x32xf32>
    %cst_45 = arith.constant dense<0.000000e+00> : vector<16x64xf32>
    %97 = tpu.matmul %96, %34, %cst_45 {dimension_numbers = #tpu.dot_dimension_numbers<[1], [0], [0], [1], [0, 0, 1, 1], [], []>} : vector<16x32xf32>, vector<32x64xf32>, vector<16x64xf32> -> vector<16x64xf32>
    %98 = vector.broadcast %40 : vector<1x64xf32> to vector<16x64xf32>
    %99 = arith.addf %97, %98 : vector<16x64xf32>
    %cst_46 = arith.constant 0.000000e+00 : f32
    %100 = vector.broadcast %cst_46 : f32 to vector<16x64xf32>
    %101 = arith.maximumf %99, %100 : vector<16x64xf32>
    %cst_47 = arith.constant dense<0.000000e+00> : vector<16x32xf32>
    %102 = tpu.matmul %101, %35, %cst_47 {dimension_numbers = #tpu.dot_dimension_numbers<[1], [0], [0], [1], [0, 0, 1, 1], [], []>} : vector<16x64xf32>, vector<64x32xf32>, vector<16x32xf32> -> vector<16x32xf32>
    %103 = vector.broadcast %41 : vector<1x32xf32> to vector<16x32xf32>
    %104 = arith.addf %102, %103 : vector<16x32xf32>
    %105 = arith.addf %96, %104 : vector<16x32xf32>
    %cst_48 = arith.constant dense<0.000000e+00> : vector<16xf32>
    %106 = vector.multi_reduction <add>, %105, %cst_48 [1] : vector<16x32xf32> to vector<16xf32>
    %107 = vector.shape_cast %106 : vector<16xf32> to vector<16x1xf32>
    %cst_49 = arith.constant 3.200000e+01 : f32
    %108 = vector.broadcast %cst_49 : f32 to vector<16x1xf32>
    %109 = arith.divf %107, %108 : vector<16x1xf32>
    %110 = vector.broadcast %109 : vector<16x1xf32> to vector<16x32xf32>
    %111 = arith.subf %105, %110 : vector<16x32xf32>
    %112 = arith.mulf %111, %111 : vector<16x32xf32>
    %cst_50 = arith.constant dense<0.000000e+00> : vector<16xf32>
    %113 = vector.multi_reduction <add>, %112, %cst_50 [1] : vector<16x32xf32> to vector<16xf32>
    %114 = vector.shape_cast %113 : vector<16xf32> to vector<16x1xf32>
    %cst_51 = arith.constant 3.200000e+01 : f32
    %115 = vector.broadcast %cst_51 : f32 to vector<16x1xf32>
    %116 = arith.divf %114, %115 : vector<16x1xf32>
    %117 = vector.broadcast %109 : vector<16x1xf32> to vector<16x32xf32>
    %118 = arith.subf %105, %117 : vector<16x32xf32>
    %cst_52 = arith.constant 9.99999974E-6 : f32
    %119 = vector.broadcast %cst_52 : f32 to vector<16x1xf32>
    %120 = arith.addf %116, %119 : vector<16x1xf32>
    %121 = math.rsqrt %120 : vector<16x1xf32>
    %122 = vector.broadcast %121 : vector<16x1xf32> to vector<16x32xf32>
    %123 = arith.mulf %118, %122 : vector<16x32xf32>
    %124 = vector.broadcast %42 : vector<1x32xf32> to vector<16x32xf32>
    %125 = arith.mulf %123, %124 : vector<16x32xf32>
    %126 = vector.broadcast %43 : vector<1x32xf32> to vector<16x32xf32>
    %127 = arith.addf %125, %126 : vector<16x32xf32>
    %c352 = arith.constant 352 : index
    %c0_53 = arith.constant 0 : index
    %128 = vector.load %arg1[%c352, %c0_53] : memref<520x128xf32, #tpu.memory_space<vmem>>, vector<32x96xf32>
    %c384 = arith.constant 384 : index
    %c0_54 = arith.constant 0 : index
    %129 = vector.load %arg1[%c384, %c0_54] : memref<520x128xf32, #tpu.memory_space<vmem>>, vector<32x32xf32>
    %c416 = arith.constant 416 : index
    %c0_55 = arith.constant 0 : index
    %130 = vector.load %arg1[%c416, %c0_55] : memref<520x128xf32, #tpu.memory_space<vmem>>, vector<32x64xf32>
    %c448 = arith.constant 448 : index
    %c0_56 = arith.constant 0 : index
    %131 = vector.load %arg1[%c448, %c0_56] : memref<520x128xf32, #tpu.memory_space<vmem>>, vector<64x32xf32>
    %c512 = arith.constant 512 : index
    %c0_57 = arith.constant 0 : index
    %132 = vector.load %arg1[%c512, %c0_57] : memref<520x128xf32, #tpu.memory_space<vmem>>, vector<1x96xf32>
    %c513 = arith.constant 513 : index
    %c0_58 = arith.constant 0 : index
    %133 = vector.load %arg1[%c513, %c0_58] : memref<520x128xf32, #tpu.memory_space<vmem>>, vector<1x32xf32>
    %c514 = arith.constant 514 : index
    %c0_59 = arith.constant 0 : index
    %134 = vector.load %arg1[%c514, %c0_59] : memref<520x128xf32, #tpu.memory_space<vmem>>, vector<1x32xf32>
    %c515 = arith.constant 515 : index
    %c0_60 = arith.constant 0 : index
    %135 = vector.load %arg1[%c515, %c0_60] : memref<520x128xf32, #tpu.memory_space<vmem>>, vector<1x32xf32>
    %c516 = arith.constant 516 : index
    %c0_61 = arith.constant 0 : index
    %136 = vector.load %arg1[%c516, %c0_61] : memref<520x128xf32, #tpu.memory_space<vmem>>, vector<1x64xf32>
    %c517 = arith.constant 517 : index
    %c0_62 = arith.constant 0 : index
    %137 = vector.load %arg1[%c517, %c0_62] : memref<520x128xf32, #tpu.memory_space<vmem>>, vector<1x32xf32>
    %c518 = arith.constant 518 : index
    %c0_63 = arith.constant 0 : index
    %138 = vector.load %arg1[%c518, %c0_63] : memref<520x128xf32, #tpu.memory_space<vmem>>, vector<1x32xf32>
    %c519 = arith.constant 519 : index
    %c0_64 = arith.constant 0 : index
    %139 = vector.load %arg1[%c519, %c0_64] : memref<520x128xf32, #tpu.memory_space<vmem>>, vector<1x32xf32>
    %cst_65 = arith.constant dense<0.000000e+00> : vector<16x96xf32>
    %140 = tpu.matmul %127, %128, %cst_65 {dimension_numbers = #tpu.dot_dimension_numbers<[1], [0], [0], [1], [0, 0, 1, 1], [], []>} : vector<16x32xf32>, vector<32x96xf32>, vector<16x96xf32> -> vector<16x96xf32>
    %141 = vector.broadcast %132 : vector<1x96xf32> to vector<16x96xf32>
    %142 = arith.addf %140, %141 : vector<16x96xf32>
    %cst_66 = arith.constant dense<0.000000e+00> : vector<64x96xf32>
    %143 = tpu.matmul %3, %142, %cst_66 {dimension_numbers = #tpu.dot_dimension_numbers<[1], [0], [0], [1], [0, 0, 1, 1], [], []>} : vector<64x16xf32>, vector<16x96xf32>, vector<64x96xf32> -> vector<64x96xf32>
    %144 = vector.extract_strided_slice %143 {offsets = [0, 0], sizes = [64, 32], strides = [1, 1]} : vector<64x96xf32> to vector<64x32xf32>
    %145 = arith.mulf %144, %5 : vector<64x32xf32>
    %146 = vector.extract_strided_slice %143 {offsets = [0, 32], sizes = [64, 32], strides = [1, 1]} : vector<64x96xf32> to vector<64x32xf32>
    %147 = arith.mulf %146, %5 : vector<64x32xf32>
    %148 = vector.extract_strided_slice %143 {offsets = [0, 64], sizes = [64, 32], strides = [1, 1]} : vector<64x96xf32> to vector<64x32xf32>
    %149 = arith.mulf %148, %5 : vector<64x32xf32>
    %cst_67 = arith.constant dense<0.000000e+00> : vector<64x64xf32>
    %150 = tpu.matmul %145, %147, %cst_67 {dimension_numbers = #tpu.dot_dimension_numbers<[1], [1], [0], [0], [0, 0, 1, 0], [], []>} : vector<64x32xf32>, vector<64x32xf32>, vector<64x64xf32> -> vector<64x64xf32>
    %cst_68 = arith.constant 0.353553385 : f32
    %151 = vector.broadcast %cst_68 : f32 to vector<64x64xf32>
    %152 = arith.mulf %150, %151 : vector<64x64xf32>
    %153 = arith.addf %152, %0 : vector<64x64xf32>
    %cst_69 = arith.constant dense<0xFF800000> : vector<64xf32>
    %154 = vector.multi_reduction <maximumf>, %153, %cst_69 [1] : vector<64x64xf32> to vector<64xf32>
    %155 = vector.shape_cast %154 : vector<64xf32> to vector<64x1xf32>
    %156 = vector.broadcast %155 : vector<64x1xf32> to vector<64x64xf32>
    %157 = arith.subf %153, %156 : vector<64x64xf32>
    %158 = math.exp %157 : vector<64x64xf32>
    %cst_70 = arith.constant dense<0.000000e+00> : vector<64xf32>
    %159 = vector.multi_reduction <add>, %158, %cst_70 [1] : vector<64x64xf32> to vector<64xf32>
    %160 = vector.shape_cast %159 : vector<64xf32> to vector<64x1xf32>
    %161 = tpu.reciprocal %160 {approx = true} : vector<64x1xf32> -> vector<64x1xf32>
    %162 = vector.broadcast %161 : vector<64x1xf32> to vector<64x64xf32>
    %163 = arith.mulf %158, %162 : vector<64x64xf32>
    %c0_71 = arith.constant 0 : index
    %c64_72 = arith.constant 64 : index
    %164 = vector.load %arg3[%c0_71, %c64_72] : memref<64x128xf32, #tpu.memory_space<vmem>>, vector<64x64xf32>
    tpu.vector_store %arg3[%c0_71, %c64_72], %163 {strides = array<i32>} : memref<64x128xf32, #tpu.memory_space<vmem>>, vector<64x64xf32>,
    %cst_73 = arith.constant dense<0.000000e+00> : vector<64x32xf32>
    %165 = tpu.matmul %163, %149, %cst_73 {dimension_numbers = #tpu.dot_dimension_numbers<[1], [0], [0], [1], [0, 0, 1, 1], [], []>} : vector<64x64xf32>, vector<64x32xf32>, vector<64x32xf32> -> vector<64x32xf32>
    %cst_74 = arith.constant dense<0.000000e+00> : vector<16x32xf32>
    %166 = tpu.matmul %4, %165, %cst_74 {dimension_numbers = #tpu.dot_dimension_numbers<[1], [0], [0], [1], [0, 0, 1, 1], [], []>} : vector<16x64xf32>, vector<64x32xf32>, vector<16x32xf32> -> vector<16x32xf32>
    %cst_75 = arith.constant dense<0.000000e+00> : vector<16x32xf32>
    %167 = tpu.matmul %166, %129, %cst_75 {dimension_numbers = #tpu.dot_dimension_numbers<[1], [0], [0], [1], [0, 0, 1, 1], [], []>} : vector<16x32xf32>, vector<32x32xf32>, vector<16x32xf32> -> vector<16x32xf32>
    %168 = vector.broadcast %133 : vector<1x32xf32> to vector<16x32xf32>
    %169 = arith.addf %167, %168 : vector<16x32xf32>
    %170 = arith.addf %127, %169 : vector<16x32xf32>
    %cst_76 = arith.constant dense<0.000000e+00> : vector<16xf32>
    %171 = vector.multi_reduction <add>, %170, %cst_76 [1] : vector<16x32xf32> to vector<16xf32>
    %172 = vector.shape_cast %171 : vector<16xf32> to vector<16x1xf32>
    %cst_77 = arith.constant 3.200000e+01 : f32
    %173 = vector.broadcast %cst_77 : f32 to vector<16x1xf32>
    %174 = arith.divf %172, %173 : vector<16x1xf32>
    %175 = vector.broadcast %174 : vector<16x1xf32> to vector<16x32xf32>
    %176 = arith.subf %170, %175 : vector<16x32xf32>
    %177 = arith.mulf %176, %176 : vector<16x32xf32>
    %cst_78 = arith.constant dense<0.000000e+00> : vector<16xf32>
    %178 = vector.multi_reduction <add>, %177, %cst_78 [1] : vector<16x32xf32> to vector<16xf32>
    %179 = vector.shape_cast %178 : vector<16xf32> to vector<16x1xf32>
    %cst_79 = arith.constant 3.200000e+01 : f32
    %180 = vector.broadcast %cst_79 : f32 to vector<16x1xf32>
    %181 = arith.divf %179, %180 : vector<16x1xf32>
    %182 = vector.broadcast %174 : vector<16x1xf32> to vector<16x32xf32>
    %183 = arith.subf %170, %182 : vector<16x32xf32>
    %cst_80 = arith.constant 9.99999974E-6 : f32
    %184 = vector.broadcast %cst_80 : f32 to vector<16x1xf32>
    %185 = arith.addf %181, %184 : vector<16x1xf32>
    %186 = math.rsqrt %185 : vector<16x1xf32>
    %187 = vector.broadcast %186 : vector<16x1xf32> to vector<16x32xf32>
    %188 = arith.mulf %183, %187 : vector<16x32xf32>
    %189 = vector.broadcast %134 : vector<1x32xf32> to vector<16x32xf32>
    %190 = arith.mulf %188, %189 : vector<16x32xf32>
    %191 = vector.broadcast %135 : vector<1x32xf32> to vector<16x32xf32>
    %192 = arith.addf %190, %191 : vector<16x32xf32>
    %cst_81 = arith.constant dense<0.000000e+00> : vector<16x64xf32>
    %193 = tpu.matmul %192, %130, %cst_81 {dimension_numbers = #tpu.dot_dimension_numbers<[1], [0], [0], [1], [0, 0, 1, 1], [], []>} : vector<16x32xf32>, vector<32x64xf32>, vector<16x64xf32> -> vector<16x64xf32>
    %194 = vector.broadcast %136 : vector<1x64xf32> to vector<16x64xf32>
    %195 = arith.addf %193, %194 : vector<16x64xf32>
    %cst_82 = arith.constant 0.000000e+00 : f32
    %196 = vector.broadcast %cst_82 : f32 to vector<16x64xf32>
    %197 = arith.maximumf %195, %196 : vector<16x64xf32>
    %cst_83 = arith.constant dense<0.000000e+00> : vector<16x32xf32>
    %198 = tpu.matmul %197, %131, %cst_83 {dimension_numbers = #tpu.dot_dimension_numbers<[1], [0], [0], [1], [0, 0, 1, 1], [], []>} : vector<16x64xf32>, vector<64x32xf32>, vector<16x32xf32> -> vector<16x32xf32>
    %199 = vector.broadcast %137 : vector<1x32xf32> to vector<16x32xf32>
    %200 = arith.addf %198, %199 : vector<16x32xf32>
    %201 = arith.addf %192, %200 : vector<16x32xf32>
    %cst_84 = arith.constant dense<0.000000e+00> : vector<16xf32>
    %202 = vector.multi_reduction <add>, %201, %cst_84 [1] : vector<16x32xf32> to vector<16xf32>
    %203 = vector.shape_cast %202 : vector<16xf32> to vector<16x1xf32>
    %cst_85 = arith.constant 3.200000e+01 : f32
    %204 = vector.broadcast %cst_85 : f32 to vector<16x1xf32>
    %205 = arith.divf %203, %204 : vector<16x1xf32>
    %206 = vector.broadcast %205 : vector<16x1xf32> to vector<16x32xf32>
    %207 = arith.subf %201, %206 : vector<16x32xf32>
    %208 = arith.mulf %207, %207 : vector<16x32xf32>
    %cst_86 = arith.constant dense<0.000000e+00> : vector<16xf32>
    %209 = vector.multi_reduction <add>, %208, %cst_86 [1] : vector<16x32xf32> to vector<16xf32>
    %210 = vector.shape_cast %209 : vector<16xf32> to vector<16x1xf32>
    %cst_87 = arith.constant 3.200000e+01 : f32
    %211 = vector.broadcast %cst_87 : f32 to vector<16x1xf32>
    %212 = arith.divf %210, %211 : vector<16x1xf32>
    %213 = vector.broadcast %205 : vector<16x1xf32> to vector<16x32xf32>
    %214 = arith.subf %201, %213 : vector<16x32xf32>
    %cst_88 = arith.constant 9.99999974E-6 : f32
    %215 = vector.broadcast %cst_88 : f32 to vector<16x1xf32>
    %216 = arith.addf %212, %215 : vector<16x1xf32>
    %217 = math.rsqrt %216 : vector<16x1xf32>
    %218 = vector.broadcast %217 : vector<16x1xf32> to vector<16x32xf32>
    %219 = arith.mulf %214, %218 : vector<16x32xf32>
    %220 = vector.broadcast %138 : vector<1x32xf32> to vector<16x32xf32>
    %221 = arith.mulf %219, %220 : vector<16x32xf32>
    %222 = vector.broadcast %139 : vector<1x32xf32> to vector<16x32xf32>
    %223 = arith.addf %221, %222 : vector<16x32xf32>
    %cst_89 = arith.constant dense<0.000000e+00> : vector<2x32xf32>
    %224 = tpu.matmul %2, %223, %cst_89 {dimension_numbers = #tpu.dot_dimension_numbers<[1], [0], [0], [1], [0, 0, 1, 1], [], []>} : vector<2x16xf32>, vector<16x32xf32>, vector<2x32xf32> -> vector<2x32xf32>
    %cst_90 = arith.constant dense<0.000000e+00> : vector<2x2xf32>
    %225 = tpu.matmul %224, %9, %cst_90 {dimension_numbers = #tpu.dot_dimension_numbers<[1], [0], [0], [1], [0, 0, 1, 1], [], []>} : vector<2x32xf32>, vector<32x2xf32>, vector<2x2xf32> -> vector<2x2xf32>
    %226 = vector.broadcast %8 : vector<1x2xf32> to vector<2x2xf32>
    %227 = arith.addf %225, %226 : vector<2x2xf32>
    %c0_91 = arith.constant 0 : index
    %c0_92 = arith.constant 0 : index
    %228 = vector.load %arg2[%c0_91, %c0_92] : memref<2x2xf32, #tpu.memory_space<vmem>>, vector<2x2xf32>
    tpu.vector_store %arg2[%c0_91, %c0_92], %227 {strides = array<i32>} : memref<2x2xf32, #tpu.memory_space<vmem>>, vector<2x2xf32>,
    return
  }
}

</mosaic_0001>

<llo_original>
// kernel: tile.8
$region0: #{tile.8}
  #allocation0 [shape = 's32[1]{0}', space=sflag, size = 0x4, scoped, tag = 'scoped memory for tile.8']
  %s0 = inlined_call_operand.vmem [shape: f32[8,8], index: 0, kind: input, shape index: {}]
  %s1 = inlined_call_operand.vmem [shape: f32[8,8,8,8], index: 1, kind: output, shape index: {}]
  // Predicated region
  $region2: #{tile.8} parent=0 // pred_check
    _
  $region3: #{tile.8} parent=0 // pred_check_branch
    %3 = sbr.rel (0) target = $region5
  $region4: #{tile.8} parent=0 // pred_region
    _
  $region5: #{tile.8} parent=0 // pred_fallthru
    _
  %v4 = vld [vmem:[%s0] ss:$0 sm:$0xff]
  %5 = vst [vmem:[%s1] sm:$0xff] %v4
  %s6 = scalar_lea.vmem %s1, 64
  %7 = vst [vmem:[%s6] sm:$0xff] %v4
  %s8 = scalar_lea.vmem %s1, 128
  %9 = vst [vmem:[%s8] sm:$0xff] %v4
  %s10 = scalar_lea.vmem %s1, 192
  %11 = vst [vmem:[%s10] sm:$0xff] %v4
  %s12 = scalar_lea.vmem %s1, 256
  %13 = vst [vmem:[%s12] sm:$0xff] %v4
  %s14 = scalar_lea.vmem %s1, 320
  %15 = vst [vmem:[%s14] sm:$0xff] %v4
  %s16 = scalar_lea.vmem %s1, 384
  %17 = vst [vmem:[%s16] sm:$0xff] %v4
  %s18 = scalar_lea.vmem %s1, 448
  %19 = vst [vmem:[%s18] sm:$0xff] %v4
  %s20 = scalar_lea.vmem %s0, 1
  %v21 = vld [vmem:[%s20] ss:$0 sm:$0xff]
  %s22 = scalar_lea.vmem %s1, 8
  %23 = vst [vmem:[%s22] sm:$0xff] %v21
  %s24 = scalar_lea.vmem %s1, 72
  %25 = vst [vmem:[%s24] sm:$0xff] %v21
  %s26 = scalar_lea.vmem %s1, 136
  %27 = vst [vmem:[%s26] sm:$0xff] %v21
  %s28 = scalar_lea.vmem %s1, 200
  %29 = vst [vmem:[%s28] sm:$0xff] %v21
  %s30 = scalar_lea.vmem %s1, 264
  %31 = vst [vmem:[%s30] sm:$0xff] %v21
  %s32 = scalar_lea.vmem %s1, 328
  %33 = vst [vmem:[%s32] sm:$0xff] %v21
  %s34 = scalar_lea.vmem %s1, 392
  %35 = vst [vmem:[%s34] sm:$0xff] %v21
  %s36 = scalar_lea.vmem %s1, 456
  %37 = vst [vmem:[%s36] sm:$0xff] %v21
  %s38 = scalar_lea.vmem %s0, 2
  %v39 = vld [vmem:[%s38] ss:$0 sm:$0xff]
  %s40 = scalar_lea.vmem %s1, 16
  %41 = vst [vmem:[%s40] sm:$0xff] %v39
  %s42 = scalar_lea.vmem %s1, 80
  %43 = vst [vmem:[%s42] sm:$0xff] %v39
  %s44 = scalar_lea.vmem %s1, 144
  %45 = vst [vmem:[%s44] sm:$0xff] %v39
  %s46 = scalar_lea.vmem %s1, 208
  %47 = vst [vmem:[%s46] sm:$0xff] %v39
  %s48 = scalar_lea.vmem %s1, 272
  %49 = vst [vmem:[%s48] sm:$0xff] %v39
  %s50 = scalar_lea.vmem %s1, 336
  %51 = vst [vmem:[%s50] sm:$0xff] %v39
  %s52 = scalar_lea.vmem %s1, 400
  %53 = vst [vmem:[%s52] sm:$0xff] %v39
  %s54 = scalar_lea.vmem %s1, 464
  %55 = vst [vmem:[%s54] sm:$0xff] %v39
  %s56 = scalar_lea.vmem %s0, 3
  %v57 = vld [vmem:[%s56] ss:$0 sm:$0xff]
  %s58 = scalar_lea.vmem %s1, 24
  %59 = vst [vmem:[%s58] sm:$0xff] %v57
  %s60 = scalar_lea.vmem %s1, 88
  %61 = vst [vmem:[%s60] sm:$0xff] %v57
  %s62 = scalar_lea.vmem %s1, 152
  %63 = vst [vmem:[%s62] sm:$0xff] %v57
  %s64 = scalar_lea.vmem %s1, 216
  %65 = vst [vmem:[%s64] sm:$0xff] %v57
  %s66 = scalar_lea.vmem %s1, 280
  %67 = vst [vmem:[%s66] sm:$0xff] %v57
  %s68 = scalar_lea.vmem %s1, 344
  %69 = vst [vmem:[%s68] sm:$0xff] %v57
  %s70 = scalar_lea.vmem %s1, 408
  %71 = vst [vmem:[%s70] sm:$0xff] %v57
  %s72 = scalar_lea.vmem %s1, 472
  %73 = vst [vmem:[%s72] sm:$0xff] %v57
  %s74 = scalar_lea.vmem %s0, 4
  %v75 = vld [vmem:[%s74] ss:$0 sm:$0xff]
  %s76 = scalar_lea.vmem %s1, 32
  %77 = vst [vmem:[%s76] sm:$0xff] %v75
  %s78 = scalar_lea.vmem %s1, 96
  %79 = vst [vmem:[%s78] sm:$0xff] %v75
  %s80 = scalar_lea.vmem %s1, 160
  %81 = vst [vmem:[%s80] sm:$0xff] %v75
  %s82 = scalar_lea.vmem %s1, 224
  %83 = vst [vmem:[%s82] sm:$0xff] %v75
  %s84 = scalar_lea.vmem %s1, 288
  %85 = vst [vmem:[%s84] sm:$0xff] %v75
  %s86 = scalar_lea.vmem %s1, 352
  %87 = vst [vmem:[%s86] sm:$0xff] %v75
  %s88 = scalar_lea.vmem %s1, 416
  %89 = vst [vmem:[%s88] sm:$0xff] %v75
  %s90 = scalar_lea.vmem %s1, 480
  %91 = vst [vmem:[%s90] sm:$0xff] %v75
  %s92 = scalar_lea.vmem %s0, 5
  %v93 = vld [vmem:[%s92] ss:$0 sm:$0xff]
  %s94 = scalar_lea.vmem %s1, 40
  %95 = vst [vmem:[%s94] sm:$0xff] %v93
  %s96 = scalar_lea.vmem %s1, 104
  %97 = vst [vmem:[%s96] sm:$0xff] %v93
  %s98 = scalar_lea.vmem %s1, 168
  %99 = vst [vmem:[%s98] sm:$0xff] %v93
  %s100 = scalar_lea.vmem %s1, 232
  %101 = vst [vmem:[%s100] sm:$0xff] %v93
  %s102 = scalar_lea.vmem %s1, 296
  %103 = vst [vmem:[%s102] sm:$0xff] %v93
  %s104 = scalar_lea.vmem %s1, 360
  %105 = vst [vmem:[%s104] sm:$0xff] %v93
  %s106 = scalar_lea.vmem %s1, 424
  %107 = vst [vmem:[%s106] sm:$0xff] %v93
  %s108 = scalar_lea.vmem %s1, 488
  %109 = vst [vmem:[%s108] sm:$0xff] %v93
  %s110 = scalar_lea.vmem %s0, 6
  %v111 = vld [vmem:[%s110] ss:$0 sm:$0xff]
  %s112 = scalar_lea.vmem %s1, 48
  %113 = vst [vmem:[%s112] sm:$0xff] %v111
  %s114 = scalar_lea.vmem %s1, 112
  %115 = vst [vmem:[%s114] sm:$0xff] %v111
  %s116 = scalar_lea.vmem %s1, 176
  %117 = vst [vmem:[%s116] sm:$0xff] %v111
  %s118 = scalar_lea.vmem %s1, 240
  %119 = vst [vmem:[%s118] sm:$0xff] %v111
  %s120 = scalar_lea.vmem %s1, 304
  %121 = vst [vmem:[%s120] sm:$0xff] %v111
  %s122 = scalar_lea.vmem %s1, 368
  %123 = vst [vmem:[%s122] sm:$0xff] %v111
  %s124 = scalar_lea.vmem %s1, 432
  %125 = vst [vmem:[%s124] sm:$0xff] %v111
  %s126 = scalar_lea.vmem %s1, 496
  %127 = vst [vmem:[%s126] sm:$0xff] %v111
  %s128 = scalar_lea.vmem %s0, 7
  %v129 = vld [vmem:[%s128] ss:$0 sm:$0xff]
  %s130 = scalar_lea.vmem %s1, 56
  %131 = vst [vmem:[%s130] sm:$0xff] %v129
  %s132 = scalar_lea.vmem %s1, 120
  %133 = vst [vmem:[%s132] sm:$0xff] %v129
  %s134 = scalar_lea.vmem %s1, 184
  %135 = vst [vmem:[%s134] sm:$0xff] %v129
  %s136 = scalar_lea.vmem %s1, 248
  %137 = vst [vmem:[%s136] sm:$0xff] %v129
  %s138 = scalar_lea.vmem %s1, 312
  %139 = vst [vmem:[%s138] sm:$0xff] %v129
  %s140 = scalar_lea.vmem %s1, 376
  %141 = vst [vmem:[%s140] sm:$0xff] %v129
  %s142 = scalar_lea.vmem %s1, 440
  %143 = vst [vmem:[%s142] sm:$0xff] %v129
  %s144 = scalar_lea.vmem %s1, 504
  %145 = vst [vmem:[%s144] sm:$0xff] %v129

// kernel: tile.9
$region0: #{tile.9}
  %s0 = inlined_call_operand.vmem [shape: f32[8,8,8,8], index: 0, kind: input, shape index: {}]
  %s1 = inlined_call_operand.vmem [shape: f32[64,64], index: 1, kind: output, shape index: {}]
  %v2 = vld [vmem:[%s0] ss:$8 sm:$0xf]
  %v3 = vld [vmem:[%s0] ss:$8 sm:$0xf0]
  %vm4 = vcmask 1047556
  %v5 = vsel %vm4, %v3, %v2
  %vm6 = vcmask 64512
  %7 = vst.msk [vmem:[%s1] sm:$0xff] %vm6, %v5
  %s8 = scalar_lea.vmem %s0, 64
  %v9 = vld [vmem:[%s8] ss:$8 sm:$0xf]
  %s10 = scalar_lea.vmem %s0, 64
  %v11 = vld [vmem:[%s10] ss:$8 sm:$0xf0]
  %vm12 = vcmask 1047556
  %v13 = vsel %vm12, %v11, %v9
  %vm14 = vcmask 64512
  %s15 = scalar_lea.vmem %s1, 8
  %16 = vst.msk [vmem:[%s15] sm:$0xff] %vm14, %v13
  %s17 = scalar_lea.vmem %s0, 128
  %v18 = vld [vmem:[%s17] ss:$8 sm:$0xf]
  %s19 = scalar_lea.vmem %s0, 128
  %v20 = vld [vmem:[%s19] ss:$8 sm:$0xf0]
  %vm21 = vcmask 1047556
  %v22 = vsel %vm21, %v20, %v18
  %vm23 = vcmask 64512
  %s24 = scalar_lea.vmem %s1, 16
  %25 = vst.msk [vmem:[%s24] sm:$0xff] %vm23, %v22
  %s26 = scalar_lea.vmem %s0, 192
  %v27 = vld [vmem:[%s26] ss:$8 sm:$0xf]
  %s28 = scalar_lea.vmem %s0, 192
  %v29 = vld [vmem:[%s28] ss:$8 sm:$0xf0]
  %vm30 = vcmask 1047556
  %v31 = vsel %vm30, %v29, %v27
  %vm32 = vcmask 64512
  %s33 = scalar_lea.vmem %s1, 24
  %34 = vst.msk [vmem:[%s33] sm:$0xff] %vm32, %v31
  %s35 = scalar_lea.vmem %s0, 256
  %v36 = vld [vmem:[%s35] ss:$8 sm:$0xf]
  %s37 = scalar_lea.vmem %s0, 256
  %v38 = vld [vmem:[%s37] ss:$8 sm:$0xf0]
  %vm39 = vcmask 1047556
  %v40 = vsel %vm39, %v38, %v36
  %vm41 = vcmask 64512
  %s42 = scalar_lea.vmem %s1, 32
  %43 = vst.msk [vmem:[%s42] sm:$0xff] %vm41, %v40
  %s44 = scalar_lea.vmem %s0, 320
  %v45 = vld [vmem:[%s44] ss:$8 sm:$0xf]
  %s46 = scalar_lea.vmem %s0, 320
  %v47 = vld [vmem:[%s46] ss:$8 sm:$0xf0]
  %vm48 = vcmask 1047556
  %v49 = vsel %vm48, %v47, %v45
  %vm50 = vcmask 64512
  %s51 = scalar_lea.vmem %s1, 40
  %52 = vst.msk [vmem:[%s51] sm:$0xff] %vm50, %v49
  %s53 = scalar_lea.vmem %s0, 384
  %v54 = vld [vmem:[%s53] ss:$8 sm:$0xf]
  %s55 = scalar_lea.vmem %s0, 384
  %v56 = vld [vmem:[%s55] ss:$8 sm:$0xf0]
  %vm57 = vcmask 1047556
  %v58 = vsel %vm57, %v56, %v54
  %vm59 = vcmask 64512
  %s60 = scalar_lea.vmem %s1, 48
  %61 = vst.msk [vmem:[%s60] sm:$0xff] %vm59, %v58
  %s62 = scalar_lea.vmem %s0, 448
  %v63 = vld [vmem:[%s62] ss:$8 sm:$0xf]
  %s64 = scalar_lea.vmem %s0, 448
  %v65 = vld [vmem:[%s64] ss:$8 sm:$0xf0]
  %vm66 = vcmask 1047556
  %v67 = vsel %vm66, %v65, %v63
  %vm68 = vcmask 64512
  %s69 = scalar_lea.vmem %s1, 56
  %70 = vst.msk [vmem:[%s69] sm:$0xff] %vm68, %v67
  %s71 = scalar_lea.vmem %s0, 7
  %v72 = vld [vmem:[%s71] ss:$8 sm:$0xf]
  %s73 = scalar_lea.vmem %s0, 7
  %v74 = vld [vmem:[%s73] ss:$8 sm:$0xf0]
  %vm75 = vcmask 1047556
  %v76 = vsel %vm75, %v74, %v72
  %77 = vrot.lane.b32.xlu0 %v76, 56
  %v78 = vpop.permute.xlu0 %77
  %vm79 = vcmask 523712
  %80 = vst.msk [vmem:[%s1] sm:$0xff] %vm79, %v78
  %s81 = scalar_lea.vmem %s0, 263
  %v82 = vld [vmem:[%s81] ss:$8 sm:$0xf]
  %s83 = scalar_lea.vmem %s0, 263
  %v84 = vld [vmem:[%s83] ss:$8 sm:$0xf0]
  %vm85 = vcmask 1047556
  %v86 = vsel %vm85, %v84, %v82
  %87 = vrot.lane.b32.xlu0 %v86, 56
  %v88 = vpop.permute.xlu0 %87
  %vm89 = vcmask 523712
  %s90 = scalar_lea.vmem %s1, 32
  %91 = vst.msk [vmem:[%s90] sm:$0xff] %vm89, %v88
  %s92 = scalar_lea.vmem %s0, 71
  %v93 = vld [vmem:[%s92] ss:$8 sm:$0xf]
  %s94 = scalar_lea.vmem %s0, 71
  %v95 = vld [vmem:[%s94] ss:$8 sm:$0xf0]
  %vm96 = vcmask 1047556
  %v97 = vsel %vm96, %v95, %v93
  %98 = vrot.lane.b32.xlu0 %v97, 56
  %v99 = vpop.permute.xlu0 %98
  %vm100 = vcmask 523712
  %s101 = scalar_lea.vmem %s1, 8
  %102 = vst.msk [vmem:[%s101] sm:$0xff] %vm100, %v99
  %s103 = scalar_lea.vmem %s0, 327
  %v104 = vld [vmem:[%s103] ss:$8 sm:$0xf]
  %s105 = scalar_lea.vmem %s0, 327
  %v106 = vld [vmem:[%s105] ss:$8 sm:$0xf0]
  %vm107 = vcmask 1047556
  %v108 = vsel %vm107, %v106, %v104
  %109 = vrot.lane.b32.xlu0 %v108, 56
  %v110 = vpop.permute.xlu0 %109
  %vm111 = vcmask 523712
  %s112 = scalar_lea.vmem %s1, 40
  %113 = vst.msk [vmem:[%s112] sm:$0xff] %vm111, %v110
  %s114 = scalar_lea.vmem %s0, 135
  %v115 = vld [vmem:[%s114] ss:$8 sm:$0xf]
  %s116 = scalar_lea.vmem %s0, 135
  %v117 = vld [vmem:[%s116] ss:$8 sm:$0xf0]
  %vm118 = vcmask 1047556
  %v119 = vsel %vm118, %v117, %v115
  %120 = vrot.lane.b32.xlu0 %v119, 56
  %v121 = vpop.permute.xlu0 %120
  %vm122 = vcmask 523712
  %s123 = scalar_lea.vmem %s1, 16
  %124 = vst.msk [vmem:[%s123] sm:$0xff] %vm122, %v121
  %s125 = scalar_lea.vmem %s0, 391
  %v126 = vld [vmem:[%s125] ss:$8 sm:$0xf]
  %s127 = scalar_lea.vmem %s0, 391
  %v128 = vld [vmem:[%s127] ss:$8 sm:$0xf0]
  %vm129 = vcmask 1047556
  %v130 = vsel %vm129, %v128, %v126
  %131 = vrot.lane.b32.xlu0 %v130, 56
  %v132 = vpop.permute.xlu0 %131
  %vm133 = vcmask 523712
  %s134 = scalar_lea.vmem %s1, 48
  %135 = vst.msk [vmem:[%s134] sm:$0xff] %vm133, %v132
  %s136 = scalar_lea.vmem %s0, 199
  %v137 = vld [vmem:[%s136] ss:$8 sm:$0xf]
  %s138 = scalar_lea.vmem %s0, 199
  %v139 = vld [vmem:[%s138] ss:$8 sm:$0xf0]
  %vm140 = vcmask 1047556
  %v141 = vsel %vm140, %v139, %v137
  %142 = vrot.lane.b32.xlu0 %v141, 56
  %v143 = vpop.permute.xlu0 %142
  %vm144 = vcmask 523712
  %s145 = scalar_lea.vmem %s1, 24
  %146 = vst.msk [vmem:[%s145] sm:$0xff] %vm144, %v143
  %s147 = scalar_lea.vmem %s0, 455
  %v148 = vld [vmem:[%s147] ss:$8 sm:$0xf]
  %s149 = scalar_lea.vmem %s0, 455
  %v150 = vld [vmem:[%s149] ss:$8 sm:$0xf0]
  %vm151 = vcmask 1047556
  %v152 = vsel %vm151, %v150, %v148
  %153 = vrot.lane.b32.xlu0 %v152, 56
  %v154 = vpop.permute.xlu0 %153
  %vm155 = vcmask 523712
  %s156 = scalar_lea.vmem %s1, 56
  %157 = vst.msk [vmem:[%s156] sm:$0xff] %vm155, %v154
  %s158 = scalar_lea.vmem %s0, 6
  %v159 = vld [vmem:[%s158] ss:$8 sm:$0xf]
  %s160 = scalar_lea.vmem %s0, 6
  %v161 = vld [vmem:[%s160] ss:$8 sm:$0xf0]
  %vm162 = vcmask 1047556
  %v163 = vsel %vm162, %v161, %v159
  %164 = vrot.lane.b32.xlu0 %v163, 48
  %v165 = vpop.permute.xlu0 %164
  %vm166 = vcmask 458112
  %167 = vst.msk [vmem:[%s1] sm:$0xff] %vm166, %v165
  %s168 = scalar_lea.vmem %s0, 262
  %v169 = vld [vmem:[%s168] ss:$8 sm:$0xf]
  %s170 = scalar_lea.vmem %s0, 262
  %v171 = vld [vmem:[%s170] ss:$8 sm:$0xf0]
  %vm172 = vcmask 1047556
  %v173 = vsel %vm172, %v171, %v169
  %174 = vrot.lane.b32.xlu0 %v173, 48
  %v175 = vpop.permute.xlu0 %174
  %vm176 = vcmask 458112
  %s177 = scalar_lea.vmem %s1, 32
  %178 = vst.msk [vmem:[%s177] sm:$0xff] %vm176, %v175
  %s179 = scalar_lea.vmem %s0, 70
  %v180 = vld [vmem:[%s179] ss:$8 sm:$0xf]
  %s181 = scalar_lea.vmem %s0, 70
  %v182 = vld [vmem:[%s181] ss:$8 sm:$0xf0]
  %vm183 = vcmask 1047556
  %v184 = vsel %vm183, %v182, %v180
  %185 = vrot.lane.b32.xlu0 %v184, 48
  %v186 = vpop.permute.xlu0 %185
  %vm187 = vcmask 458112
  %s188 = scalar_lea.vmem %s1, 8
  %189 = vst.msk [vmem:[%s188] sm:$0xff] %vm187, %v186
  %s190 = scalar_lea.vmem %s0, 326
  %v191 = vld [vmem:[%s190] ss:$8 sm:$0xf]
  %s192 = scalar_lea.vmem %s0, 326
  %v193 = vld [vmem:[%s192] ss:$8 sm:$0xf0]
  %vm194 = vcmask 1047556
  %v195 = vsel %vm194, %v193, %v191
  %196 = vrot.lane.b32.xlu0 %v195, 48
  %v197 = vpop.permute.xlu0 %196
  %vm198 = vcmask 458112
  %s199 = scalar_lea.vmem %s1, 40
  %200 = vst.msk [vmem:[%s199] sm:$0xff] %vm198, %v197
  %s201 = scalar_lea.vmem %s0, 134
  %v202 = vld [vmem:[%s201] ss:$8 sm:$0xf]
  %s203 = scalar_lea.vmem %s0, 134
  %v204 = vld [vmem:[%s203] ss:$8 sm:$0xf0]
  %vm205 = vcmask 1047556
  %v206 = vsel %vm205, %v204, %v202
  %207 = vrot.lane.b32.xlu0 %v206, 48
  %v208 = vpop.permute.xlu0 %207
  %vm209 = vcmask 458112
  %s210 = scalar_lea.vmem %s1, 16
  %211 = vst.msk [vmem:[%s210] sm:$0xff] %vm209, %v208
  %s212 = scalar_lea.vmem %s0, 390
  %v213 = vld [vmem:[%s212] ss:$8 sm:$0xf]
  %s214 = scalar_lea.vmem %s0, 390
  %v215 = vld [vmem:[%s214] ss:$8 sm:$0xf0]
  %vm216 = vcmask 1047556
  %v217 = vsel %vm216, %v215, %v213
  %218 = vrot.lane.b32.xlu0 %v217, 48
  %v219 = vpop.permute.xlu0 %218
  %vm220 = vcmask 458112
  %s221 = scalar_lea.vmem %s1, 48
  %222 = vst.msk [vmem:[%s221] sm:$0xff] %vm220, %v219
  %s223 = scalar_lea.vmem %s0, 198
  %v224 = vld [vmem:[%s223] ss:$8 sm:$0xf]
  %s225 = scalar_lea.vmem %s0, 198
  %v226 = vld [vmem:[%s225] ss:$8 sm:$0xf0]
  %vm227 = vcmask 1047556
  %v228 = vsel %vm227, %v226, %v224
  %229 = vrot.lane.b32.xlu0 %v228, 48
  %v230 = vpop.permute.xlu0 %229
  %vm231 = vcmask 458112
  %s232 = scalar_lea.vmem %s1, 24
  %233 = vst.msk [vmem:[%s232] sm:$0xff] %vm231, %v230
  %s234 = scalar_lea.vmem %s0, 454
  %v235 = vld [vmem:[%s234] ss:$8 sm:$0xf]
  %s236 = scalar_lea.vmem %s0, 454
  %v237 = vld [vmem:[%s236] ss:$8 sm:$0xf0]
  %vm238 = vcmask 1047556
  %v239 = vsel %vm238, %v237, %v235
  %240 = vrot.lane.b32.xlu0 %v239, 48
  %v241 = vpop.permute.xlu0 %240
  %vm242 = vcmask 458112
  %s243 = scalar_lea.vmem %s1, 56
  %244 = vst.msk [vmem:[%s243] sm:$0xff] %vm242, %v241
  %s245 = scalar_lea.vmem %s0, 5
  %v246 = vld [vmem:[%s245] ss:$8 sm:$0xf]
  %s247 = scalar_lea.vmem %s0, 5
  %v248 = vld [vmem:[%s247] ss:$8 sm:$0xf0]
  %vm249 = vcmask 1047556
  %v250 = vsel %vm249, %v248, %v246
  %251 = vrot.lane.b32.xlu0 %v250, 40
  %v252 = vpop.permute.xlu0 %251
  %vm253 = vcmask 392512
  %254 = vst.msk [vmem:[%s1] sm:$0xff] %vm253, %v252
  %s255 = scalar_lea.vmem %s0, 261
  %v256 = vld [vmem:[%s255] ss:$8 sm:$0xf]
  %s257 = scalar_lea.vmem %s0, 261
  %v258 = vld [vmem:[%s257] ss:$8 sm:$0xf0]
  %vm259 = vcmask 1047556
  %v260 = vsel %vm259, %v258, %v256
  %261 = vrot.lane.b32.xlu0 %v260, 40
  %v262 = vpop.permute.xlu0 %261
  %vm263 = vcmask 392512
  %s264 = scalar_lea.vmem %s1, 32
  %265 = vst.msk [vmem:[%s264] sm:$0xff] %vm263, %v262
  %s266 = scalar_lea.vmem %s0, 69
  %v267 = vld [vmem:[%s266] ss:$8 sm:$0xf]
  %s268 = scalar_lea.vmem %s0, 69
  %v269 = vld [vmem:[%s268] ss:$8 sm:$0xf0]
  %vm270 = vcmask 1047556
  %v271 = vsel %vm270, %v269, %v267
  %272 = vrot.lane.b32.xlu0 %v271, 40
  %v273 = vpop.permute.xlu0 %272
  %vm274 = vcmask 392512
  %s275 = scalar_lea.vmem %s1, 8
  %276 = vst.msk [vmem:[%s275] sm:$0xff] %vm274, %v273
  %s277 = scalar_lea.vmem %s0, 325
  %v278 = vld [vmem:[%s277] ss:$8 sm:$0xf]
  %s279 = scalar_lea.vmem %s0, 325
  %v280 = vld [vmem:[%s279] ss:$8 sm:$0xf0]
  %vm281 = vcmask 1047556
  %v282 = vsel %vm281, %v280, %v278
  %283 = vrot.lane.b32.xlu0 %v282, 40
  %v284 = vpop.permute.xlu0 %283
  %vm285 = vcmask 392512
  %s286 = scalar_lea.vmem %s1, 40
  %287 = vst.msk [vmem:[%s286] sm:$0xff] %vm285, %v284
  %s288 = scalar_lea.vmem %s0, 133
  %v289 = vld [vmem:[%s288] ss:$8 sm:$0xf]
  %s290 = scalar_lea.vmem %s0, 133
  %v291 = vld [vmem:[%s290] ss:$8 sm:$0xf0]
  %vm292 = vcmask 1047556
  %v293 = vsel %vm292, %v291, %v289
  %294 = vrot.lane.b32.xlu0 %v293, 40
  %v295 = vpop.permute.xlu0 %294
  %vm296 = vcmask 392512
  %s297 = scalar_lea.vmem %s1, 16
  %298 = vst.msk [vmem:[%s297] sm:$0xff] %vm296, %v295
  %s299 = scalar_lea.vmem %s0, 389
  %v300 = vld [vmem:[%s299] ss:$8 sm:$0xf]
  %s301 = scalar_lea.vmem %s0, 389
  %v302 = vld [vmem:[%s301] ss:$8 sm:$0xf0]
  %vm303 = vcmask 1047556
  %v304 = vsel %vm303, %v302, %v300
  %305 = vrot.lane.b32.xlu0 %v304, 40
  %v306 = vpop.permute.xlu0 %305
  %vm307 = vcmask 392512
  %s308 = scalar_lea.vmem %s1, 48
  %309 = vst.msk [vmem:[%s308] sm:$0xff] %vm307, %v306
  %s310 = scalar_lea.vmem %s0, 197
  %v311 = vld [vmem:[%s310] ss:$8 sm:$0xf]
  %s312 = scalar_lea.vmem %s0, 197
  %v313 = vld [vmem:[%s312] ss:$8 sm:$0xf0]
  %vm314 = vcmask 1047556
  %v315 = vsel %vm314, %v313, %v311
  %316 = vrot.lane.b32.xlu0 %v315, 40
  %v317 = vpop.permute.xlu0 %316
  %vm318 = vcmask 392512
  %s319 = scalar_lea.vmem %s1, 24
  %320 = vst.msk [vmem:[%s319] sm:$0xff] %vm318, %v317
  %s321 = scalar_lea.vmem %s0, 453
  %v322 = vld [vmem:[%s321] ss:$8 sm:$0xf]
  %s323 = scalar_lea.vmem %s0, 453
  %v324 = vld [vmem:[%s323] ss:$8 sm:$0xf0]
  %vm325 = vcmask 1047556
  %v326 = vsel %vm325, %v324, %v322
  %327 = vrot.lane.b32.xlu0 %v326, 40
  %v328 = vpop.permute.xlu0 %327
  %vm329 = vcmask 392512
  %s330 = scalar_lea.vmem %s1, 56
  %331 = vst.msk [vmem:[%s330] sm:$0xff] %vm329, %v328
  %s332 = scalar_lea.vmem %s0, 4
  %v333 = vld [vmem:[%s332] ss:$8 sm:$0xf]
  %s334 = scalar_lea.vmem %s0, 4
  %v335 = vld [vmem:[%s334] ss:$8 sm:$0xf0]
  %vm336 = vcmask 1047556
  %v337 = vsel %vm336, %v335, %v333
  %338 = vrot.lane.b32.xlu0 %v337, 32
  %v339 = vpop.permute.xlu0 %338
  %vm340 = vcmask 326912
  %341 = vst.msk [vmem:[%s1] sm:$0xff] %vm340, %v339
  %s342 = scalar_lea.vmem %s0, 260
  %v343 = vld [vmem:[%s342] ss:$8 sm:$0xf]
  %s344 = scalar_lea.vmem %s0, 260
  %v345 = vld [vmem:[%s344] ss:$8 sm:$0xf0]
  %vm346 = vcmask 1047556
  %v347 = vsel %vm346, %v345, %v343
  %348 = vrot.lane.b32.xlu0 %v347, 32
  %v349 = vpop.permute.xlu0 %348
  %vm350 = vcmask 326912
  %s351 = scalar_lea.vmem %s1, 32
  %352 = vst.msk [vmem:[%s351] sm:$0xff] %vm350, %v349
  %s353 = scalar_lea.vmem %s0, 68
  %v354 = vld [vmem:[%s353] ss:$8 sm:$0xf]
  %s355 = scalar_lea.vmem %s0, 68
  %v356 = vld [vmem:[%s355] ss:$8 sm:$0xf0]
  %vm357 = vcmask 1047556
  %v358 = vsel %vm357, %v356, %v354
  %359 = vrot.lane.b32.xlu0 %v358, 32
  %v360 = vpop.permute.xlu0 %359
  %vm361 = vcmask 326912
  %s362 = scalar_lea.vmem %s1, 8
  %363 = vst.msk [vmem:[%s362] sm:$0xff] %vm361, %v360
  %s364 = scalar_lea.vmem %s0, 324
  %v365 = vld [vmem:[%s364] ss:$8 sm:$0xf]
  %s366 = scalar_lea.vmem %s0, 324
  %v367 = vld [vmem:[%s366] ss:$8 sm:$0xf0]
  %vm368 = vcmask 1047556
  %v369 = vsel %vm368, %v367, %v365
  %370 = vrot.lane.b32.xlu0 %v369, 32
  %v371 = vpop.permute.xlu0 %370
  %vm372 = vcmask 326912
  %s373 = scalar_lea.vmem %s1, 40
  %374 = vst.msk [vmem:[%s373] sm:$0xff] %vm372, %v371
  %s375 = scalar_lea.vmem %s0, 132
  %v376 = vld [vmem:[%s375] ss:$8 sm:$0xf]
  %s377 = scalar_lea.vmem %s0, 132
  %v378 = vld [vmem:[%s377] ss:$8 sm:$0xf0]
  %vm379 = vcmask 1047556
  %v380 = vsel %vm379, %v378, %v376
  %381 = vrot.lane.b32.xlu0 %v380, 32
  %v382 = vpop.permute.xlu0 %381
  %vm383 = vcmask 326912
  %s384 = scalar_lea.vmem %s1, 16
  %385 = vst.msk [vmem:[%s384] sm:$0xff] %vm383, %v382
  %s386 = scalar_lea.vmem %s0, 388
  %v387 = vld [vmem:[%s386] ss:$8 sm:$0xf]
  %s388 = scalar_lea.vmem %s0, 388
  %v389 = vld [vmem:[%s388] ss:$8 sm:$0xf0]
  %vm390 = vcmask 1047556
  %v391 = vsel %vm390, %v389, %v387
  %392 = vrot.lane.b32.xlu0 %v391, 32
  %v393 = vpop.permute.xlu0 %392
  %vm394 = vcmask 326912
  %s395 = scalar_lea.vmem %s1, 48
  %396 = vst.msk [vmem:[%s395] sm:$0xff] %vm394, %v393
  %s397 = scalar_lea.vmem %s0, 196
  %v398 = vld [vmem:[%s397] ss:$8 sm:$0xf]
  %s399 = scalar_lea.vmem %s0, 196
  %v400 = vld [vmem:[%s399] ss:$8 sm:$0xf0]
  %vm401 = vcmask 1047556
  %v402 = vsel %vm401, %v400, %v398
  %403 = vrot.lane.b32.xlu0 %v402, 32
  %v404 = vpop.permute.xlu0 %403
  %vm405 = vcmask 326912
  %s406 = scalar_lea.vmem %s1, 24
  %407 = vst.msk [vmem:[%s406] sm:$0xff] %vm405, %v404
  %s408 = scalar_lea.vmem %s0, 452
  %v409 = vld [vmem:[%s408] ss:$8 sm:$0xf]
  %s410 = scalar_lea.vmem %s0, 452
  %v411 = vld [vmem:[%s410] ss:$8 sm:$0xf0]
  %vm412 = vcmask 1047556
  %v413 = vsel %vm412, %v411, %v409
  %414 = vrot.lane.b32.xlu0 %v413, 32
  %v415 = vpop.permute.xlu0 %414
  %vm416 = vcmask 326912
  %s417 = scalar_lea.vmem %s1, 56
  %418 = vst.msk [vmem:[%s417] sm:$0xff] %vm416, %v415
  %s419 = scalar_lea.vmem %s0, 3
  %v420 = vld [vmem:[%s419] ss:$8 sm:$0xf]
  %s421 = scalar_lea.vmem %s0, 3
  %v422 = vld [vmem:[%s421] ss:$8 sm:$0xf0]
  %vm423 = vcmask 1047556
  %v424 = vsel %vm423, %v422, %v420
  %425 = vrot.lane.b32.xlu0 %v424, 24
  %v426 = vpop.permute.xlu0 %425
  %vm427 = vcmask 261312
  %428 = vst.msk [vmem:[%s1] sm:$0xff] %vm427, %v426
  %s429 = scalar_lea.vmem %s0, 259
  %v430 = vld [vmem:[%s429] ss:$8 sm:$0xf]
  %s431 = scalar_lea.vmem %s0, 259
  %v432 = vld [vmem:[%s431] ss:$8 sm:$0xf0]
  %vm433 = vcmask 1047556
  %v434 = vsel %vm433, %v432, %v430
  %435 = vrot.lane.b32.xlu0 %v434, 24
  %v436 = vpop.permute.xlu0 %435
  %vm437 = vcmask 261312
  %s438 = scalar_lea.vmem %s1, 32
  %439 = vst.msk [vmem:[%s438] sm:$0xff] %vm437, %v436
  %s440 = scalar_lea.vmem %s0, 67
  %v441 = vld [vmem:[%s440] ss:$8 sm:$0xf]
  %s442 = scalar_lea.vmem %s0, 67
  %v443 = vld [vmem:[%s442] ss:$8 sm:$0xf0]
  %vm444 = vcmask 1047556
  %v445 = vsel %vm444, %v443, %v441
  %446 = vrot.lane.b32.xlu0 %v445, 24
  %v447 = vpop.permute.xlu0 %446
  %vm448 = vcmask 261312
  %s449 = scalar_lea.vmem %s1, 8
  %450 = vst.msk [vmem:[%s449] sm:$0xff] %vm448, %v447
  %s451 = scalar_lea.vmem %s0, 323
  %v452 = vld [vmem:[%s451] ss:$8 sm:$0xf]
  %s453 = scalar_lea.vmem %s0, 323
  %v454 = vld [vmem:[%s453] ss:$8 sm:$0xf0]
  %vm455 = vcmask 1047556
  %v456 = vsel %vm455, %v454, %v452
  %457 = vrot.lane.b32.xlu0 %v456, 24
  %v458 = vpop.permute.xlu0 %457
  %vm459 = vcmask 261312
  %s460 = scalar_lea.vmem %s1, 40
  %461 = vst.msk [vmem:[%s460] sm:$0xff] %vm459, %v458
  %s462 = scalar_lea.vmem %s0, 131
  %v463 = vld [vmem:[%s462] ss:$8 sm:$0xf]
  %s464 = scalar_lea.vmem %s0, 131
  %v465 = vld [vmem:[%s464] ss:$8 sm:$0xf0]
  %vm466 = vcmask 1047556
  %v467 = vsel %vm466, %v465, %v463
  %468 = vrot.lane.b32.xlu0 %v467, 24
  %v469 = vpop.permute.xlu0 %468
  %vm470 = vcmask 261312
  %s471 = scalar_lea.vmem %s1, 16
  %472 = vst.msk [vmem:[%s471] sm:$0xff] %vm470, %v469
  %s473 = scalar_lea.vmem %s0, 387
  %v474 = vld [vmem:[%s473] ss:$8 sm:$0xf]
  %s475 = scalar_lea.vmem %s0, 387
  %v476 = vld [vmem:[%s475] ss:$8 sm:$0xf0]
  %vm477 = vcmask 1047556
  %v478 = vsel %vm477, %v476, %v474
  %479 = vrot.lane.b32.xlu0 %v478, 24
  %v480 = vpop.permute.xlu0 %479
  %vm481 = vcmask 261312
  %s482 = scalar_lea.vmem %s1, 48
  %483 = vst.msk [vmem:[%s482] sm:$0xff] %vm481, %v480
  %s484 = scalar_lea.vmem %s0, 195
  %v485 = vld [vmem:[%s484] ss:$8 sm:$0xf]
  %s486 = scalar_lea.vmem %s0, 195
  %v487 = vld [vmem:[%s486] ss:$8 sm:$0xf0]
  %vm488 = vcmask 1047556
  %v489 = vsel %vm488, %v487, %v485
  %490 = vrot.lane.b32.xlu0 %v489, 24
  %v491 = vpop.permute.xlu0 %490
  %vm492 = vcmask 261312
  %s493 = scalar_lea.vmem %s1, 24
  %494 = vst.msk [vmem:[%s493] sm:$0xff] %vm492, %v491
  %s495 = scalar_lea.vmem %s0, 451
  %v496 = vld [vmem:[%s495] ss:$8 sm:$0xf]
  %s497 = scalar_lea.vmem %s0, 451
  %v498 = vld [vmem:[%s497] ss:$8 sm:$0xf0]
  %vm499 = vcmask 1047556
  %v500 = vsel %vm499, %v498, %v496
  %501 = vrot.lane.b32.xlu0 %v500, 24
  %v502 = vpop.permute.xlu0 %501
  %vm503 = vcmask 261312
  %s504 = scalar_lea.vmem %s1, 56
  %505 = vst.msk [vmem:[%s504] sm:$0xff] %vm503, %v502
  %s506 = scalar_lea.vmem %s0, 2
  %v507 = vld [vmem:[%s506] ss:$8 sm:$0xf]
  %s508 = scalar_lea.vmem %s0, 2
  %v509 = vld [vmem:[%s508] ss:$8 sm:$0xf0]
  %vm510 = vcmask 1047556
  %v511 = vsel %vm510, %v509, %v507
  %512 = vrot.lane.b32.xlu0 %v511, 16
  %v513 = vpop.permute.xlu0 %512
  %vm514 = vcmask 195712
  %515 = vst.msk [vmem:[%s1] sm:$0xff] %vm514, %v513
  %s516 = scalar_lea.vmem %s0, 258
  %v517 = vld [vmem:[%s516] ss:$8 sm:$0xf]
  %s518 = scalar_lea.vmem %s0, 258
  %v519 = vld [vmem:[%s518] ss:$8 sm:$0xf0]
  %vm520 = vcmask 1047556
  %v521 = vsel %vm520, %v519, %v517
  %522 = vrot.lane.b32.xlu0 %v521, 16
  %v523 = vpop.permute.xlu0 %522
  %vm524 = vcmask 195712
  %s525 = scalar_lea.vmem %s1, 32
  %526 = vst.msk [vmem:[%s525] sm:$0xff] %vm524, %v523
  %s527 = scalar_lea.vmem %s0, 66
  %v528 = vld [vmem:[%s527] ss:$8 sm:$0xf]
  %s529 = scalar_lea.vmem %s0, 66
  %v530 = vld [vmem:[%s529] ss:$8 sm:$0xf0]
  %vm531 = vcmask 1047556
  %v532 = vsel %vm531, %v530, %v528
  %533 = vrot.lane.b32.xlu0 %v532, 16
  %v534 = vpop.permute.xlu0 %533
  %vm535 = vcmask 195712
  %s536 = scalar_lea.vmem %s1, 8
  %537 = vst.msk [vmem:[%s536] sm:$0xff] %vm535, %v534
  %s538 = scalar_lea.vmem %s0, 322
  %v539 = vld [vmem:[%s538] ss:$8 sm:$0xf]
  %s540 = scalar_lea.vmem %s0, 322
  %v541 = vld [vmem:[%s540] ss:$8 sm:$0xf0]
  %vm542 = vcmask 1047556
  %v543 = vsel %vm542, %v541, %v539
  %544 = vrot.lane.b32.xlu0 %v543, 16
  %v545 = vpop.permute.xlu0 %544
  %vm546 = vcmask 195712
  %s547 = scalar_lea.vmem %s1, 40
  %548 = vst.msk [vmem:[%s547] sm:$0xff] %vm546, %v545
  %s549 = scalar_lea.vmem %s0, 130
  %v550 = vld [vmem:[%s549] ss:$8 sm:$0xf]
  %s551 = scalar_lea.vmem %s0, 130
  %v552 = vld [vmem:[%s551] ss:$8 sm:$0xf0]
  %vm553 = vcmask 1047556
  %v554 = vsel %vm553, %v552, %v550
  %555 = vrot.lane.b32.xlu0 %v554, 16
  %v556 = vpop.permute.xlu0 %555
  %vm557 = vcmask 195712
  %s558 = scalar_lea.vmem %s1, 16
  %559 = vst.msk [vmem:[%s558] sm:$0xff] %vm557, %v556
  %s560 = scalar_lea.vmem %s0, 386
  %v561 = vld [vmem:[%s560] ss:$8 sm:$0xf]
  %s562 = scalar_lea.vmem %s0, 386
  %v563 = vld [vmem:[%s562] ss:$8 sm:$0xf0]
  %vm564 = vcmask 1047556
  %v565 = vsel %vm564, %v563, %v561
  %566 = vrot.lane.b32.xlu0 %v565, 16
  %v567 = vpop.permute.xlu0 %566
  %vm568 = vcmask 195712
  %s569 = scalar_lea.vmem %s1, 48
  %570 = vst.msk [vmem:[%s569] sm:$0xff] %vm568, %v567
  %s571 = scalar_lea.vmem %s0, 194
  %v572 = vld [vmem:[%s571] ss:$8 sm:$0xf]
  %s573 = scalar_lea.vmem %s0, 194
  %v574 = vld [vmem:[%s573] ss:$8 sm:$0xf0]
  %vm575 = vcmask 1047556
  %v576 = vsel %vm575, %v574, %v572
  %577 = vrot.lane.b32.xlu0 %v576, 16
  %v578 = vpop.permute.xlu0 %577
  %vm579 = vcmask 195712
  %s580 = scalar_lea.vmem %s1, 24
  %581 = vst.msk [vmem:[%s580] sm:$0xff] %vm579, %v578
  %s582 = scalar_lea.vmem %s0, 450
  %v583 = vld [vmem:[%s582] ss:$8 sm:$0xf]
  %s584 = scalar_lea.vmem %s0, 450
  %v585 = vld [vmem:[%s584] ss:$8 sm:$0xf0]
  %vm586 = vcmask 1047556
  %v587 = vsel %vm586, %v585, %v583
  %588 = vrot.lane.b32.xlu0 %v587, 16
  %v589 = vpop.permute.xlu0 %588
  %vm590 = vcmask 195712
  %s591 = scalar_lea.vmem %s1, 56
  %592 = vst.msk [vmem:[%s591] sm:$0xff] %vm590, %v589
  %s593 = scalar_lea.vmem %s0, 1
  %v594 = vld [vmem:[%s593] ss:$8 sm:$0xf]
  %s595 = scalar_lea.vmem %s0, 1
  %v596 = vld [vmem:[%s595] ss:$8 sm:$0xf0]
  %vm597 = vcmask 1047556
  %v598 = vsel %vm597, %v596, %v594
  %599 = vrot.lane.b32.xlu0 %v598, 8
  %v600 = vpop.permute.xlu0 %599
  %vm601 = vcmask 130112
  %602 = vst.msk [vmem:[%s1] sm:$0xff] %vm601, %v600
  %s603 = scalar_lea.vmem %s0, 257
  %v604 = vld [vmem:[%s603] ss:$8 sm:$0xf]
  %s605 = scalar_lea.vmem %s0, 257
  %v606 = vld [vmem:[%s605] ss:$8 sm:$0xf0]
  %vm607 = vcmask 1047556
  %v608 = vsel %vm607, %v606, %v604
  %609 = vrot.lane.b32.xlu0 %v608, 8
  %v610 = vpop.permute.xlu0 %609
  %vm611 = vcmask 130112
  %s612 = scalar_lea.vmem %s1, 32
  %613 = vst.msk [vmem:[%s612] sm:$0xff] %vm611, %v610
  %s614 = scalar_lea.vmem %s0, 65
  %v615 = vld [vmem:[%s614] ss:$8 sm:$0xf]
  %s616 = scalar_lea.vmem %s0, 65
  %v617 = vld [vmem:[%s616] ss:$8 sm:$0xf0]
  %vm618 = vcmask 1047556
  %v619 = vsel %vm618, %v617, %v615
  %620 = vrot.lane.b32.xlu0 %v619, 8
  %v621 = vpop.permute.xlu0 %620
  %vm622 = vcmask 130112
  %s623 = scalar_lea.vmem %s1, 8
  %624 = vst.msk [vmem:[%s623] sm:$0xff] %vm622, %v621
  %s625 = scalar_lea.vmem %s0, 321
  %v626 = vld [vmem:[%s625] ss:$8 sm:$0xf]
  %s627 = scalar_lea.vmem %s0, 321
  %v628 = vld [vmem:[%s627] ss:$8 sm:$0xf0]
  %vm629 = vcmask 1047556
  %v630 = vsel %vm629, %v628, %v626
  %631 = vrot.lane.b32.xlu0 %v630, 8
  %v632 = vpop.permute.xlu0 %631
  %vm633 = vcmask 130112
  %s634 = scalar_lea.vmem %s1, 40
  %635 = vst.msk [vmem:[%s634] sm:$0xff] %vm633, %v632
  %s636 = scalar_lea.vmem %s0, 129
  %v637 = vld [vmem:[%s636] ss:$8 sm:$0xf]
  %s638 = scalar_lea.vmem %s0, 129
  %v639 = vld [vmem:[%s638] ss:$8 sm:$0xf0]
  %vm640 = vcmask 1047556
  %v641 = vsel %vm640, %v639, %v637
  %642 = vrot.lane.b32.xlu0 %v641, 8
  %v643 = vpop.permute.xlu0 %642
  %vm644 = vcmask 130112
  %s645 = scalar_lea.vmem %s1, 16
  %646 = vst.msk [vmem:[%s645] sm:$0xff] %vm644, %v643
  %s647 = scalar_lea.vmem %s0, 385
  %v648 = vld [vmem:[%s647] ss:$8 sm:$0xf]
  %s649 = scalar_lea.vmem %s0, 385
  %v650 = vld [vmem:[%s649] ss:$8 sm:$0xf0]
  %vm651 = vcmask 1047556
  %v652 = vsel %vm651, %v650, %v648
  %653 = vrot.lane.b32.xlu0 %v652, 8
  %v654 = vpop.permute.xlu0 %653
  %vm655 = vcmask 130112
  %s656 = scalar_lea.vmem %s1, 48
  %657 = vst.msk [vmem:[%s656] sm:$0xff] %vm655, %v654
  %s658 = scalar_lea.vmem %s0, 193
  %v659 = vld [vmem:[%s658] ss:$8 sm:$0xf]
  %s660 = scalar_lea.vmem %s0, 193
  %v661 = vld [vmem:[%s660] ss:$8 sm:$0xf0]
  %vm662 = vcmask 1047556
  %v663 = vsel %vm662, %v661, %v659
  %664 = vrot.lane.b32.xlu0 %v663, 8
  %v665 = vpop.permute.xlu0 %664
  %vm666 = vcmask 130112
  %s667 = scalar_lea.vmem %s1, 24
  %668 = vst.msk [vmem:[%s667] sm:$0xff] %vm666, %v665
  %s669 = scalar_lea.vmem %s0, 449
  %v670 = vld [vmem:[%s669] ss:$8 sm:$0xf]
  %s671 = scalar_lea.vmem %s0, 449
  %v672 = vld [vmem:[%s671] ss:$8 sm:$0xf0]
  %vm673 = vcmask 1047556
  %v674 = vsel %vm673, %v672, %v670
  %675 = vrot.lane.b32.xlu0 %v674, 8
  %v676 = vpop.permute.xlu0 %675
  %vm677 = vcmask 130112
  %s678 = scalar_lea.vmem %s1, 56
  %679 = vst.msk [vmem:[%s678] sm:$0xff] %vm677, %v676

// kernel: _forward_core.1
$region0: #{_forward_core.1}
  #allocation0 [shape = 'u32[]', space=smem, size = 0x4, offset = 0x4, fixed_abs, tag = 'smem constant byte address 0x4 - core index']
  #allocation1 [shape = 'u32[144,128]{1,0:T(1,128)}', space=vmem, size = 0x12000, scoped, tag = 'internal scratch']
  %s0 = inlined_call_operand.vmem [shape: f32[88,64], index: 0, kind: input, shape index: {}]
  %s1 = inlined_call_operand.vmem [shape: f32[520,128], index: 1, kind: input, shape index: {}]
  %s2 = inlined_call_operand.hbm [shape: f32[2,2], index: 2, kind: output, shape index: {0}]
  %s3 = inlined_call_operand.vmem [shape: f32[64,128], index: 3, kind: output, shape index: {1}]
  %4 = xla_tuple %s2, %s3
  %s5 = sld [smem:[#allocation0]]
  $region26: #{_forward_core.1} parent=0
    _
  %s7 = ssub.s32 1, %s5
  %s8 = scalar_select 0, %s7, %s5
  $region1: #{_forward_core.1} parent=0
    #allocation2 [shape = 'u8[1024]{0}', space=vmem, size = 0x400, scoped, tag = 'output window, operand 0, single buffered']
    #allocation3 [shape = 's32[1]{0}', space=sflag, size = 0x4, scoped, tag = 'scoped memory for _forward_core.1']
    %9 = vsyncpa [#allocation3], 0
    // Predicated region
    $region2: #{_forward_core.1} parent=1 // pred_check
      _
    $region3: #{_forward_core.1} parent=1 // pred_check_branch
      %11 = sbr.rel (0) target = $region5
    $region4: #{_forward_core.1} parent=1 // pred_region
      _
    $region5: #{_forward_core.1} parent=1 // pred_fallthru
      _
    // Predicated region
    $region6: #{_forward_core.1} parent=1 // pred_check
      _
    $region7: #{_forward_core.1} parent=1 // pred_check_branch
      %13 = sbr.rel (0) target = $region9
    $region8: #{_forward_core.1} parent=1 // pred_region
      _
    $region9: #{_forward_core.1} parent=1 // pred_fallthru
      _
    %v14 = vld [vmem:[%s0] sm:$0xff]
    %v15 = vld [vmem:[%s0 + $0x8] sm:$0xff]
    %v16 = vld [vmem:[%s0 + $0x10] sm:$0xff]
    %v17 = vld [vmem:[%s0 + $0x18] sm:$0xff]
    %v18 = vld [vmem:[%s0 + $0x20] sm:$0xff]
    %v19 = vld [vmem:[%s0 + $0x28] sm:$0xff]
    %v20 = vld [vmem:[%s0 + $0x30] sm:$0xff]
    %v21 = vld [vmem:[%s0 + $0x38] sm:$0xff]
    %v22 = vld [vmem:[%s0 + $0x40] sm:$0xff]
    %v23 = vld [vmem:[%s0 + $0x48] sm:$0xff]
    %v24 = vld [vmem:[%s0 + $0x50] sm:$0x3]
    %v25 = vld [vmem:[%s1] sm:$0xff]
    %v26 = vld [vmem:[%s1 + $0x8] sm:$0xff]
    %v27 = vld [vmem:[%s1 + $0x10] sm:$0xff]
    %v28 = vld [vmem:[%s1 + $0x18] sm:$0xff]
    %v29 = vld [vmem:[%s1 + $0x20] sm:$0xff]
    %v30 = vld [vmem:[%s1 + $0x28] sm:$0xff]
    %v31 = vld [vmem:[%s1 + $0x30] sm:$0xff]
    %v32 = vld [vmem:[%s1 + $0x38] sm:$0xff]
    %v33 = vld [vmem:[%s1 + $0x40] sm:$0xff]
    %v34 = vld [vmem:[%s1 + $0x48] sm:$0xff]
    %v35 = vld [vmem:[%s1 + $0x50] sm:$0xff]
    %v36 = vld [vmem:[%s1 + $0x58] sm:$0xff]
    %v37 = vld [vmem:[%s1 + $0x60] sm:$0xff]
    %v38 = vld [vmem:[%s1 + $0x68] sm:$0xff]
    %v39 = vld [vmem:[%s1 + $0x70] sm:$0xff]
    %v40 = vld [vmem:[%s1 + $0x78] sm:$0xff]
    %v41 = vld [vmem:[%s1 + $0x80] sm:$0xff]
    %v42 = vld [vmem:[%s1 + $0x88] sm:$0xff]
    %v43 = vld [vmem:[%s1 + $0x90] sm:$0x1]
    %v44 = vld [vmem:[%s1 + $0x91] sm:$0x1]
    %v45 = vld [vmem:[%s1 + $0x92] sm:$0x1]
    %v46 = vld [vmem:[%s1 + $0x98] sm:$0xff]
    %v47 = vld [vmem:[%s1 + $0xa0] sm:$0xff]
    %v48 = vld [vmem:[%s1 + $0xa8] sm:$0xff]
    %v49 = vld [vmem:[%s1 + $0xb0] sm:$0xff]
    %vm50 = vcmask 261120
    %v51 = vsel %vm50, %v22, 0.0
    %52 = vadd.xlane.f32.xlu0 %v51
    %v53 = vpop.xlane.xlu0 %52
    %v54 = vsel %vm50, %v23, 0.0
    %55 = vadd.xlane.f32.xlu0 %v54
    %v56 = vpop.xlane.xlu0 %55
    %v57 = vrcp.pop 32.0
    %v58 = vmul.f32 %v53, %v57
    %v59 = vmul.f32 %v56, %v57
    %v60 = vsub.f32 %v22, %v58
    %v61 = vsub.f32 %v23, %v59
    %v62 = vmul.f32 %v60, %v60
    %v63 = vmul.f32 %v61, %v61
    %v64 = vsel %vm50, %v62, 0.0
    %65 = vadd.xlane.f32.xlu0 %v64
    %v66 = vpop.xlane.xlu0 %65
    %v67 = vsel %vm50, %v63, 0.0
    %68 = vadd.xlane.f32.xlu0 %v67
    %v69 = vpop.xlane.xlu0 %68
    %v70 = vmul.f32 %v66, %v57
    %v71 = vmul.f32 %v69, %v57
    %v72 = vadd.f32 %v70, 1e-05
    %v73 = vadd.f32 %v71, 1e-05
    %v74 = vrsqrt.pop %v72
    %v75 = vrsqrt.pop %v73
    %v76 = vmul.f32 %v60, %v74
    %v77 = vmul.f32 %v61, %v75
    %v78 = vlaneseq
    %v79 = vshrl.u32 %v78, 7
    %v80 = vsub.s32 0, %v79
    %v81 = vrot.slane %v43, %v80
    %v82 = vmul.f32 %v76, %v81
    %v83 = vmul.f32 %v77, %v81
    %v84 = vlaneseq
    %v85 = vshrl.u32 %v84, 7
    %v86 = vsub.s32 0, %v85
    %v87 = vrot.slane %v44, %v86
    %v88 = vadd.f32 %v82, %v87
    %v89 = vadd.f32 %v83, %v87
    %v90 = vld [vmem:[%s1 + $0xb8] sm:$0xff]
    %v91 = vld [vmem:[%s1 + $0xc0] sm:$0xff]
    %v92 = vld [vmem:[%s1 + $0xc8] sm:$0xff]
    %v93 = vld [vmem:[%s1 + $0xd0] sm:$0xff]
    %v94 = vld [vmem:[%s1 + $0xd8] sm:$0xff]
    %v95 = vld [vmem:[%s1 + $0xe0] sm:$0xff]
    %v96 = vld [vmem:[%s1 + $0xe8] sm:$0xff]
    %v97 = vld [vmem:[%s1 + $0xf0] sm:$0xff]
    %v98 = vld [vmem:[%s1 + $0xf8] sm:$0xff]
    %v99 = vld [vmem:[%s1 + $0x100] sm:$0xff]
    %v100 = vld [vmem:[%s1 + $0x108] sm:$0xff]
    %v101 = vld [vmem:[%s1 + $0x110] sm:$0xff]
    %v102 = vld [vmem:[%s1 + $0x118] sm:$0xff]
    %v103 = vld [vmem:[%s1 + $0x120] sm:$0xff]
    %v104 = vld [vmem:[%s1 + $0x128] sm:$0xff]
    %v105 = vld [vmem:[%s1 + $0x130] sm:$0xff]
    %v106 = vld [vmem:[%s1 + $0x138] sm:$0xff]
    %v107 = vld [vmem:[%s1 + $0x140] sm:$0xff]
    %v108 = vld [vmem:[%s1 + $0x148] sm:$0xff]
    %v109 = vld [vmem:[%s1 + $0x150] sm:$0xff]
    %v110 = vld [vmem:[%s1 + $0x158] sm:$0x1]
    %v111 = vld [vmem:[%s1 + $0x159] sm:$0x1]
    %v112 = vld [vmem:[%s1 + $0x15a] sm:$0x1]
    %v113 = vld [vmem:[%s1 + $0x15b] sm:$0x1]
    %v114 = vld [vmem:[%s1 + $0x15c] sm:$0x1]
    %v115 = vld [vmem:[%s1 + $0x15d] sm:$0x1]
    %v116 = vld [vmem:[%s1 + $0x15e] sm:$0x1]
    %v117 = vld [vmem:[%s1 + $0x15f] sm:$0x1]
    %v118 = vlaneseq
    %v119 = vshrl.u32 %v118, 7
    %v120 = vsub.s32 0, %v119
    %v121 = vrot.slane %v110, %v120
    %v123 = vsel %vm50, %v88, 0
    %v126 = vsel %vm50, %v89, 0
    %128 = vmatprep.subr.mxu0 0.0
    %129 = vmatpush1.msra.mxu0 %v90
    %130 = vmatprep.subr.mxu0 0.0
    %131 = vmatpush1.msra.mxu0 %v91
    %132 = vmatprep.subr.mxu0 0.0
    %133 = vmatpush1.msra.mxu0 %v92
    %134 = vmatprep.subr.mxu0 0.0
    %135 = vmatpush1.msra.mxu0 %v93
    %136 = vmatprep.subr.mxu0 0.0
    %137 = vmatpush1.msra.mxu0 0.0
    %138 = vmatprep.subr.mxu0 0.0
    %139 = vmatpush1.msra.mxu0 0.0
    %140 = vmatprep.subr.mxu0 0.0
    %141 = vmatpush1.msra.mxu0 0.0
    %142 = vmatprep.subr.mxu0 0.0
    %143 = vmatpush1.msra.mxu0 0.0
    %144 = vmatprep.subr.mxu0 0.0
    %145 = vmatpush1.msra.mxu0 0.0
    %146 = vmatprep.subr.mxu0 0.0
    %147 = vmatpush1.msra.mxu0 0.0
    %148 = vmatprep.subr.mxu0 0.0
    %149 = vmatpush1.msra.mxu0 0.0
    %150 = vmatprep.subr.mxu0 0.0
    %151 = vmatpush1.msra.mxu0 0.0
    %152 = vmatprep.subr.mxu0 0.0
    %153 = vmatpush1.msra.mxu0 0.0
    %154 = vmatprep.subr.mxu0 0.0
    %155 = vmatpush1.msra.mxu0 0.0
    %156 = vmatprep.subr.mxu0 0.0
    %157 = vmatpush1.msra.mxu0 0.0
    %158 = vmatprep.subr.mxu0 0.0
    %159 = vmatpush1.msra.mxu0 0.0
    %160 = vmatprep.subr.mxu0 0.0
    %161 = vmatpush1.msra.mxu0 0.0
    %162 = vmatprep.subr.mxu0 0.0
    %163 = vmatpush1.msra.mxu0 0.0
    %164 = vmatprep.subr.mxu0 0.0
    %165 = vmatpush1.msra.mxu0 0.0
    %166 = vmatprep.subr.mxu0 0.0
    %167 = vmatpush1.msra.mxu0 0.0
    %168 = vmatprep.subr.mxu0 0.0
    %169 = vmatpush1.msra.mxu0 0.0
    %170 = vmatprep.subr.mxu0 0.0
    %171 = vmatpush1.msra.mxu0 0.0
    %172 = vmatprep.subr.mxu0 0.0
    %173 = vmatpush1.msra.mxu0 0.0
    %174 = vmatprep.subr.mxu0 0.0
    %175 = vmatpush1.msra.mxu0 0.0
    %176 = vmatprep.subr.mxu0 0.0
    %177 = vmatpush1.msra.mxu0 0.0
    %178 = vmatprep.subr.mxu0 0.0
    %179 = vmatpush1.msra.mxu0 0.0
    %180 = vmatprep.subr.mxu0 0.0
    %181 = vmatpush1.msra.mxu0 0.0
    %182 = vmatprep.subr.mxu0 0.0
    %183 = vmatpush1.msra.mxu0 0.0
    %184 = vmatprep.subr.mxu0 0.0
    %185 = vmatpush1.msra.mxu0 0.0
    %186 = vmatprep.subr.mxu0 0.0
    %187 = vmatpush1.msra.mxu0 0.0
    %188 = vmatprep.subr.mxu0 0.0
    %189 = vmatpush1.msra.mxu0 0.0
    %190 = vmatprep.subr.mxu0 0.0
    %191 = vmatpush1.msra.mxu0 0.0
    %192 = vmatprep.mubr.f32.mxu0 0.0
    %193 = vmatmul.mubr.f32.gmra.mrb[0].mxu0 %v123
    %v194 = vpop.f32.mrb[0].mxu0
    %v195 = vadd.f32 %v121, %v194
    %v196 = vpop.f32.mrb[0].mxu0
    %197 = vmatprep.mubr.f32.mxu0 0.0
    %198 = vmatmul.mubr.f32.gmra.mrb[0].mxu0 %v126
    %v199 = vpop.f32.mrb[0].mxu0
    %v200 = vadd.f32 %v121, %v199
    %v201 = vpop.f32.mrb[0].mxu0
    %202 = vdwg.mxu0
    %vm203 = vcmask 130048
    %v205 = vsel %vm203, %v25, 0
    %v208 = vsel %vm203, %v26, 0
    %v211 = vsel %vm203, %v27, 0
    %v214 = vsel %vm203, %v28, 0
    %v217 = vsel %vm203, %v29, 0
    %v220 = vsel %vm203, %v30, 0
    %v223 = vsel %vm203, %v31, 0
    %v226 = vsel %vm203, %v32, 0
    %228 = vmatprep.subr.mxu0 0.0
    %229 = vmatpush1.msra.mxu0 %v195
    %230 = vmatprep.subr.mxu0 0.0
    %231 = vmatpush1.msra.mxu0 %v200
    %232 = vmatprep.subr.mxu0 0.0
    %233 = vmatpush1.msra.mxu0 0.0
    %234 = vmatprep.subr.mxu0 0.0
    %235 = vmatpush1.msra.mxu0 0.0
    %236 = vmatprep.subr.mxu0 0.0
    %237 = vmatpush1.msra.mxu0 0.0
    %238 = vmatprep.subr.mxu0 0.0
    %239 = vmatpush1.msra.mxu0 0.0
    %240 = vmatprep.subr.mxu0 0.0
    %241 = vmatpush1.msra.mxu0 0.0
    %242 = vmatprep.subr.mxu0 0.0
    %243 = vmatpush1.msra.mxu0 0.0
    %244 = vmatprep.subr.mxu0 0.0
    %245 = vmatpush1.msra.mxu0 0.0
    %246 = vmatprep.subr.mxu0 0.0
    %247 = vmatpush1.msra.mxu0 0.0
    %248 = vmatprep.subr.mxu0 0.0
    %249 = vmatpush1.msra.mxu0 0.0
    %250 = vmatprep.subr.mxu0 0.0
    %251 = vmatpush1.msra.mxu0 0.0
    %252 = vmatprep.subr.mxu0 0.0
    %253 = vmatpush1.msra.mxu0 0.0
    %254 = vmatprep.subr.mxu0 0.0
    %255 = vmatpush1.msra.mxu0 0.0
    %256 = vmatprep.subr.mxu0 0.0
    %257 = vmatpush1.msra.mxu0 0.0
    %258 = vmatprep.subr.mxu0 0.0
    %259 = vmatpush1.msra.mxu0 0.0
    %260 = vmatprep.subr.mxu0 0.0
    %261 = vmatpush1.msra.mxu0 0.0
    %262 = vmatprep.subr.mxu0 0.0
    %263 = vmatpush1.msra.mxu0 0.0
    %264 = vmatprep.subr.mxu0 0.0
    %265 = vmatpush1.msra.mxu0 0.0
    %266 = vmatprep.subr.mxu0 0.0
    %267 = vmatpush1.msra.mxu0 0.0
    %268 = vmatprep.subr.mxu0 0.0
    %269 = vmatpush1.msra.mxu0 0.0
    %270 = vmatprep.subr.mxu0 0.0
    %271 = vmatpush1.msra.mxu0 0.0
    %272 = vmatprep.subr.mxu0 0.0
    %273 = vmatpush1.msra.mxu0 0.0
    %274 = vmatprep.subr.mxu0 0.0
    %275 = vmatpush1.msra.mxu0 0.0
    %276 = vmatprep.subr.mxu0 0.0
    %277 = vmatpush1.msra.mxu0 0.0
    %278 = vmatprep.subr.mxu0 0.0
    %279 = vmatpush1.msra.mxu0 0.0
    %280 = vmatprep.subr.mxu0 0.0
    %281 = vmatpush1.msra.mxu0 0.0
    %282 = vmatprep.subr.mxu0 0.0
    %283 = vmatpush1.msra.mxu0 0.0
    %284 = vmatprep.subr.mxu0 0.0
    %285 = vmatpush1.msra.mxu0 0.0
    %286 = vmatprep.subr.mxu0 0.0
    %287 = vmatpush1.msra.mxu0 0.0
    %288 = vmatprep.subr.mxu0 0.0
    %289 = vmatpush1.msra.mxu0 0.0
    %290 = vmatprep.subr.mxu0 0.0
    %291 = vmatpush1.msra.mxu0 0.0
    %292 = vmatprep.mubr.f32.mxu0 0.0
    %293 = vmatmul.mubr.f32.gmra.mrb[0].mxu0 %v205
    %v294 = vpop.f32.mrb[0].mxu0
    %v295 = vadd.f32 0.0, %v294
    %v296 = vpop.f32.mrb[0].mxu0
    %297 = vmatprep.mubr.f32.mxu0 0.0
    %298 = vmatmul.mubr.f32.gmra.mrb[0].mxu0 %v208
    %v299 = vpop.f32.mrb[0].mxu0
    %v300 = vadd.f32 0.0, %v299
    %v301 = vpop.f32.mrb[0].mxu0
    %302 = vmatprep.mubr.f32.mxu0 0.0
    %303 = vmatmul.mubr.f32.gmra.mrb[0].mxu0 %v211
    %v304 = vpop.f32.mrb[0].mxu0
    %v305 = vadd.f32 0.0, %v304
    %v306 = vpop.f32.mrb[0].mxu0
    %307 = vmatprep.mubr.f32.mxu0 0.0
    %308 = vmatmul.mubr.f32.gmra.mrb[0].mxu0 %v214
    %v309 = vpop.f32.mrb[0].mxu0
    %v310 = vadd.f32 0.0, %v309
    %v311 = vpop.f32.mrb[0].mxu0
    %312 = vmatprep.mubr.f32.mxu0 0.0
    %313 = vmatmul.mubr.f32.gmra.mrb[0].mxu0 %v217
    %v314 = vpop.f32.mrb[0].mxu0
    %v315 = vadd.f32 0.0, %v314
    %v316 = vpop.f32.mrb[0].mxu0
    %317 = vmatprep.mubr.f32.mxu0 0.0
    %318 = vmatmul.mubr.f32.gmra.mrb[0].mxu0 %v220
    %v319 = vpop.f32.mrb[0].mxu0
    %v320 = vadd.f32 0.0, %v319
    %v321 = vpop.f32.mrb[0].mxu0
    %322 = vmatprep.mubr.f32.mxu0 0.0
    %323 = vmatmul.mubr.f32.gmra.mrb[0].mxu0 %v223
    %v324 = vpop.f32.mrb[0].mxu0
    %v325 = vadd.f32 0.0, %v324
    %v326 = vpop.f32.mrb[0].mxu0
    %327 = vmatprep.mubr.f32.mxu0 0.0
    %328 = vmatmul.mubr.f32.gmra.mrb[0].mxu0 %v226
    %v329 = vpop.f32.mrb[0].mxu0
    %v330 = vadd.f32 0.0, %v329
    %v331 = vpop.f32.mrb[0].mxu0
    %332 = vdwg.mxu0
    %v333 = vmul.f32 %v295, %v35
    %v334 = vmul.f32 %v300, %v36
    %v335 = vmul.f32 %v305, %v37
    %v336 = vmul.f32 %v310, %v38
    %v337 = vmul.f32 %v315, %v39
    %v338 = vmul.f32 %v320, %v40
    %v339 = vmul.f32 %v325, %v41
    %v340 = vmul.f32 %v330, %v42
    %349 = vrot.lane.b32.xlu0 %v35, 32
    %v350 = vpop.permute.xlu0 %349
    %351 = vrot.lane.b32.xlu0 %v36, 32
    %v352 = vpop.permute.xlu0 %351
    %353 = vrot.lane.b32.xlu0 %v37, 32
    %v354 = vpop.permute.xlu0 %353
    %355 = vrot.lane.b32.xlu0 %v38, 32
    %v356 = vpop.permute.xlu0 %355
    %357 = vrot.lane.b32.xlu0 %v39, 32
    %v358 = vpop.permute.xlu0 %357
    %359 = vrot.lane.b32.xlu0 %v40, 32
    %v360 = vpop.permute.xlu0 %359
    %361 = vrot.lane.b32.xlu0 %v41, 32
    %v362 = vpop.permute.xlu0 %361
    %363 = vrot.lane.b32.xlu0 %v42, 32
    %v364 = vpop.permute.xlu0 %363
    %v373 = vmul.f32 %v295, %v350
    %v374 = vmul.f32 %v300, %v352
    %v375 = vmul.f32 %v305, %v354
    %v376 = vmul.f32 %v310, %v356
    %v377 = vmul.f32 %v315, %v358
    %v378 = vmul.f32 %v320, %v360
    %v379 = vmul.f32 %v325, %v362
    %v380 = vmul.f32 %v330, %v364
    %381 = vrot.lane.b32.xlu0 %v35, 64
    %v382 = vpop.permute.xlu0 %381
    %383 = vrot.lane.b32.xlu0 %v36, 64
    %v384 = vpop.permute.xlu0 %383
    %385 = vrot.lane.b32.xlu0 %v37, 64
    %v386 = vpop.permute.xlu0 %385
    %387 = vrot.lane.b32.xlu0 %v38, 64
    %v388 = vpop.permute.xlu0 %387
    %389 = vrot.lane.b32.xlu0 %v39, 64
    %v390 = vpop.permute.xlu0 %389
    %391 = vrot.lane.b32.xlu0 %v40, 64
    %v392 = vpop.permute.xlu0 %391
    %393 = vrot.lane.b32.xlu0 %v41, 64
    %v394 = vpop.permute.xlu0 %393
    %395 = vrot.lane.b32.xlu0 %v42, 64
    %v396 = vpop.permute.xlu0 %395
    %v405 = vmul.f32 %v295, %v382
    %v406 = vmul.f32 %v300, %v384
    %v407 = vmul.f32 %v305, %v386
    %v408 = vmul.f32 %v310, %v388
    %v409 = vmul.f32 %v315, %v390
    %v410 = vmul.f32 %v320, %v392
    %v411 = vmul.f32 %v325, %v394
    %v412 = vmul.f32 %v330, %v396
    %421 = vrot.lane.b32.xlu0 %v373, 96
    %v422 = vpop.permute.xlu0 %421
    %423 = vrot.lane.b32.xlu0 %v374, 96
    %v424 = vpop.permute.xlu0 %423
    %425 = vrot.lane.b32.xlu0 %v375, 96
    %v426 = vpop.permute.xlu0 %425
    %427 = vrot.lane.b32.xlu0 %v376, 96
    %v428 = vpop.permute.xlu0 %427
    %429 = vrot.lane.b32.xlu0 %v377, 96
    %v430 = vpop.permute.xlu0 %429
    %431 = vrot.lane.b32.xlu0 %v378, 96
    %v432 = vpop.permute.xlu0 %431
    %433 = vrot.lane.b32.xlu0 %v379, 96
    %v434 = vpop.permute.xlu0 %433
    %435 = vrot.lane.b32.xlu0 %v380, 96
    %v436 = vpop.permute.xlu0 %435
    %v438 = vsel %vm50, %v333, 0
    %v441 = vsel %vm50, %v334, 0
    %v444 = vsel %vm50, %v335, 0
    %v447 = vsel %vm50, %v336, 0
    %v450 = vsel %vm50, %v337, 0
    %v453 = vsel %vm50, %v338, 0
    %v456 = vsel %vm50, %v339, 0
    %v459 = vsel %vm50, %v340, 0
    %v461 = vsel %vm50, %v422, 0
    %v463 = vsel %vm50, %v424, 0
    %v465 = vsel %vm50, %v426, 0
    %v467 = vsel %vm50, %v428, 0
    %v469 = vsel %vm50, %v430, 0
    %v471 = vsel %vm50, %v432, 0
    %v473 = vsel %vm50, %v434, 0
    %v475 = vsel %vm50, %v436, 0
    %477 = vmatprep.subr.mxu0 0.0
    %478 = vmatpush1.xpose.msra.mxu0 %v461
    %479 = vmatprep.subr.mxu0 0.0
    %480 = vmatpush1.xpose.msra.mxu0 %v463
    %481 = vmatprep.subr.mxu0 0.0
    %482 = vmatpush1.xpose.msra.mxu0 %v465
    %483 = vmatprep.subr.mxu0 0.0
    %484 = vmatpush1.xpose.msra.mxu0 %v467
    %485 = vmatprep.subr.mxu0 0.0
    %486 = vmatpush1.xpose.msra.mxu0 %v469
    %487 = vmatprep.subr.mxu0 0.0
    %488 = vmatpush1.xpose.msra.mxu0 %v471
    %489 = vmatprep.subr.mxu0 0.0
    %490 = vmatpush1.xpose.msra.mxu0 %v473
    %491 = vmatprep.subr.mxu0 0.0
    %492 = vmatpush1.xpose.msra.mxu0 %v475
    %493 = vmatprep.subr.mxu0 0.0
    %494 = vmatpush1.xpose.msra.mxu0 0.0
    %495 = vmatprep.subr.mxu0 0.0
    %496 = vmatpush1.xpose.msra.mxu0 0.0
    %497 = vmatprep.subr.mxu0 0.0
    %498 = vmatpush1.xpose.msra.mxu0 0.0
    %499 = vmatprep.subr.mxu0 0.0
    %500 = vmatpush1.xpose.msra.mxu0 0.0
    %501 = vmatprep.subr.mxu0 0.0
    %502 = vmatpush1.xpose.msra.mxu0 0.0
    %503 = vmatprep.subr.mxu0 0.0
    %504 = vmatpush1.xpose.msra.mxu0 0.0
    %505 = vmatprep.subr.mxu0 0.0
    %506 = vmatpush1.xpose.msra.mxu0 0.0
    %507 = vmatprep.subr.mxu0 0.0
    %508 = vmatpush1.xpose.msra.mxu0 0.0
    %509 = vmatprep.subr.mxu0 0.0
    %510 = vmatpush1.xpose.msra.mxu0 0.0
    %511 = vmatprep.subr.mxu0 0.0
    %512 = vmatpush1.xpose.msra.mxu0 0.0
    %513 = vmatprep.subr.mxu0 0.0
    %514 = vmatpush1.xpose.msra.mxu0 0.0
    %515 = vmatprep.subr.mxu0 0.0
    %516 = vmatpush1.xpose.msra.mxu0 0.0
    %517 = vmatprep.subr.mxu0 0.0
    %518 = vmatpush1.xpose.msra.mxu0 0.0
    %519 = vmatprep.subr.mxu0 0.0
    %520 = vmatpush1.xpose.msra.mxu0 0.0
    %521 = vmatprep.subr.mxu0 0.0
    %522 = vmatpush1.xpose.msra.mxu0 0.0
    %523 = vmatprep.subr.mxu0 0.0
    %524 = vmatpush1.xpose.msra.mxu0 0.0
    %525 = vmatprep.subr.mxu0 0.0
    %526 = vmatpush1.xpose.msra.mxu0 0.0
    %527 = vmatprep.subr.mxu0 0.0
    %528 = vmatpush1.xpose.msra.mxu0 0.0
    %529 = vmatprep.subr.mxu0 0.0
    %530 = vmatpush1.xpose.msra.mxu0 0.0
    %531 = vmatprep.subr.mxu0 0.0
    %532 = vmatpush1.xpose.msra.mxu0 0.0
    %533 = vmatprep.subr.mxu0 0.0
    %534 = vmatpush1.xpose.msra.mxu0 0.0
    %535 = vmatprep.subr.mxu0 0.0
    %536 = vmatpush1.xpose.msra.mxu0 0.0
    %537 = vmatprep.subr.mxu0 0.0
    %538 = vmatpush1.xpose.msra.mxu0 0.0
    %539 = vmatprep.subr.mxu0 0.0
    %540 = vmatpush1.xpose.msra.mxu0 0.0
    %541 = vmatprep.mubr.f32.mxu0 0.0
    %542 = vmatmul.mubr.f32.gmra.mrb[0].mxu0 %v438
    %v543 = vpop.f32.mrb[0].mxu0
    %v544 = vadd.f32 0.0, %v543
    %v545 = vpop.f32.mrb[0].mxu0
    %546 = vmatprep.mubr.f32.mxu0 0.0
    %547 = vmatmul.mubr.f32.gmra.mrb[0].mxu0 %v441
    %v548 = vpop.f32.mrb[0].mxu0
    %v549 = vadd.f32 0.0, %v548
    %v550 = vpop.f32.mrb[0].mxu0
    %551 = vmatprep.mubr.f32.mxu0 0.0
    %552 = vmatmul.mubr.f32.gmra.mrb[0].mxu0 %v444
    %v553 = vpop.f32.mrb[0].mxu0
    %v554 = vadd.f32 0.0, %v553
    %v555 = vpop.f32.mrb[0].mxu0
    %556 = vmatprep.mubr.f32.mxu0 0.0
    %557 = vmatmul.mubr.f32.gmra.mrb[0].mxu0 %v447
    %v558 = vpop.f32.mrb[0].mxu0
    %v559 = vadd.f32 0.0, %v558
    %v560 = vpop.f32.mrb[0].mxu0
    %561 = vmatprep.mubr.f32.mxu0 0.0
    %562 = vmatmul.mubr.f32.gmra.mrb[0].mxu0 %v450
    %v563 = vpop.f32.mrb[0].mxu0
    %v564 = vadd.f32 0.0, %v563
    %v565 = vpop.f32.mrb[0].mxu0
    %566 = vmatprep.mubr.f32.mxu0 0.0
    %567 = vmatmul.mubr.f32.gmra.mrb[0].mxu0 %v453
    %v568 = vpop.f32.mrb[0].mxu0
    %v569 = vadd.f32 0.0, %v568
    %v570 = vpop.f32.mrb[0].mxu0
    %571 = vmatprep.mubr.f32.mxu0 0.0
    %572 = vmatmul.mubr.f32.gmra.mrb[0].mxu0 %v456
    %v573 = vpop.f32.mrb[0].mxu0
    %v574 = vadd.f32 0.0, %v573
    %v575 = vpop.f32.mrb[0].mxu0
    %576 = vmatprep.mubr.f32.mxu0 0.0
    %577 = vmatmul.mubr.f32.gmra.mrb[0].mxu0 %v459
    %v578 = vpop.f32.mrb[0].mxu0
    %v579 = vadd.f32 0.0, %v578
    %v580 = vpop.f32.mrb[0].mxu0
    %581 = vdwg.mxu0
    %v582 = vmul.f32 %v544, 0.35355338
    %v583 = vmul.f32 %v549, 0.35355338
    %v584 = vmul.f32 %v554, 0.35355338
    %v585 = vmul.f32 %v559, 0.35355338
    %v586 = vmul.f32 %v564, 0.35355338
    %v587 = vmul.f32 %v569, 0.35355338
    %v588 = vmul.f32 %v574, 0.35355338
    %v589 = vmul.f32 %v579, 0.35355338
    %v590 = vadd.f32 %v582, %v14
    %v591 = vadd.f32 %v583, %v15
    %v592 = vadd.f32 %v584, %v16
    %v593 = vadd.f32 %v585, %v17
    %v594 = vadd.f32 %v586, %v18
    %v595 = vadd.f32 %v587, %v19
    %v596 = vadd.f32 %v588, %v20
    %v597 = vadd.f32 %v589, %v21
    %vm598 = vcmask 523264
    %v599 = vsel %vm598, %v590, -inf
    %600 = vmax.xlane.f32.xlu0 %v599
    %v601 = vpop.xlane.xlu0 %600
    %v602 = vsel %vm598, %v591, -inf
    %603 = vmax.xlane.f32.xlu0 %v602
    %v604 = vpop.xlane.xlu0 %603
    %v605 = vsel %vm598, %v592, -inf
    %606 = vmax.xlane.f32.xlu0 %v605
    %v607 = vpop.xlane.xlu0 %606
    %v608 = vsel %vm598, %v593, -inf
    %609 = vmax.xlane.f32.xlu0 %v608
    %v610 = vpop.xlane.xlu0 %609
    %v611 = vsel %vm598, %v594, -inf
    %612 = vmax.xlane.f32.xlu0 %v611
    %v613 = vpop.xlane.xlu0 %612
    %v614 = vsel %vm598, %v595, -inf
    %615 = vmax.xlane.f32.xlu0 %v614
    %v616 = vpop.xlane.xlu0 %615
    %v617 = vsel %vm598, %v596, -inf
    %618 = vmax.xlane.f32.xlu0 %v617
    %v619 = vpop.xlane.xlu0 %618
    %v620 = vsel %vm598, %v597, -inf
    %621 = vmax.xlane.f32.xlu0 %v620
    %v622 = vpop.xlane.xlu0 %621
    %v623 = vsub.f32 %v590, %v601
    %v624 = vsub.f32 %v591, %v604
    %v625 = vsub.f32 %v592, %v607
    %v626 = vsub.f32 %v593, %v610
    %v627 = vsub.f32 %v594, %v613
    %v628 = vsub.f32 %v595, %v616
    %v629 = vsub.f32 %v596, %v619
    %v630 = vsub.f32 %v597, %v622
    %v631 = vmul.f32 %v623, 1.442695
    %v632 = vpow.pop %v631
    %v633 = vmul.f32 %v624, 1.442695
    %v634 = vpow.pop %v633
    %v635 = vmul.f32 %v625, 1.442695
    %v636 = vpow.pop %v635
    %v637 = vmul.f32 %v626, 1.442695
    %v638 = vpow.pop %v637
    %v639 = vmul.f32 %v627, 1.442695
    %v640 = vpow.pop %v639
    %v641 = vmul.f32 %v628, 1.442695
    %v642 = vpow.pop %v641
    %v643 = vmul.f32 %v629, 1.442695
    %v644 = vpow.pop %v643
    %v645 = vmul.f32 %v630, 1.442695
    %v646 = vpow.pop %v645
    %v647 = vsel %vm598, %v632, 0.0
    %648 = vadd.xlane.f32.xlu0 %v647
    %v649 = vpop.xlane.xlu0 %648
    %v650 = vsel %vm598, %v634, 0.0
    %651 = vadd.xlane.f32.xlu0 %v650
    %v652 = vpop.xlane.xlu0 %651
    %v653 = vsel %vm598, %v636, 0.0
    %654 = vadd.xlane.f32.xlu0 %v653
    %v655 = vpop.xlane.xlu0 %654
    %v656 = vsel %vm598, %v638, 0.0
    %657 = vadd.xlane.f32.xlu0 %v656
    %v658 = vpop.xlane.xlu0 %657
    %v659 = vsel %vm598, %v640, 0.0
    %660 = vadd.xlane.f32.xlu0 %v659
    %v661 = vpop.xlane.xlu0 %660
    %v662 = vsel %vm598, %v642, 0.0
    %663 = vadd.xlane.f32.xlu0 %v662
    %v664 = vpop.xlane.xlu0 %663
    %v665 = vsel %vm598, %v644, 0.0
    %666 = vadd.xlane.f32.xlu0 %v665
    %v667 = vpop.xlane.xlu0 %666
    %v668 = vsel %vm598, %v646, 0.0
    %669 = vadd.xlane.f32.xlu0 %v668
    %v670 = vpop.xlane.xlu0 %669
    %v671 = vrcp.pop %v649
    %v672 = vrcp.pop %v652
    %v673 = vrcp.pop %v655
    %v674 = vrcp.pop %v658
    %v675 = vrcp.pop %v661
    %v676 = vrcp.pop %v664
    %v677 = vrcp.pop %v667
    %v678 = vrcp.pop %v670
    %v679 = vmul.f32 %v632, %v671
    %v680 = vmul.f32 %v634, %v672
    %v681 = vmul.f32 %v636, %v673
    %v682 = vmul.f32 %v638, %v674
    %v683 = vmul.f32 %v640, %v675
    %v684 = vmul.f32 %v642, %v676
    %v685 = vmul.f32 %v644, %v677
    %v686 = vmul.f32 %v646, %v678
    %687 = vst.msk [vmem:[%s3] sm:$0xff] %vm598, %v679
    %688 = vst.msk [vmem:[%s3 + $0x8] sm:$0xff] %vm598, %v680
    %689 = vst.msk [vmem:[%s3 + $0x10] sm:$0xff] %vm598, %v681
    %690 = vst.msk [vmem:[%s3 + $0x18] sm:$0xff] %vm598, %v682
    %691 = vst.msk [vmem:[%s3 + $0x20] sm:$0xff] %vm598, %v683
    %692 = vst.msk [vmem:[%s3 + $0x28] sm:$0xff] %vm598, %v684
    %693 = vst.msk [vmem:[%s3 + $0x30] sm:$0xff] %vm598, %v685
    %694 = vst.msk [vmem:[%s3 + $0x38] sm:$0xff] %vm598, %v686
    %703 = vrot.lane.b32.xlu0 %v405, 64
    %v704 = vpop.permute.xlu0 %703
    %705 = vrot.lane.b32.xlu0 %v406, 64
    %v706 = vpop.permute.xlu0 %705
    %707 = vrot.lane.b32.xlu0 %v407, 64
    %v708 = vpop.permute.xlu0 %707
    %709 = vrot.lane.b32.xlu0 %v408, 64
    %v710 = vpop.permute.xlu0 %709
    %711 = vrot.lane.b32.xlu0 %v409, 64
    %v712 = vpop.permute.xlu0 %711
    %713 = vrot.lane.b32.xlu0 %v410, 64
    %v714 = vpop.permute.xlu0 %713
    %715 = vrot.lane.b32.xlu0 %v411, 64
    %v716 = vpop.permute.xlu0 %715
    %717 = vrot.lane.b32.xlu0 %v412, 64
    %v718 = vpop.permute.xlu0 %717
    %v728 = vsel %vm598, %v679, 0
    %v731 = vsel %vm598, %v680, 0
    %v734 = vsel %vm598, %v681, 0
    %v737 = vsel %vm598, %v682, 0
    %v740 = vsel %vm598, %v683, 0
    %v743 = vsel %vm598, %v684, 0
    %v746 = vsel %vm598, %v685, 0
    %v749 = vsel %vm598, %v686, 0
    %751 = vmatprep.subr.mxu0 0.0
    %752 = vmatpush1.msra.mxu0 %v704
    %753 = vmatprep.subr.mxu0 0.0
    %754 = vmatpush1.msra.mxu0 %v706
    %755 = vmatprep.subr.mxu0 0.0
    %756 = vmatpush1.msra.mxu0 %v708
    %757 = vmatprep.subr.mxu0 0.0
    %758 = vmatpush1.msra.mxu0 %v710
    %759 = vmatprep.subr.mxu0 0.0
    %760 = vmatpush1.msra.mxu0 %v712
    %761 = vmatprep.subr.mxu0 0.0
    %762 = vmatpush1.msra.mxu0 %v714
    %763 = vmatprep.subr.mxu0 0.0
    %764 = vmatpush1.msra.mxu0 %v716
    %765 = vmatprep.subr.mxu0 0.0
    %766 = vmatpush1.msra.mxu0 %v718
    %767 = vmatprep.subr.mxu0 0.0
    %768 = vmatpush1.msra.mxu0 0.0
    %769 = vmatprep.subr.mxu0 0.0
    %770 = vmatpush1.msra.mxu0 0.0
    %771 = vmatprep.subr.mxu0 0.0
    %772 = vmatpush1.msra.mxu0 0.0
    %773 = vmatprep.subr.mxu0 0.0
    %774 = vmatpush1.msra.mxu0 0.0
    %775 = vmatprep.subr.mxu0 0.0
    %776 = vmatpush1.msra.mxu0 0.0
    %777 = vmatprep.subr.mxu0 0.0
    %778 = vmatpush1.msra.mxu0 0.0
    %779 = vmatprep.subr.mxu0 0.0
    %780 = vmatpush1.msra.mxu0 0.0
    %781 = vmatprep.subr.mxu0 0.0
    %782 = vmatpush1.msra.mxu0 0.0
    %783 = vmatprep.subr.mxu0 0.0
    %784 = vmatpush1.msra.mxu0 0.0
    %785 = vmatprep.subr.mxu0 0.0
    %786 = vmatpush1.msra.mxu0 0.0
    %787 = vmatprep.subr.mxu0 0.0
    %788 = vmatpush1.msra.mxu0 0.0
    %789 = vmatprep.subr.mxu0 0.0
    %790 = vmatpush1.msra.mxu0 0.0
    %791 = vmatprep.subr.mxu0 0.0
    %792 = vmatpush1.msra.mxu0 0.0
    %793 = vmatprep.subr.mxu0 0.0
    %794 = vmatpush1.msra.mxu0 0.0
    %795 = vmatprep.subr.mxu0 0.0
    %796 = vmatpush1.msra.mxu0 0.0
    %797 = vmatprep.subr.mxu0 0.0
    %798 = vmatpush1.msra.mxu0 0.0
    %799 = vmatprep.subr.mxu0 0.0
    %800 = vmatpush1.msra.mxu0 0.0
    %801 = vmatprep.subr.mxu0 0.0
    %802 = vmatpush1.msra.mxu0 0.0
    %803 = vmatprep.subr.mxu0 0.0
    %804 = vmatpush1.msra.mxu0 0.0
    %805 = vmatprep.subr.mxu0 0.0
    %806 = vmatpush1.msra.mxu0 0.0
    %807 = vmatprep.subr.mxu0 0.0
    %808 = vmatpush1.msra.mxu0 0.0
    %809 = vmatprep.subr.mxu0 0.0
    %810 = vmatpush1.msra.mxu0 0.0
    %811 = vmatprep.subr.mxu0 0.0
    %812 = vmatpush1.msra.mxu0 0.0
    %813 = vmatprep.subr.mxu0 0.0
    %814 = vmatpush1.msra.mxu0 0.0
    %815 = vmatprep.mubr.f32.mxu0 0.0
    %816 = vmatmul.mubr.f32.gmra.mrb[0].mxu0 %v728
    %v817 = vpop.f32.mrb[0].mxu0
    %v818 = vadd.f32 0.0, %v817
    %v819 = vpop.f32.mrb[0].mxu0
    %820 = vmatprep.mubr.f32.mxu0 0.0
    %821 = vmatmul.mubr.f32.gmra.mrb[0].mxu0 %v731
    %v822 = vpop.f32.mrb[0].mxu0
    %v823 = vadd.f32 0.0, %v822
    %v824 = vpop.f32.mrb[0].mxu0
    %825 = vmatprep.mubr.f32.mxu0 0.0
    %826 = vmatmul.mubr.f32.gmra.mrb[0].mxu0 %v734
    %v827 = vpop.f32.mrb[0].mxu0
    %v828 = vadd.f32 0.0, %v827
    %v829 = vpop.f32.mrb[0].mxu0
    %830 = vmatprep.mubr.f32.mxu0 0.0
    %831 = vmatmul.mubr.f32.gmra.mrb[0].mxu0 %v737
    %v832 = vpop.f32.mrb[0].mxu0
    %v833 = vadd.f32 0.0, %v832
    %v834 = vpop.f32.mrb[0].mxu0
    %835 = vmatprep.mubr.f32.mxu0 0.0
    %836 = vmatmul.mubr.f32.gmra.mrb[0].mxu0 %v740
    %v837 = vpop.f32.mrb[0].mxu0
    %v838 = vadd.f32 0.0, %v837
    %v839 = vpop.f32.mrb[0].mxu0
    %840 = vmatprep.mubr.f32.mxu0 0.0
    %841 = vmatmul.mubr.f32.gmra.mrb[0].mxu0 %v743
    %v842 = vpop.f32.mrb[0].mxu0
    %v843 = vadd.f32 0.0, %v842
    %v844 = vpop.f32.mrb[0].mxu0
    %845 = vmatprep.mubr.f32.mxu0 0.0
    %846 = vmatmul.mubr.f32.gmra.mrb[0].mxu0 %v746
    %v847 = vpop.f32.mrb[0].mxu0
    %v848 = vadd.f32 0.0, %v847
    %v849 = vpop.f32.mrb[0].mxu0
    %850 = vmatprep.mubr.f32.mxu0 0.0
    %851 = vmatmul.mubr.f32.gmra.mrb[0].mxu0 %v749
    %v852 = vpop.f32.mrb[0].mxu0
    %v853 = vadd.f32 0.0, %v852
    %v854 = vpop.f32.mrb[0].mxu0
    %855 = vdwg.mxu0
    %v857 = vsel %vm598, %v33, 0
    %v860 = vsel %vm598, %v34, 0
    %862 = vmatprep.subr.mxu0 0.0
    %863 = vmatpush1.msra.mxu0 %v818
    %864 = vmatprep.subr.mxu0 0.0
    %865 = vmatpush1.msra.mxu0 %v823
    %866 = vmatprep.subr.mxu0 0.0
    %867 = vmatpush1.msra.mxu0 %v828
    %868 = vmatprep.subr.mxu0 0.0
    %869 = vmatpush1.msra.mxu0 %v833
    %870 = vmatprep.subr.mxu0 0.0
    %871 = vmatpush1.msra.mxu0 %v838
    %872 = vmatprep.subr.mxu0 0.0
    %873 = vmatpush1.msra.mxu0 %v843
    %874 = vmatprep.subr.mxu0 0.0
    %875 = vmatpush1.msra.mxu0 %v848
    %876 = vmatprep.subr.mxu0 0.0
    %877 = vmatpush1.msra.mxu0 %v853
    %878 = vmatprep.subr.mxu0 0.0
    %879 = vmatpush1.msra.mxu0 0.0
    %880 = vmatprep.subr.mxu0 0.0
    %881 = vmatpush1.msra.mxu0 0.0
    %882 = vmatprep.subr.mxu0 0.0
    %883 = vmatpush1.msra.mxu0 0.0
    %884 = vmatprep.subr.mxu0 0.0
    %885 = vmatpush1.msra.mxu0 0.0
    %886 = vmatprep.subr.mxu0 0.0
    %887 = vmatpush1.msra.mxu0 0.0
    %888 = vmatprep.subr.mxu0 0.0
    %889 = vmatpush1.msra.mxu0 0.0
    %890 = vmatprep.subr.mxu0 0.0
    %891 = vmatpush1.msra.mxu0 0.0
    %892 = vmatprep.subr.mxu0 0.0
    %893 = vmatpush1.msra.mxu0 0.0
    %894 = vmatprep.subr.mxu0 0.0
    %895 = vmatpush1.msra.mxu0 0.0
    %896 = vmatprep.subr.mxu0 0.0
    %897 = vmatpush1.msra.mxu0 0.0
    %898 = vmatprep.subr.mxu0 0.0
    %899 = vmatpush1.msra.mxu0 0.0
    %900 = vmatprep.subr.mxu0 0.0
    %901 = vmatpush1.msra.mxu0 0.0
    %902 = vmatprep.subr.mxu0 0.0
    %903 = vmatpush1.msra.mxu0 0.0
    %904 = vmatprep.subr.mxu0 0.0
    %905 = vmatpush1.msra.mxu0 0.0
    %906 = vmatprep.subr.mxu0 0.0
    %907 = vmatpush1.msra.mxu0 0.0
    %908 = vmatprep.subr.mxu0 0.0
    %909 = vmatpush1.msra.mxu0 0.0
    %910 = vmatprep.subr.mxu0 0.0
    %911 = vmatpush1.msra.mxu0 0.0
    %912 = vmatprep.subr.mxu0 0.0
    %913 = vmatpush1.msra.mxu0 0.0
    %914 = vmatprep.subr.mxu0 0.0
    %915 = vmatpush1.msra.mxu0 0.0
    %916 = vmatprep.subr.mxu0 0.0
    %917 = vmatpush1.msra.mxu0 0.0
    %918 = vmatprep.subr.mxu0 0.0
    %919 = vmatpush1.msra.mxu0 0.0
    %920 = vmatprep.subr.mxu0 0.0
    %921 = vmatpush1.msra.mxu0 0.0
    %922 = vmatprep.subr.mxu0 0.0
    %923 = vmatpush1.msra.mxu0 0.0
    %924 = vmatprep.subr.mxu0 0.0
    %925 = vmatpush1.msra.mxu0 0.0
    %926 = vmatprep.mubr.f32.mxu0 0.0
    %927 = vmatmul.mubr.f32.gmra.mrb[0].mxu0 %v857
    %v928 = vpop.f32.mrb[0].mxu0
    %v929 = vadd.f32 0.0, %v928
    %v930 = vpop.f32.mrb[0].mxu0
    %931 = vmatprep.mubr.f32.mxu0 0.0
    %932 = vmatmul.mubr.f32.gmra.mrb[0].mxu0 %v860
    %v933 = vpop.f32.mrb[0].mxu0
    %v934 = vadd.f32 0.0, %v933
    %v935 = vpop.f32.mrb[0].mxu0
    %936 = vdwg.mxu0
    %v937 = vlaneseq
    %v938 = vshrl.u32 %v937, 7
    %v939 = vsub.s32 0, %v938
    %v940 = vrot.slane %v111, %v939
    %v942 = vsel %vm50, %v929, 0
    %v945 = vsel %vm50, %v934, 0
    %947 = vmatprep.subr.mxu0 0.0
    %948 = vmatpush1.msra.mxu0 %v94
    %949 = vmatprep.subr.mxu0 0.0
    %950 = vmatpush1.msra.mxu0 %v95
    %951 = vmatprep.subr.mxu0 0.0
    %952 = vmatpush1.msra.mxu0 %v96
    %953 = vmatprep.subr.mxu0 0.0
    %954 = vmatpush1.msra.mxu0 %v97
    %955 = vmatprep.subr.mxu0 0.0
    %956 = vmatpush1.msra.mxu0 0.0
    %957 = vmatprep.subr.mxu0 0.0
    %958 = vmatpush1.msra.mxu0 0.0
    %959 = vmatprep.subr.mxu0 0.0
    %960 = vmatpush1.msra.mxu0 0.0
    %961 = vmatprep.subr.mxu0 0.0
    %962 = vmatpush1.msra.mxu0 0.0
    %963 = vmatprep.subr.mxu0 0.0
    %964 = vmatpush1.msra.mxu0 0.0
    %965 = vmatprep.subr.mxu0 0.0
    %966 = vmatpush1.msra.mxu0 0.0
    %967 = vmatprep.subr.mxu0 0.0
    %968 = vmatpush1.msra.mxu0 0.0
    %969 = vmatprep.subr.mxu0 0.0
    %970 = vmatpush1.msra.mxu0 0.0
    %971 = vmatprep.subr.mxu0 0.0
    %972 = vmatpush1.msra.mxu0 0.0
    %973 = vmatprep.subr.mxu0 0.0
    %974 = vmatpush1.msra.mxu0 0.0
    %975 = vmatprep.subr.mxu0 0.0
    %976 = vmatpush1.msra.mxu0 0.0
    %977 = vmatprep.subr.mxu0 0.0
    %978 = vmatpush1.msra.mxu0 0.0
    %979 = vmatprep.subr.mxu0 0.0
    %980 = vmatpush1.msra.mxu0 0.0
    %981 = vmatprep.subr.mxu0 0.0
    %982 = vmatpush1.msra.mxu0 0.0
    %983 = vmatprep.subr.mxu0 0.0
    %984 = vmatpush1.msra.mxu0 0.0
    %985 = vmatprep.subr.mxu0 0.0
    %986 = vmatpush1.msra.mxu0 0.0
    %987 = vmatprep.subr.mxu0 0.0
    %988 = vmatpush1.msra.mxu0 0.0
    %989 = vmatprep.subr.mxu0 0.0
    %990 = vmatpush1.msra.mxu0 0.0
    %991 = vmatprep.subr.mxu0 0.0
    %992 = vmatpush1.msra.mxu0 0.0
    %993 = vmatprep.subr.mxu0 0.0
    %994 = vmatpush1.msra.mxu0 0.0
    %995 = vmatprep.subr.mxu0 0.0
    %996 = vmatpush1.msra.mxu0 0.0
    %997 = vmatprep.subr.mxu0 0.0
    %998 = vmatpush1.msra.mxu0 0.0
    %999 = vmatprep.subr.mxu0 0.0
    %1000 = vmatpush1.msra.mxu0 0.0
    %1001 = vmatprep.subr.mxu0 0.0
    %1002 = vmatpush1.msra.mxu0 0.0
    %1003 = vmatprep.subr.mxu0 0.0
    %1004 = vmatpush1.msra.mxu0 0.0
    %1005 = vmatprep.subr.mxu0 0.0
    %1006 = vmatpush1.msra.mxu0 0.0
    %1007 = vmatprep.subr.mxu0 0.0
    %1008 = vmatpush1.msra.mxu0 0.0
    %1009 = vmatprep.subr.mxu0 0.0
    %1010 = vmatpush1.msra.mxu0 0.0
    %1011 = vmatprep.mubr.f32.mxu0 0.0
    %1012 = vmatmul.mubr.f32.gmra.mrb[0].mxu0 %v942
    %v1013 = vpop.f32.mrb[0].mxu0
    %v1014 = vadd.f32 %v940, %v1013
    %v1015 = vpop.f32.mrb[0].mxu0
    %1016 = vmatprep.mubr.f32.mxu0 0.0
    %1017 = vmatmul.mubr.f32.gmra.mrb[0].mxu0 %v945
    %v1018 = vpop.f32.mrb[0].mxu0
    %v1019 = vadd.f32 %v940, %v1018
    %v1020 = vpop.f32.mrb[0].mxu0
    %1021 = vdwg.mxu0
    %v1022 = vadd.f32 %v88, %v1014
    %v1023 = vadd.f32 %v89, %v1019
    %v1024 = vsel %vm50, %v1022, 0.0
    %1025 = vadd.xlane.f32.xlu0 %v1024
    %v1026 = vpop.xlane.xlu0 %1025
    %v1027 = vsel %vm50, %v1023, 0.0
    %1028 = vadd.xlane.f32.xlu0 %v1027
    %v1029 = vpop.xlane.xlu0 %1028
    %v1030 = vmul.f32 %v1026, %v57
    %v1031 = vmul.f32 %v1029, %v57
    %v1032 = vsub.f32 %v1022, %v1030
    %v1033 = vsub.f32 %v1023, %v1031
    %v1034 = vmul.f32 %v1032, %v1032
    %v1035 = vmul.f32 %v1033, %v1033
    %v1036 = vsel %vm50, %v1034, 0.0
    %1037 = vadd.xlane.f32.xlu0 %v1036
    %v1038 = vpop.xlane.xlu0 %1037
    %v1039 = vsel %vm50, %v1035, 0.0
    %1040 = vadd.xlane.f32.xlu0 %v1039
    %v1041 = vpop.xlane.xlu0 %1040
    %v1042 = vmul.f32 %v1038, %v57
    %v1043 = vmul.f32 %v1041, %v57
    %v1044 = vadd.f32 %v1042, 1e-05
    %v1045 = vadd.f32 %v1043, 1e-05
    %v1046 = vrsqrt.pop %v1044
    %v1047 = vrsqrt.pop %v1045
    %v1048 = vmul.f32 %v1032, %v1046
    %v1049 = vmul.f32 %v1033, %v1047
    %v1050 = vlaneseq
    %v1051 = vshrl.u32 %v1050, 7
    %v1052 = vsub.s32 0, %v1051
    %v1053 = vrot.slane %v112, %v1052
    %v1054 = vmul.f32 %v1048, %v1053
    %v1055 = vmul.f32 %v1049, %v1053
    %v1056 = vlaneseq
    %v1057 = vshrl.u32 %v1056, 7
    %v1058 = vsub.s32 0, %v1057
    %v1059 = vrot.slane %v113, %v1058
    %v1060 = vadd.f32 %v1054, %v1059
    %v1061 = vadd.f32 %v1055, %v1059
    %v1062 = vlaneseq
    %v1063 = vshrl.u32 %v1062, 7
    %v1064 = vsub.s32 0, %v1063
    %v1065 = vrot.slane %v114, %v1064
    %v1067 = vsel %vm50, %v1060, 0
    %v1070 = vsel %vm50, %v1061, 0
    %1072 = vmatprep.subr.mxu0 0.0
    %1073 = vmatpush1.msra.mxu0 %v98
    %1074 = vmatprep.subr.mxu0 0.0
    %1075 = vmatpush1.msra.mxu0 %v99
    %1076 = vmatprep.subr.mxu0 0.0
    %1077 = vmatpush1.msra.mxu0 %v100
    %1078 = vmatprep.subr.mxu0 0.0
    %1079 = vmatpush1.msra.mxu0 %v101
    %1080 = vmatprep.subr.mxu0 0.0
    %1081 = vmatpush1.msra.mxu0 0.0
    %1082 = vmatprep.subr.mxu0 0.0
    %1083 = vmatpush1.msra.mxu0 0.0
    %1084 = vmatprep.subr.mxu0 0.0
    %1085 = vmatpush1.msra.mxu0 0.0
    %1086 = vmatprep.subr.mxu0 0.0
    %1087 = vmatpush1.msra.mxu0 0.0
    %1088 = vmatprep.subr.mxu0 0.0
    %1089 = vmatpush1.msra.mxu0 0.0
    %1090 = vmatprep.subr.mxu0 0.0
    %1091 = vmatpush1.msra.mxu0 0.0
    %1092 = vmatprep.subr.mxu0 0.0
    %1093 = vmatpush1.msra.mxu0 0.0
    %1094 = vmatprep.subr.mxu0 0.0
    %1095 = vmatpush1.msra.mxu0 0.0
    %1096 = vmatprep.subr.mxu0 0.0
    %1097 = vmatpush1.msra.mxu0 0.0
    %1098 = vmatprep.subr.mxu0 0.0
    %1099 = vmatpush1.msra.mxu0 0.0
    %1100 = vmatprep.subr.mxu0 0.0
    %1101 = vmatpush1.msra.mxu0 0.0
    %1102 = vmatprep.subr.mxu0 0.0
    %1103 = vmatpush1.msra.mxu0 0.0
    %1104 = vmatprep.subr.mxu0 0.0
    %1105 = vmatpush1.msra.mxu0 0.0
    %1106 = vmatprep.subr.mxu0 0.0
    %1107 = vmatpush1.msra.mxu0 0.0
    %1108 = vmatprep.subr.mxu0 0.0
    %1109 = vmatpush1.msra.mxu0 0.0
    %1110 = vmatprep.subr.mxu0 0.0
    %1111 = vmatpush1.msra.mxu0 0.0
    %1112 = vmatprep.subr.mxu0 0.0
    %1113 = vmatpush1.msra.mxu0 0.0
    %1114 = vmatprep.subr.mxu0 0.0
    %1115 = vmatpush1.msra.mxu0 0.0
    %1116 = vmatprep.subr.mxu0 0.0
    %1117 = vmatpush1.msra.mxu0 0.0
    %1118 = vmatprep.subr.mxu0 0.0
    %1119 = vmatpush1.msra.mxu0 0.0
    %1120 = vmatprep.subr.mxu0 0.0
    %1121 = vmatpush1.msra.mxu0 0.0
    %1122 = vmatprep.subr.mxu0 0.0
    %1123 = vmatpush1.msra.mxu0 0.0
    %1124 = vmatprep.subr.mxu0 0.0
    %1125 = vmatpush1.msra.mxu0 0.0
    %1126 = vmatprep.subr.mxu0 0.0
    %1127 = vmatpush1.msra.mxu0 0.0
    %1128 = vmatprep.subr.mxu0 0.0
    %1129 = vmatpush1.msra.mxu0 0.0
    %1130 = vmatprep.subr.mxu0 0.0
    %1131 = vmatpush1.msra.mxu0 0.0
    %1132 = vmatprep.subr.mxu0 0.0
    %1133 = vmatpush1.msra.mxu0 0.0
    %1134 = vmatprep.subr.mxu0 0.0
    %1135 = vmatpush1.msra.mxu0 0.0
    %1136 = vmatprep.mubr.f32.mxu0 0.0
    %1137 = vmatmul.mubr.f32.gmra.mrb[0].mxu0 %v1067
    %v1138 = vpop.f32.mrb[0].mxu0
    %v1139 = vadd.f32 %v1065, %v1138
    %v1140 = vpop.f32.mrb[0].mxu0
    %1141 = vmatprep.mubr.f32.mxu0 0.0
    %1142 = vmatmul.mubr.f32.gmra.mrb[0].mxu0 %v1070
    %v1143 = vpop.f32.mrb[0].mxu0
    %v1144 = vadd.f32 %v1065, %v1143
    %v1145 = vpop.f32.mrb[0].mxu0
    %1146 = vdwg.mxu0
    %v1147 = vmax.f32 %v1139, 0.0
    %v1148 = vmax.f32 %v1144, 0.0
    %v1149 = vlaneseq
    %v1150 = vshrl.u32 %v1149, 7
    %v1151 = vsub.s32 0, %v1150
    %v1152 = vrot.slane %v115, %v1151
    %v1154 = vsel %vm598, %v1147, 0
    %v1157 = vsel %vm598, %v1148, 0
    %1159 = vmatprep.subr.mxu0 0.0
    %1160 = vmatpush1.msra.mxu0 %v102
    %1161 = vmatprep.subr.mxu0 0.0
    %1162 = vmatpush1.msra.mxu0 %v103
    %1163 = vmatprep.subr.mxu0 0.0
    %1164 = vmatpush1.msra.mxu0 %v104
    %1165 = vmatprep.subr.mxu0 0.0
    %1166 = vmatpush1.msra.mxu0 %v105
    %1167 = vmatprep.subr.mxu0 0.0
    %1168 = vmatpush1.msra.mxu0 %v106
    %1169 = vmatprep.subr.mxu0 0.0
    %1170 = vmatpush1.msra.mxu0 %v107
    %1171 = vmatprep.subr.mxu0 0.0
    %1172 = vmatpush1.msra.mxu0 %v108
    %1173 = vmatprep.subr.mxu0 0.0
    %1174 = vmatpush1.msra.mxu0 %v109
    %1175 = vmatprep.subr.mxu0 0.0
    %1176 = vmatpush1.msra.mxu0 0.0
    %1177 = vmatprep.subr.mxu0 0.0
    %1178 = vmatpush1.msra.mxu0 0.0
    %1179 = vmatprep.subr.mxu0 0.0
    %1180 = vmatpush1.msra.mxu0 0.0
    %1181 = vmatprep.subr.mxu0 0.0
    %1182 = vmatpush1.msra.mxu0 0.0
    %1183 = vmatprep.subr.mxu0 0.0
    %1184 = vmatpush1.msra.mxu0 0.0
    %1185 = vmatprep.subr.mxu0 0.0
    %1186 = vmatpush1.msra.mxu0 0.0
    %1187 = vmatprep.subr.mxu0 0.0
    %1188 = vmatpush1.msra.mxu0 0.0
    %1189 = vmatprep.subr.mxu0 0.0
    %1190 = vmatpush1.msra.mxu0 0.0
    %1191 = vmatprep.subr.mxu0 0.0
    %1192 = vmatpush1.msra.mxu0 0.0
    %1193 = vmatprep.subr.mxu0 0.0
    %1194 = vmatpush1.msra.mxu0 0.0
    %1195 = vmatprep.subr.mxu0 0.0
    %1196 = vmatpush1.msra.mxu0 0.0
    %1197 = vmatprep.subr.mxu0 0.0
    %1198 = vmatpush1.msra.mxu0 0.0
    %1199 = vmatprep.subr.mxu0 0.0
    %1200 = vmatpush1.msra.mxu0 0.0
    %1201 = vmatprep.subr.mxu0 0.0
    %1202 = vmatpush1.msra.mxu0 0.0
    %1203 = vmatprep.subr.mxu0 0.0
    %1204 = vmatpush1.msra.mxu0 0.0
    %1205 = vmatprep.subr.mxu0 0.0
    %1206 = vmatpush1.msra.mxu0 0.0
    %1207 = vmatprep.subr.mxu0 0.0
    %1208 = vmatpush1.msra.mxu0 0.0
    %1209 = vmatprep.subr.mxu0 0.0
    %1210 = vmatpush1.msra.mxu0 0.0
    %1211 = vmatprep.subr.mxu0 0.0
    %1212 = vmatpush1.msra.mxu0 0.0
    %1213 = vmatprep.subr.mxu0 0.0
    %1214 = vmatpush1.msra.mxu0 0.0
    %1215 = vmatprep.subr.mxu0 0.0
    %1216 = vmatpush1.msra.mxu0 0.0
    %1217 = vmatprep.subr.mxu0 0.0
    %1218 = vmatpush1.msra.mxu0 0.0
    %1219 = vmatprep.subr.mxu0 0.0
    %1220 = vmatpush1.msra.mxu0 0.0
    %1221 = vmatprep.subr.mxu0 0.0
    %1222 = vmatpush1.msra.mxu0 0.0
    %1223 = vmatprep.mubr.f32.mxu0 0.0
    %1224 = vmatmul.mubr.f32.gmra.mrb[0].mxu0 %v1154
    %v1225 = vpop.f32.mrb[0].mxu0
    %v1226 = vadd.f32 %v1152, %v1225
    %v1227 = vpop.f32.mrb[0].mxu0
    %1228 = vmatprep.mubr.f32.mxu0 0.0
    %1229 = vmatmul.mubr.f32.gmra.mrb[0].mxu0 %v1157
    %v1230 = vpop.f32.mrb[0].mxu0
    %v1231 = vadd.f32 %v1152, %v1230
    %v1232 = vpop.f32.mrb[0].mxu0
    %1233 = vdwg.mxu0
    %v1234 = vadd.f32 %v1060, %v1226
    %v1235 = vadd.f32 %v1061, %v1231
    %v1236 = vsel %vm50, %v1234, 0.0
    %1237 = vadd.xlane.f32.xlu0 %v1236
    %v1238 = vpop.xlane.xlu0 %1237
    %v1239 = vsel %vm50, %v1235, 0.0
    %1240 = vadd.xlane.f32.xlu0 %v1239
    %v1241 = vpop.xlane.xlu0 %1240
    %v1242 = vmul.f32 %v1238, %v57
    %v1243 = vmul.f32 %v1241, %v57
    %v1244 = vsub.f32 %v1234, %v1242
    %v1245 = vsub.f32 %v1235, %v1243
    %v1246 = vmul.f32 %v1244, %v1244
    %v1247 = vmul.f32 %v1245, %v1245
    %v1248 = vsel %vm50, %v1246, 0.0
    %1249 = vadd.xlane.f32.xlu0 %v1248
    %v1250 = vpop.xlane.xlu0 %1249
    %v1251 = vsel %vm50, %v1247, 0.0
    %1252 = vadd.xlane.f32.xlu0 %v1251
    %v1253 = vpop.xlane.xlu0 %1252
    %v1254 = vmul.f32 %v1250, %v57
    %v1255 = vmul.f32 %v1253, %v57
    %v1256 = vadd.f32 %v1254, 1e-05
    %v1257 = vadd.f32 %v1255, 1e-05
    %v1258 = vrsqrt.pop %v1256
    %v1259 = vrsqrt.pop %v1257
    %v1260 = vmul.f32 %v1244, %v1258
    %v1261 = vmul.f32 %v1245, %v1259
    %v1262 = vlaneseq
    %v1263 = vshrl.u32 %v1262, 7
    %v1264 = vsub.s32 0, %v1263
    %v1265 = vrot.slane %v116, %v1264
    %v1266 = vmul.f32 %v1260, %v1265
    %v1267 = vmul.f32 %v1261, %v1265
    %v1268 = vlaneseq
    %v1269 = vshrl.u32 %v1268, 7
    %v1270 = vsub.s32 0, %v1269
    %v1271 = vrot.slane %v117, %v1270
    %v1272 = vadd.f32 %v1266, %v1271
    %v1273 = vadd.f32 %v1267, %v1271
    %v1274 = vld [vmem:[%s1 + $0x160] sm:$0xff]
    %v1275 = vld [vmem:[%s1 + $0x168] sm:$0xff]
    %v1276 = vld [vmem:[%s1 + $0x170] sm:$0xff]
    %v1277 = vld [vmem:[%s1 + $0x178] sm:$0xff]
    %v1278 = vld [vmem:[%s1 + $0x180] sm:$0xff]
    %v1279 = vld [vmem:[%s1 + $0x188] sm:$0xff]
    %v1280 = vld [vmem:[%s1 + $0x190] sm:$0xff]
    %v1281 = vld [vmem:[%s1 + $0x198] sm:$0xff]
    %v1282 = vld [vmem:[%s1 + $0x1a0] sm:$0xff]
    %v1283 = vld [vmem:[%s1 + $0x1a8] sm:$0xff]
    %v1284 = vld [vmem:[%s1 + $0x1b0] sm:$0xff]
    %v1285 = vld [vmem:[%s1 + $0x1b8] sm:$0xff]
    %v1286 = vld [vmem:[%s1 + $0x1c0] sm:$0xff]
    %v1287 = vld [vmem:[%s1 + $0x1c8] sm:$0xff]
    %v1288 = vld [vmem:[%s1 + $0x1d0] sm:$0xff]
    %v1289 = vld [vmem:[%s1 + $0x1d8] sm:$0xff]
    %v1290 = vld [vmem:[%s1 + $0x1e0] sm:$0xff]
    %v1291 = vld [vmem:[%s1 + $0x1e8] sm:$0xff]
    %v1292 = vld [vmem:[%s1 + $0x1f0] sm:$0xff]
    %v1293 = vld [vmem:[%s1 + $0x1f8] sm:$0xff]
    %v1294 = vld [vmem:[%s1 + $0x200] sm:$0x1]
    %v1295 = vld [vmem:[%s1 + $0x201] sm:$0x1]
    %v1296 = vld [vmem:[%s1 + $0x202] sm:$0x1]
    %v1297 = vld [vmem:[%s1 + $0x203] sm:$0x1]
    %v1298 = vld [vmem:[%s1 + $0x204] sm:$0x1]
    %v1299 = vld [vmem:[%s1 + $0x205] sm:$0x1]
    %v1300 = vld [vmem:[%s1 + $0x206] sm:$0x1]
    %v1301 = vld [vmem:[%s1 + $0x207] sm:$0x1]
    %v1302 = vlaneseq
    %v1303 = vshrl.u32 %v1302, 7
    %v1304 = vsub.s32 0, %v1303
    %v1305 = vrot.slane %v1294, %v1304
    %v1307 = vsel %vm50, %v1272, 0
    %v1310 = vsel %vm50, %v1273, 0
    %1312 = vmatprep.subr.mxu0 0.0
    %1313 = vmatpush1.msra.mxu0 %v1274
    %1314 = vmatprep.subr.mxu0 0.0
    %1315 = vmatpush1.msra.mxu0 %v1275
    %1316 = vmatprep.subr.mxu0 0.0
    %1317 = vmatpush1.msra.mxu0 %v1276
    %1318 = vmatprep.subr.mxu0 0.0
    %1319 = vmatpush1.msra.mxu0 %v1277
    %1320 = vmatprep.subr.mxu0 0.0
    %1321 = vmatpush1.msra.mxu0 0.0
    %1322 = vmatprep.subr.mxu0 0.0
    %1323 = vmatpush1.msra.mxu0 0.0
    %1324 = vmatprep.subr.mxu0 0.0
    %1325 = vmatpush1.msra.mxu0 0.0
    %1326 = vmatprep.subr.mxu0 0.0
    %1327 = vmatpush1.msra.mxu0 0.0
    %1328 = vmatprep.subr.mxu0 0.0
    %1329 = vmatpush1.msra.mxu0 0.0
    %1330 = vmatprep.subr.mxu0 0.0
    %1331 = vmatpush1.msra.mxu0 0.0
    %1332 = vmatprep.subr.mxu0 0.0
    %1333 = vmatpush1.msra.mxu0 0.0
    %1334 = vmatprep.subr.mxu0 0.0
    %1335 = vmatpush1.msra.mxu0 0.0
    %1336 = vmatprep.subr.mxu0 0.0
    %1337 = vmatpush1.msra.mxu0 0.0
    %1338 = vmatprep.subr.mxu0 0.0
    %1339 = vmatpush1.msra.mxu0 0.0
    %1340 = vmatprep.subr.mxu0 0.0
    %1341 = vmatpush1.msra.mxu0 0.0
    %1342 = vmatprep.subr.mxu0 0.0
    %1343 = vmatpush1.msra.mxu0 0.0
    %1344 = vmatprep.subr.mxu0 0.0
    %1345 = vmatpush1.msra.mxu0 0.0
    %1346 = vmatprep.subr.mxu0 0.0
    %1347 = vmatpush1.msra.mxu0 0.0
    %1348 = vmatprep.subr.mxu0 0.0
    %1349 = vmatpush1.msra.mxu0 0.0
    %1350 = vmatprep.subr.mxu0 0.0
    %1351 = vmatpush1.msra.mxu0 0.0
    %1352 = vmatprep.subr.mxu0 0.0
    %1353 = vmatpush1.msra.mxu0 0.0
    %1354 = vmatprep.subr.mxu0 0.0
    %1355 = vmatpush1.msra.mxu0 0.0
    %1356 = vmatprep.subr.mxu0 0.0
    %1357 = vmatpush1.msra.mxu0 0.0
    %1358 = vmatprep.subr.mxu0 0.0
    %1359 = vmatpush1.msra.mxu0 0.0
    %1360 = vmatprep.subr.mxu0 0.0
    %1361 = vmatpush1.msra.mxu0 0.0
    %1362 = vmatprep.subr.mxu0 0.0
    %1363 = vmatpush1.msra.mxu0 0.0
    %1364 = vmatprep.subr.mxu0 0.0
    %1365 = vmatpush1.msra.mxu0 0.0
    %1366 = vmatprep.subr.mxu0 0.0
    %1367 = vmatpush1.msra.mxu0 0.0
    %1368 = vmatprep.subr.mxu0 0.0
    %1369 = vmatpush1.msra.mxu0 0.0
    %1370 = vmatprep.subr.mxu0 0.0
    %1371 = vmatpush1.msra.mxu0 0.0
    %1372 = vmatprep.subr.mxu0 0.0
    %1373 = vmatpush1.msra.mxu0 0.0
    %1374 = vmatprep.subr.mxu0 0.0
    %1375 = vmatpush1.msra.mxu0 0.0
    %1376 = vmatprep.mubr.f32.mxu0 0.0
    %1377 = vmatmul.mubr.f32.gmra.mrb[0].mxu0 %v1307
    %v1378 = vpop.f32.mrb[0].mxu0
    %v1379 = vadd.f32 %v1305, %v1378
    %v1380 = vpop.f32.mrb[0].mxu0
    %1381 = vmatprep.mubr.f32.mxu0 0.0
    %1382 = vmatmul.mubr.f32.gmra.mrb[0].mxu0 %v1310
    %v1383 = vpop.f32.mrb[0].mxu0
    %v1384 = vadd.f32 %v1305, %v1383
    %v1385 = vpop.f32.mrb[0].mxu0
    %1386 = vdwg.mxu0
    %1387 = vmatprep.subr.mxu0 0.0
    %1388 = vmatpush1.msra.mxu0 %v1379
    %1389 = vmatprep.subr.mxu0 0.0
    %1390 = vmatpush1.msra.mxu0 %v1384
    %1391 = vmatprep.subr.mxu0 0.0
    %1392 = vmatpush1.msra.mxu0 0.0
    %1393 = vmatprep.subr.mxu0 0.0
    %1394 = vmatpush1.msra.mxu0 0.0
    %1395 = vmatprep.subr.mxu0 0.0
    %1396 = vmatpush1.msra.mxu0 0.0
    %1397 = vmatprep.subr.mxu0 0.0
    %1398 = vmatpush1.msra.mxu0 0.0
    %1399 = vmatprep.subr.mxu0 0.0
    %1400 = vmatpush1.msra.mxu0 0.0
    %1401 = vmatprep.subr.mxu0 0.0
    %1402 = vmatpush1.msra.mxu0 0.0
    %1403 = vmatprep.subr.mxu0 0.0
    %1404 = vmatpush1.msra.mxu0 0.0
    %1405 = vmatprep.subr.mxu0 0.0
    %1406 = vmatpush1.msra.mxu0 0.0
    %1407 = vmatprep.subr.mxu0 0.0
    %1408 = vmatpush1.msra.mxu0 0.0
    %1409 = vmatprep.subr.mxu0 0.0
    %1410 = vmatpush1.msra.mxu0 0.0
    %1411 = vmatprep.subr.mxu0 0.0
    %1412 = vmatpush1.msra.mxu0 0.0
    %1413 = vmatprep.subr.mxu0 0.0
    %1414 = vmatpush1.msra.mxu0 0.0
    %1415 = vmatprep.subr.mxu0 0.0
    %1416 = vmatpush1.msra.mxu0 0.0
    %1417 = vmatprep.subr.mxu0 0.0
    %1418 = vmatpush1.msra.mxu0 0.0
    %1419 = vmatprep.subr.mxu0 0.0
    %1420 = vmatpush1.msra.mxu0 0.0
    %1421 = vmatprep.subr.mxu0 0.0
    %1422 = vmatpush1.msra.mxu0 0.0
    %1423 = vmatprep.subr.mxu0 0.0
    %1424 = vmatpush1.msra.mxu0 0.0
    %1425 = vmatprep.subr.mxu0 0.0
    %1426 = vmatpush1.msra.mxu0 0.0
    %1427 = vmatprep.subr.mxu0 0.0
    %1428 = vmatpush1.msra.mxu0 0.0
    %1429 = vmatprep.subr.mxu0 0.0
    %1430 = vmatpush1.msra.mxu0 0.0
    %1431 = vmatprep.subr.mxu0 0.0
    %1432 = vmatpush1.msra.mxu0 0.0
    %1433 = vmatprep.subr.mxu0 0.0
    %1434 = vmatpush1.msra.mxu0 0.0
    %1435 = vmatprep.subr.mxu0 0.0
    %1436 = vmatpush1.msra.mxu0 0.0
    %1437 = vmatprep.subr.mxu0 0.0
    %1438 = vmatpush1.msra.mxu0 0.0
    %1439 = vmatprep.subr.mxu0 0.0
    %1440 = vmatpush1.msra.mxu0 0.0
    %1441 = vmatprep.subr.mxu0 0.0
    %1442 = vmatpush1.msra.mxu0 0.0
    %1443 = vmatprep.subr.mxu0 0.0
    %1444 = vmatpush1.msra.mxu0 0.0
    %1445 = vmatprep.subr.mxu0 0.0
    %1446 = vmatpush1.msra.mxu0 0.0
    %1447 = vmatprep.subr.mxu0 0.0
    %1448 = vmatpush1.msra.mxu0 0.0
    %1449 = vmatprep.subr.mxu0 0.0
    %1450 = vmatpush1.msra.mxu0 0.0
    %1451 = vmatprep.mubr.f32.mxu0 0.0
    %1452 = vmatmul.mubr.f32.gmra.mrb[0].mxu0 %v205
    %v1453 = vpop.f32.mrb[0].mxu0
    %v1454 = vadd.f32 0.0, %v1453
    %v1455 = vpop.f32.mrb[0].mxu0
    %1456 = vmatprep.mubr.f32.mxu0 0.0
    %1457 = vmatmul.mubr.f32.gmra.mrb[0].mxu0 %v208
    %v1458 = vpop.f32.mrb[0].mxu0
    %v1459 = vadd.f32 0.0, %v1458
    %v1460 = vpop.f32.mrb[0].mxu0
    %1461 = vmatprep.mubr.f32.mxu0 0.0
    %1462 = vmatmul.mubr.f32.gmra.mrb[0].mxu0 %v211
    %v1463 = vpop.f32.mrb[0].mxu0
    %v1464 = vadd.f32 0.0, %v1463
    %v1465 = vpop.f32.mrb[0].mxu0
    %1466 = vmatprep.mubr.f32.mxu0 0.0
    %1467 = vmatmul.mubr.f32.gmra.mrb[0].mxu0 %v214
    %v1468 = vpop.f32.mrb[0].mxu0
    %v1469 = vadd.f32 0.0, %v1468
    %v1470 = vpop.f32.mrb[0].mxu0
    %1471 = vmatprep.mubr.f32.mxu0 0.0
    %1472 = vmatmul.mubr.f32.gmra.mrb[0].mxu0 %v217
    %v1473 = vpop.f32.mrb[0].mxu0
    %v1474 = vadd.f32 0.0, %v1473
    %v1475 = vpop.f32.mrb[0].mxu0
    %1476 = vmatprep.mubr.f32.mxu0 0.0
    %1477 = vmatmul.mubr.f32.gmra.mrb[0].mxu0 %v220
    %v1478 = vpop.f32.mrb[0].mxu0
    %v1479 = vadd.f32 0.0, %v1478
    %v1480 = vpop.f32.mrb[0].mxu0
    %1481 = vmatprep.mubr.f32.mxu0 0.0
    %1482 = vmatmul.mubr.f32.gmra.mrb[0].mxu0 %v223
    %v1483 = vpop.f32.mrb[0].mxu0
    %v1484 = vadd.f32 0.0, %v1483
    %v1485 = vpop.f32.mrb[0].mxu0
    %1486 = vmatprep.mubr.f32.mxu0 0.0
    %1487 = vmatmul.mubr.f32.gmra.mrb[0].mxu0 %v226
    %v1488 = vpop.f32.mrb[0].mxu0
    %v1489 = vadd.f32 0.0, %v1488
    %v1490 = vpop.f32.mrb[0].mxu0
    %1491 = vdwg.mxu0
    %v1492 = vmul.f32 %v1454, %v35
    %v1493 = vmul.f32 %v1459, %v36
    %v1494 = vmul.f32 %v1464, %v37
    %v1495 = vmul.f32 %v1469, %v38
    %v1496 = vmul.f32 %v1474, %v39
    %v1497 = vmul.f32 %v1479, %v40
    %v1498 = vmul.f32 %v1484, %v41
    %v1499 = vmul.f32 %v1489, %v42
    %v1500 = vmul.f32 %v1454, %v350
    %v1501 = vmul.f32 %v1459, %v352
    %v1502 = vmul.f32 %v1464, %v354
    %v1503 = vmul.f32 %v1469, %v356
    %v1504 = vmul.f32 %v1474, %v358
    %v1505 = vmul.f32 %v1479, %v360
    %v1506 = vmul.f32 %v1484, %v362
    %v1507 = vmul.f32 %v1489, %v364
    %v1508 = vmul.f32 %v1454, %v382
    %v1509 = vmul.f32 %v1459, %v384
    %v1510 = vmul.f32 %v1464, %v386
    %v1511 = vmul.f32 %v1469, %v388
    %v1512 = vmul.f32 %v1474, %v390
    %v1513 = vmul.f32 %v1479, %v392
    %v1514 = vmul.f32 %v1484, %v394
    %v1515 = vmul.f32 %v1489, %v396
    %1524 = vrot.lane.b32.xlu0 %v1500, 96
    %v1525 = vpop.permute.xlu0 %1524
    %1526 = vrot.lane.b32.xlu0 %v1501, 96
    %v1527 = vpop.permute.xlu0 %1526
    %1528 = vrot.lane.b32.xlu0 %v1502, 96
    %v1529 = vpop.permute.xlu0 %1528
    %1530 = vrot.lane.b32.xlu0 %v1503, 96
    %v1531 = vpop.permute.xlu0 %1530
    %1532 = vrot.lane.b32.xlu0 %v1504, 96
    %v1533 = vpop.permute.xlu0 %1532
    %1534 = vrot.lane.b32.xlu0 %v1505, 96
    %v1535 = vpop.permute.xlu0 %1534
    %1536 = vrot.lane.b32.xlu0 %v1506, 96
    %v1537 = vpop.permute.xlu0 %1536
    %1538 = vrot.lane.b32.xlu0 %v1507, 96
    %v1539 = vpop.permute.xlu0 %1538
    %v1541 = vsel %vm50, %v1492, 0
    %v1544 = vsel %vm50, %v1493, 0
    %v1547 = vsel %vm50, %v1494, 0
    %v1550 = vsel %vm50, %v1495, 0
    %v1553 = vsel %vm50, %v1496, 0
    %v1556 = vsel %vm50, %v1497, 0
    %v1559 = vsel %vm50, %v1498, 0
    %v1562 = vsel %vm50, %v1499, 0
    %v1564 = vsel %vm50, %v1525, 0
    %v1566 = vsel %vm50, %v1527, 0
    %v1568 = vsel %vm50, %v1529, 0
    %v1570 = vsel %vm50, %v1531, 0
    %v1572 = vsel %vm50, %v1533, 0
    %v1574 = vsel %vm50, %v1535, 0
    %v1576 = vsel %vm50, %v1537, 0
    %v1578 = vsel %vm50, %v1539, 0
    %1580 = vmatprep.subr.mxu0 0.0
    %1581 = vmatpush1.xpose.msra.mxu0 %v1564
    %1582 = vmatprep.subr.mxu0 0.0
    %1583 = vmatpush1.xpose.msra.mxu0 %v1566
    %1584 = vmatprep.subr.mxu0 0.0
    %1585 = vmatpush1.xpose.msra.mxu0 %v1568
    %1586 = vmatprep.subr.mxu0 0.0
    %1587 = vmatpush1.xpose.msra.mxu0 %v1570
    %1588 = vmatprep.subr.mxu0 0.0
    %1589 = vmatpush1.xpose.msra.mxu0 %v1572
    %1590 = vmatprep.subr.mxu0 0.0
    %1591 = vmatpush1.xpose.msra.mxu0 %v1574
    %1592 = vmatprep.subr.mxu0 0.0
    %1593 = vmatpush1.xpose.msra.mxu0 %v1576
    %1594 = vmatprep.subr.mxu0 0.0
    %1595 = vmatpush1.xpose.msra.mxu0 %v1578
    %1596 = vmatprep.subr.mxu0 0.0
    %1597 = vmatpush1.xpose.msra.mxu0 0.0
    %1598 = vmatprep.subr.mxu0 0.0
    %1599 = vmatpush1.xpose.msra.mxu0 0.0
    %1600 = vmatprep.subr.mxu0 0.0
    %1601 = vmatpush1.xpose.msra.mxu0 0.0
    %1602 = vmatprep.subr.mxu0 0.0
    %1603 = vmatpush1.xpose.msra.mxu0 0.0
    %1604 = vmatprep.subr.mxu0 0.0
    %1605 = vmatpush1.xpose.msra.mxu0 0.0
    %1606 = vmatprep.subr.mxu0 0.0
    %1607 = vmatpush1.xpose.msra.mxu0 0.0
    %1608 = vmatprep.subr.mxu0 0.0
    %1609 = vmatpush1.xpose.msra.mxu0 0.0
    %1610 = vmatprep.subr.mxu0 0.0
    %1611 = vmatpush1.xpose.msra.mxu0 0.0
    %1612 = vmatprep.subr.mxu0 0.0
    %1613 = vmatpush1.xpose.msra.mxu0 0.0
    %1614 = vmatprep.subr.mxu0 0.0
    %1615 = vmatpush1.xpose.msra.mxu0 0.0
    %1616 = vmatprep.subr.mxu0 0.0
    %1617 = vmatpush1.xpose.msra.mxu0 0.0
    %1618 = vmatprep.subr.mxu0 0.0
    %1619 = vmatpush1.xpose.msra.mxu0 0.0
    %1620 = vmatprep.subr.mxu0 0.0
    %1621 = vmatpush1.xpose.msra.mxu0 0.0
    %1622 = vmatprep.subr.mxu0 0.0
    %1623 = vmatpush1.xpose.msra.mxu0 0.0
    %1624 = vmatprep.subr.mxu0 0.0
    %1625 = vmatpush1.xpose.msra.mxu0 0.0
    %1626 = vmatprep.subr.mxu0 0.0
    %1627 = vmatpush1.xpose.msra.mxu0 0.0
    %1628 = vmatprep.subr.mxu0 0.0
    %1629 = vmatpush1.xpose.msra.mxu0 0.0
    %1630 = vmatprep.subr.mxu0 0.0
    %1631 = vmatpush1.xpose.msra.mxu0 0.0
    %1632 = vmatprep.subr.mxu0 0.0
    %1633 = vmatpush1.xpose.msra.mxu0 0.0
    %1634 = vmatprep.subr.mxu0 0.0
    %1635 = vmatpush1.xpose.msra.mxu0 0.0
    %1636 = vmatprep.subr.mxu0 0.0
    %1637 = vmatpush1.xpose.msra.mxu0 0.0
    %1638 = vmatprep.subr.mxu0 0.0
    %1639 = vmatpush1.xpose.msra.mxu0 0.0
    %1640 = vmatprep.subr.mxu0 0.0
    %1641 = vmatpush1.xpose.msra.mxu0 0.0
    %1642 = vmatprep.subr.mxu0 0.0
    %1643 = vmatpush1.xpose.msra.mxu0 0.0
    %1644 = vmatprep.mubr.f32.mxu0 0.0
    %1645 = vmatmul.mubr.f32.gmra.mrb[0].mxu0 %v1541
    %v1646 = vpop.f32.mrb[0].mxu0
    %v1647 = vadd.f32 0.0, %v1646
    %v1648 = vpop.f32.mrb[0].mxu0
    %1649 = vmatprep.mubr.f32.mxu0 0.0
    %1650 = vmatmul.mubr.f32.gmra.mrb[0].mxu0 %v1544
    %v1651 = vpop.f32.mrb[0].mxu0
    %v1652 = vadd.f32 0.0, %v1651
    %v1653 = vpop.f32.mrb[0].mxu0
    %1654 = vmatprep.mubr.f32.mxu0 0.0
    %1655 = vmatmul.mubr.f32.gmra.mrb[0].mxu0 %v1547
    %v1656 = vpop.f32.mrb[0].mxu0
    %v1657 = vadd.f32 0.0, %v1656
    %v1658 = vpop.f32.mrb[0].mxu0
    %1659 = vmatprep.mubr.f32.mxu0 0.0
    %1660 = vmatmul.mubr.f32.gmra.mrb[0].mxu0 %v1550
    %v1661 = vpop.f32.mrb[0].mxu0
    %v1662 = vadd.f32 0.0, %v1661
    %v1663 = vpop.f32.mrb[0].mxu0
    %1664 = vmatprep.mubr.f32.mxu0 0.0
    %1665 = vmatmul.mubr.f32.gmra.mrb[0].mxu0 %v1553
    %v1666 = vpop.f32.mrb[0].mxu0
    %v1667 = vadd.f32 0.0, %v1666
    %v1668 = vpop.f32.mrb[0].mxu0
    %1669 = vmatprep.mubr.f32.mxu0 0.0
    %1670 = vmatmul.mubr.f32.gmra.mrb[0].mxu0 %v1556
    %v1671 = vpop.f32.mrb[0].mxu0
    %v1672 = vadd.f32 0.0, %v1671
    %v1673 = vpop.f32.mrb[0].mxu0
    %1674 = vmatprep.mubr.f32.mxu0 0.0
    %1675 = vmatmul.mubr.f32.gmra.mrb[0].mxu0 %v1559
    %v1676 = vpop.f32.mrb[0].mxu0
    %v1677 = vadd.f32 0.0, %v1676
    %v1678 = vpop.f32.mrb[0].mxu0
    %1679 = vmatprep.mubr.f32.mxu0 0.0
    %1680 = vmatmul.mubr.f32.gmra.mrb[0].mxu0 %v1562
    %v1681 = vpop.f32.mrb[0].mxu0
    %v1682 = vadd.f32 0.0, %v1681
    %v1683 = vpop.f32.mrb[0].mxu0
    %1684 = vdwg.mxu0
    %v1685 = vmul.f32 %v1647, 0.35355338
    %v1686 = vmul.f32 %v1652, 0.35355338
    %v1687 = vmul.f32 %v1657, 0.35355338
    %v1688 = vmul.f32 %v1662, 0.35355338
    %v1689 = vmul.f32 %v1667, 0.35355338
    %v1690 = vmul.f32 %v1672, 0.35355338
    %v1691 = vmul.f32 %v1677, 0.35355338
    %v1692 = vmul.f32 %v1682, 0.35355338
    %v1693 = vadd.f32 %v1685, %v14
    %v1694 = vadd.f32 %v1686, %v15
    %v1695 = vadd.f32 %v1687, %v16
    %v1696 = vadd.f32 %v1688, %v17
    %v1697 = vadd.f32 %v1689, %v18
    %v1698 = vadd.f32 %v1690, %v19
    %v1699 = vadd.f32 %v1691, %v20
    %v1700 = vadd.f32 %v1692, %v21
    %v1701 = vsel %vm598, %v1693, -inf
    %1702 = vmax.xlane.f32.xlu0 %v1701
    %v1703 = vpop.xlane.xlu0 %1702
    %v1704 = vsel %vm598, %v1694, -inf
    %1705 = vmax.xlane.f32.xlu0 %v1704
    %v1706 = vpop.xlane.xlu0 %1705
    %v1707 = vsel %vm598, %v1695, -inf
    %1708 = vmax.xlane.f32.xlu0 %v1707
    %v1709 = vpop.xlane.xlu0 %1708
    %v1710 = vsel %vm598, %v1696, -inf
    %1711 = vmax.xlane.f32.xlu0 %v1710
    %v1712 = vpop.xlane.xlu0 %1711
    %v1713 = vsel %vm598, %v1697, -inf
    %1714 = vmax.xlane.f32.xlu0 %v1713
    %v1715 = vpop.xlane.xlu0 %1714
    %v1716 = vsel %vm598, %v1698, -inf
    %1717 = vmax.xlane.f32.xlu0 %v1716
    %v1718 = vpop.xlane.xlu0 %1717
    %v1719 = vsel %vm598, %v1699, -inf
    %1720 = vmax.xlane.f32.xlu0 %v1719
    %v1721 = vpop.xlane.xlu0 %1720
    %v1722 = vsel %vm598, %v1700, -inf
    %1723 = vmax.xlane.f32.xlu0 %v1722
    %v1724 = vpop.xlane.xlu0 %1723
    %v1725 = vsub.f32 %v1693, %v1703
    %v1726 = vsub.f32 %v1694, %v1706
    %v1727 = vsub.f32 %v1695, %v1709
    %v1728 = vsub.f32 %v1696, %v1712
    %v1729 = vsub.f32 %v1697, %v1715
    %v1730 = vsub.f32 %v1698, %v1718
    %v1731 = vsub.f32 %v1699, %v1721
    %v1732 = vsub.f32 %v1700, %v1724
    %v1733 = vmul.f32 %v1725, 1.442695
    %v1734 = vpow.pop %v1733
    %v1735 = vmul.f32 %v1726, 1.442695
    %v1736 = vpow.pop %v1735
    %v1737 = vmul.f32 %v1727, 1.442695
    %v1738 = vpow.pop %v1737
    %v1739 = vmul.f32 %v1728, 1.442695
    %v1740 = vpow.pop %v1739
    %v1741 = vmul.f32 %v1729, 1.442695
    %v1742 = vpow.pop %v1741
    %v1743 = vmul.f32 %v1730, 1.442695
    %v1744 = vpow.pop %v1743
    %v1745 = vmul.f32 %v1731, 1.442695
    %v1746 = vpow.pop %v1745
    %v1747 = vmul.f32 %v1732, 1.442695
    %v1748 = vpow.pop %v1747
    %v1749 = vsel %vm598, %v1734, 0.0
    %1750 = vadd.xlane.f32.xlu0 %v1749
    %v1751 = vpop.xlane.xlu0 %1750
    %v1752 = vsel %vm598, %v1736, 0.0
    %1753 = vadd.xlane.f32.xlu0 %v1752
    %v1754 = vpop.xlane.xlu0 %1753
    %v1755 = vsel %vm598, %v1738, 0.0
    %1756 = vadd.xlane.f32.xlu0 %v1755
    %v1757 = vpop.xlane.xlu0 %1756
    %v1758 = vsel %vm598, %v1740, 0.0
    %1759 = vadd.xlane.f32.xlu0 %v1758
    %v1760 = vpop.xlane.xlu0 %1759
    %v1761 = vsel %vm598, %v1742, 0.0
    %1762 = vadd.xlane.f32.xlu0 %v1761
    %v1763 = vpop.xlane.xlu0 %1762
    %v1764 = vsel %vm598, %v1744, 0.0
    %1765 = vadd.xlane.f32.xlu0 %v1764
    %v1766 = vpop.xlane.xlu0 %1765
    %v1767 = vsel %vm598, %v1746, 0.0
    %1768 = vadd.xlane.f32.xlu0 %v1767
    %v1769 = vpop.xlane.xlu0 %1768
    %v1770 = vsel %vm598, %v1748, 0.0
    %1771 = vadd.xlane.f32.xlu0 %v1770
    %v1772 = vpop.xlane.xlu0 %1771
    %v1773 = vrcp.pop %v1751
    %v1774 = vrcp.pop %v1754
    %v1775 = vrcp.pop %v1757
    %v1776 = vrcp.pop %v1760
    %v1777 = vrcp.pop %v1763
    %v1778 = vrcp.pop %v1766
    %v1779 = vrcp.pop %v1769
    %v1780 = vrcp.pop %v1772
    %v1781 = vmul.f32 %v1734, %v1773
    %v1782 = vmul.f32 %v1736, %v1774
    %v1783 = vmul.f32 %v1738, %v1775
    %v1784 = vmul.f32 %v1740, %v1776
    %v1785 = vmul.f32 %v1742, %v1777
    %v1786 = vmul.f32 %v1744, %v1778
    %v1787 = vmul.f32 %v1746, %v1779
    %v1788 = vmul.f32 %v1748, %v1780
    %1797 = vrot.lane.b32.xlu0 %v1781, 64
    %v1798 = vpop.permute.xlu0 %1797
    %1799 = vrot.lane.b32.xlu0 %v1782, 64
    %v1800 = vpop.permute.xlu0 %1799
    %1801 = vrot.lane.b32.xlu0 %v1783, 64
    %v1802 = vpop.permute.xlu0 %1801
    %1803 = vrot.lane.b32.xlu0 %v1784, 64
    %v1804 = vpop.permute.xlu0 %1803
    %1805 = vrot.lane.b32.xlu0 %v1785, 64
    %v1806 = vpop.permute.xlu0 %1805
    %1807 = vrot.lane.b32.xlu0 %v1786, 64
    %v1808 = vpop.permute.xlu0 %1807
    %1809 = vrot.lane.b32.xlu0 %v1787, 64
    %v1810 = vpop.permute.xlu0 %1809
    %1811 = vrot.lane.b32.xlu0 %v1788, 64
    %v1812 = vpop.permute.xlu0 %1811
    %vm1821 = vcmask 1048064
    %1822 = vst.msk [vmem:[%s3] sm:$0xff] %vm1821, %v1798
    %1823 = vst.msk [vmem:[%s3 + $0x8] sm:$0xff] %vm1821, %v1800
    %1824 = vst.msk [vmem:[%s3 + $0x10] sm:$0xff] %vm1821, %v1802
    %1825 = vst.msk [vmem:[%s3 + $0x18] sm:$0xff] %vm1821, %v1804
    %1826 = vst.msk [vmem:[%s3 + $0x20] sm:$0xff] %vm1821, %v1806
    %1827 = vst.msk [vmem:[%s3 + $0x28] sm:$0xff] %vm1821, %v1808
    %1828 = vst.msk [vmem:[%s3 + $0x30] sm:$0xff] %vm1821, %v1810
    %1829 = vst.msk [vmem:[%s3 + $0x38] sm:$0xff] %vm1821, %v1812
    %1838 = vrot.lane.b32.xlu0 %v1508, 64
    %v1839 = vpop.permute.xlu0 %1838
    %1840 = vrot.lane.b32.xlu0 %v1509, 64
    %v1841 = vpop.permute.xlu0 %1840
    %1842 = vrot.lane.b32.xlu0 %v1510, 64
    %v1843 = vpop.permute.xlu0 %1842
    %1844 = vrot.lane.b32.xlu0 %v1511, 64
    %v1845 = vpop.permute.xlu0 %1844
    %1846 = vrot.lane.b32.xlu0 %v1512, 64
    %v1847 = vpop.permute.xlu0 %1846
    %1848 = vrot.lane.b32.xlu0 %v1513, 64
    %v1849 = vpop.permute.xlu0 %1848
    %1850 = vrot.lane.b32.xlu0 %v1514, 64
    %v1851 = vpop.permute.xlu0 %1850
    %1852 = vrot.lane.b32.xlu0 %v1515, 64
    %v1853 = vpop.permute.xlu0 %1852
    %v1862 = vsel %vm598, %v1781, 0
    %v1864 = vsel %vm598, %v1782, 0
    %v1866 = vsel %vm598, %v1783, 0
    %v1868 = vsel %vm598, %v1784, 0
    %v1870 = vsel %vm598, %v1785, 0
    %v1872 = vsel %vm598, %v1786, 0
    %v1874 = vsel %vm598, %v1787, 0
    %v1876 = vsel %vm598, %v1788, 0
    %1878 = vmatprep.subr.mxu0 0.0
    %1879 = vmatpush1.msra.mxu0 %v1839
    %1880 = vmatprep.subr.mxu0 0.0
    %1881 = vmatpush1.msra.mxu0 %v1841
    %1882 = vmatprep.subr.mxu0 0.0
    %1883 = vmatpush1.msra.mxu0 %v1843
    %1884 = vmatprep.subr.mxu0 0.0
    %1885 = vmatpush1.msra.mxu0 %v1845
    %1886 = vmatprep.subr.mxu0 0.0
    %1887 = vmatpush1.msra.mxu0 %v1847
    %1888 = vmatprep.subr.mxu0 0.0
    %1889 = vmatpush1.msra.mxu0 %v1849
    %1890 = vmatprep.subr.mxu0 0.0
    %1891 = vmatpush1.msra.mxu0 %v1851
    %1892 = vmatprep.subr.mxu0 0.0
    %1893 = vmatpush1.msra.mxu0 %v1853
    %1894 = vmatprep.subr.mxu0 0.0
    %1895 = vmatpush1.msra.mxu0 0.0
    %1896 = vmatprep.subr.mxu0 0.0
    %1897 = vmatpush1.msra.mxu0 0.0
    %1898 = vmatprep.subr.mxu0 0.0
    %1899 = vmatpush1.msra.mxu0 0.0
    %1900 = vmatprep.subr.mxu0 0.0
    %1901 = vmatpush1.msra.mxu0 0.0
    %1902 = vmatprep.subr.mxu0 0.0
    %1903 = vmatpush1.msra.mxu0 0.0
    %1904 = vmatprep.subr.mxu0 0.0
    %1905 = vmatpush1.msra.mxu0 0.0
    %1906 = vmatprep.subr.mxu0 0.0
    %1907 = vmatpush1.msra.mxu0 0.0
    %1908 = vmatprep.subr.mxu0 0.0
    %1909 = vmatpush1.msra.mxu0 0.0
    %1910 = vmatprep.subr.mxu0 0.0
    %1911 = vmatpush1.msra.mxu0 0.0
    %1912 = vmatprep.subr.mxu0 0.0
    %1913 = vmatpush1.msra.mxu0 0.0
    %1914 = vmatprep.subr.mxu0 0.0
    %1915 = vmatpush1.msra.mxu0 0.0
    %1916 = vmatprep.subr.mxu0 0.0
    %1917 = vmatpush1.msra.mxu0 0.0
    %1918 = vmatprep.subr.mxu0 0.0
    %1919 = vmatpush1.msra.mxu0 0.0
    %1920 = vmatprep.subr.mxu0 0.0
    %1921 = vmatpush1.msra.mxu0 0.0
    %1922 = vmatprep.subr.mxu0 0.0
    %1923 = vmatpush1.msra.mxu0 0.0
    %1924 = vmatprep.subr.mxu0 0.0
    %1925 = vmatpush1.msra.mxu0 0.0
    %1926 = vmatprep.subr.mxu0 0.0
    %1927 = vmatpush1.msra.mxu0 0.0
    %1928 = vmatprep.subr.mxu0 0.0
    %1929 = vmatpush1.msra.mxu0 0.0
    %1930 = vmatprep.subr.mxu0 0.0
    %1931 = vmatpush1.msra.mxu0 0.0
    %1932 = vmatprep.subr.mxu0 0.0
    %1933 = vmatpush1.msra.mxu0 0.0
    %1934 = vmatprep.subr.mxu0 0.0
    %1935 = vmatpush1.msra.mxu0 0.0
    %1936 = vmatprep.subr.mxu0 0.0
    %1937 = vmatpush1.msra.mxu0 0.0
    %1938 = vmatprep.subr.mxu0 0.0
    %1939 = vmatpush1.msra.mxu0 0.0
    %1940 = vmatprep.subr.mxu0 0.0
    %1941 = vmatpush1.msra.mxu0 0.0
    %1942 = vmatprep.mubr.f32.mxu0 0.0
    %1943 = vmatmul.mubr.f32.gmra.mrb[0].mxu0 %v1862
    %v1944 = vpop.f32.mrb[0].mxu0
    %v1945 = vadd.f32 0.0, %v1944
    %v1946 = vpop.f32.mrb[0].mxu0
    %1947 = vmatprep.mubr.f32.mxu0 0.0
    %1948 = vmatmul.mubr.f32.gmra.mrb[0].mxu0 %v1864
    %v1949 = vpop.f32.mrb[0].mxu0
    %v1950 = vadd.f32 0.0, %v1949
    %v1951 = vpop.f32.mrb[0].mxu0
    %1952 = vmatprep.mubr.f32.mxu0 0.0
    %1953 = vmatmul.mubr.f32.gmra.mrb[0].mxu0 %v1866
    %v1954 = vpop.f32.mrb[0].mxu0
    %v1955 = vadd.f32 0.0, %v1954
    %v1956 = vpop.f32.mrb[0].mxu0
    %1957 = vmatprep.mubr.f32.mxu0 0.0
    %1958 = vmatmul.mubr.f32.gmra.mrb[0].mxu0 %v1868
    %v1959 = vpop.f32.mrb[0].mxu0
    %v1960 = vadd.f32 0.0, %v1959
    %v1961 = vpop.f32.mrb[0].mxu0
    %1962 = vmatprep.mubr.f32.mxu0 0.0
    %1963 = vmatmul.mubr.f32.gmra.mrb[0].mxu0 %v1870
    %v1964 = vpop.f32.mrb[0].mxu0
    %v1965 = vadd.f32 0.0, %v1964
    %v1966 = vpop.f32.mrb[0].mxu0
    %1967 = vmatprep.mubr.f32.mxu0 0.0
    %1968 = vmatmul.mubr.f32.gmra.mrb[0].mxu0 %v1872
    %v1969 = vpop.f32.mrb[0].mxu0
    %v1970 = vadd.f32 0.0, %v1969
    %v1971 = vpop.f32.mrb[0].mxu0
    %1972 = vmatprep.mubr.f32.mxu0 0.0
    %1973 = vmatmul.mubr.f32.gmra.mrb[0].mxu0 %v1874
    %v1974 = vpop.f32.mrb[0].mxu0
    %v1975 = vadd.f32 0.0, %v1974
    %v1976 = vpop.f32.mrb[0].mxu0
    %1977 = vmatprep.mubr.f32.mxu0 0.0
    %1978 = vmatmul.mubr.f32.gmra.mrb[0].mxu0 %v1876
    %v1979 = vpop.f32.mrb[0].mxu0
    %v1980 = vadd.f32 0.0, %v1979
    %v1981 = vpop.f32.mrb[0].mxu0
    %1982 = vdwg.mxu0
    %1983 = vmatprep.subr.mxu0 0.0
    %1984 = vmatpush1.msra.mxu0 %v1945
    %1985 = vmatprep.subr.mxu0 0.0
    %1986 = vmatpush1.msra.mxu0 %v1950
    %1987 = vmatprep.subr.mxu0 0.0
    %1988 = vmatpush1.msra.mxu0 %v1955
    %1989 = vmatprep.subr.mxu0 0.0
    %1990 = vmatpush1.msra.mxu0 %v1960
    %1991 = vmatprep.subr.mxu0 0.0
    %1992 = vmatpush1.msra.mxu0 %v1965
    %1993 = vmatprep.subr.mxu0 0.0
    %1994 = vmatpush1.msra.mxu0 %v1970
    %1995 = vmatprep.subr.mxu0 0.0
    %1996 = vmatpush1.msra.mxu0 %v1975
    %1997 = vmatprep.subr.mxu0 0.0
    %1998 = vmatpush1.msra.mxu0 %v1980
    %1999 = vmatprep.subr.mxu0 0.0
    %2000 = vmatpush1.msra.mxu0 0.0
    %2001 = vmatprep.subr.mxu0 0.0
    %2002 = vmatpush1.msra.mxu0 0.0
    %2003 = vmatprep.subr.mxu0 0.0
    %2004 = vmatpush1.msra.mxu0 0.0
    %2005 = vmatprep.subr.mxu0 0.0
    %2006 = vmatpush1.msra.mxu0 0.0
    %2007 = vmatprep.subr.mxu0 0.0
    %2008 = vmatpush1.msra.mxu0 0.0
    %2009 = vmatprep.subr.mxu0 0.0
    %2010 = vmatpush1.msra.mxu0 0.0
    %2011 = vmatprep.subr.mxu0 0.0
    %2012 = vmatpush1.msra.mxu0 0.0
    %2013 = vmatprep.subr.mxu0 0.0
    %2014 = vmatpush1.msra.mxu0 0.0
    %2015 = vmatprep.subr.mxu0 0.0
    %2016 = vmatpush1.msra.mxu0 0.0
    %2017 = vmatprep.subr.mxu0 0.0
    %2018 = vmatpush1.msra.mxu0 0.0
    %2019 = vmatprep.subr.mxu0 0.0
    %2020 = vmatpush1.msra.mxu0 0.0
    %2021 = vmatprep.subr.mxu0 0.0
    %2022 = vmatpush1.msra.mxu0 0.0
    %2023 = vmatprep.subr.mxu0 0.0
    %2024 = vmatpush1.msra.mxu0 0.0
    %2025 = vmatprep.subr.mxu0 0.0
    %2026 = vmatpush1.msra.mxu0 0.0
    %2027 = vmatprep.subr.mxu0 0.0
    %2028 = vmatpush1.msra.mxu0 0.0
    %2029 = vmatprep.subr.mxu0 0.0
    %2030 = vmatpush1.msra.mxu0 0.0
    %2031 = vmatprep.subr.mxu0 0.0
    %2032 = vmatpush1.msra.mxu0 0.0
    %2033 = vmatprep.subr.mxu0 0.0
    %2034 = vmatpush1.msra.mxu0 0.0
    %2035 = vmatprep.subr.mxu0 0.0
    %2036 = vmatpush1.msra.mxu0 0.0
    %2037 = vmatprep.subr.mxu0 0.0
    %2038 = vmatpush1.msra.mxu0 0.0
    %2039 = vmatprep.subr.mxu0 0.0
    %2040 = vmatpush1.msra.mxu0 0.0
    %2041 = vmatprep.subr.mxu0 0.0
    %2042 = vmatpush1.msra.mxu0 0.0
    %2043 = vmatprep.subr.mxu0 0.0
    %2044 = vmatpush1.msra.mxu0 0.0
    %2045 = vmatprep.subr.mxu0 0.0
    %2046 = vmatpush1.msra.mxu0 0.0
    %2047 = vmatprep.mubr.f32.mxu0 0.0
    %2048 = vmatmul.mubr.f32.gmra.mrb[0].mxu0 %v857
    %v2049 = vpop.f32.mrb[0].mxu0
    %v2050 = vadd.f32 0.0, %v2049
    %v2051 = vpop.f32.mrb[0].mxu0
    %2052 = vmatprep.mubr.f32.mxu0 0.0
    %2053 = vmatmul.mubr.f32.gmra.mrb[0].mxu0 %v860
    %v2054 = vpop.f32.mrb[0].mxu0
    %v2055 = vadd.f32 0.0, %v2054
    %v2056 = vpop.f32.mrb[0].mxu0
    %2057 = vdwg.mxu0
    %v2058 = vlaneseq
    %v2059 = vshrl.u32 %v2058, 7
    %v2060 = vsub.s32 0, %v2059
    %v2061 = vrot.slane %v1295, %v2060
    %v2063 = vsel %vm50, %v2050, 0
    %v2066 = vsel %vm50, %v2055, 0
    %2068 = vmatprep.subr.mxu0 0.0
    %2069 = vmatpush1.msra.mxu0 %v1278
    %2070 = vmatprep.subr.mxu0 0.0
    %2071 = vmatpush1.msra.mxu0 %v1279
    %2072 = vmatprep.subr.mxu0 0.0
    %2073 = vmatpush1.msra.mxu0 %v1280
    %2074 = vmatprep.subr.mxu0 0.0
    %2075 = vmatpush1.msra.mxu0 %v1281
    %2076 = vmatprep.subr.mxu0 0.0
    %2077 = vmatpush1.msra.mxu0 0.0
    %2078 = vmatprep.subr.mxu0 0.0
    %2079 = vmatpush1.msra.mxu0 0.0
    %2080 = vmatprep.subr.mxu0 0.0
    %2081 = vmatpush1.msra.mxu0 0.0
    %2082 = vmatprep.subr.mxu0 0.0
    %2083 = vmatpush1.msra.mxu0 0.0
    %2084 = vmatprep.subr.mxu0 0.0
    %2085 = vmatpush1.msra.mxu0 0.0
    %2086 = vmatprep.subr.mxu0 0.0
    %2087 = vmatpush1.msra.mxu0 0.0
    %2088 = vmatprep.subr.mxu0 0.0
    %2089 = vmatpush1.msra.mxu0 0.0
    %2090 = vmatprep.subr.mxu0 0.0
    %2091 = vmatpush1.msra.mxu0 0.0
    %2092 = vmatprep.subr.mxu0 0.0
    %2093 = vmatpush1.msra.mxu0 0.0
    %2094 = vmatprep.subr.mxu0 0.0
    %2095 = vmatpush1.msra.mxu0 0.0
    %2096 = vmatprep.subr.mxu0 0.0
    %2097 = vmatpush1.msra.mxu0 0.0
    %2098 = vmatprep.subr.mxu0 0.0
    %2099 = vmatpush1.msra.mxu0 0.0
    %2100 = vmatprep.subr.mxu0 0.0
    %2101 = vmatpush1.msra.mxu0 0.0
    %2102 = vmatprep.subr.mxu0 0.0
    %2103 = vmatpush1.msra.mxu0 0.0
    %2104 = vmatprep.subr.mxu0 0.0
    %2105 = vmatpush1.msra.mxu0 0.0
    %2106 = vmatprep.subr.mxu0 0.0
    %2107 = vmatpush1.msra.mxu0 0.0
    %2108 = vmatprep.subr.mxu0 0.0
    %2109 = vmatpush1.msra.mxu0 0.0
    %2110 = vmatprep.subr.mxu0 0.0
    %2111 = vmatpush1.msra.mxu0 0.0
    %2112 = vmatprep.subr.mxu0 0.0
    %2113 = vmatpush1.msra.mxu0 0.0
    %2114 = vmatprep.subr.mxu0 0.0
    %2115 = vmatpush1.msra.mxu0 0.0
    %2116 = vmatprep.subr.mxu0 0.0
    %2117 = vmatpush1.msra.mxu0 0.0
    %2118 = vmatprep.subr.mxu0 0.0
    %2119 = vmatpush1.msra.mxu0 0.0
    %2120 = vmatprep.subr.mxu0 0.0
    %2121 = vmatpush1.msra.mxu0 0.0
    %2122 = vmatprep.subr.mxu0 0.0
    %2123 = vmatpush1.msra.mxu0 0.0
    %2124 = vmatprep.subr.mxu0 0.0
    %2125 = vmatpush1.msra.mxu0 0.0
    %2126 = vmatprep.subr.mxu0 0.0
    %2127 = vmatpush1.msra.mxu0 0.0
    %2128 = vmatprep.subr.mxu0 0.0
    %2129 = vmatpush1.msra.mxu0 0.0
    %2130 = vmatprep.subr.mxu0 0.0
    %2131 = vmatpush1.msra.mxu0 0.0
    %2132 = vmatprep.mubr.f32.mxu0 0.0
    %2133 = vmatmul.mubr.f32.gmra.mrb[0].mxu0 %v2063
    %v2134 = vpop.f32.mrb[0].mxu0
    %v2135 = vadd.f32 %v2061, %v2134
    %v2136 = vpop.f32.mrb[0].mxu0
    %2137 = vmatprep.mubr.f32.mxu0 0.0
    %2138 = vmatmul.mubr.f32.gmra.mrb[0].mxu0 %v2066
    %v2139 = vpop.f32.mrb[0].mxu0
    %v2140 = vadd.f32 %v2061, %v2139
    %v2141 = vpop.f32.mrb[0].mxu0
    %2142 = vdwg.mxu0
    %v2143 = vadd.f32 %v1272, %v2135
    %v2144 = vadd.f32 %v1273, %v2140
    %v2145 = vsel %vm50, %v2143, 0.0
    %2146 = vadd.xlane.f32.xlu0 %v2145
    %v2147 = vpop.xlane.xlu0 %2146
    %v2148 = vsel %vm50, %v2144, 0.0
    %2149 = vadd.xlane.f32.xlu0 %v2148
    %v2150 = vpop.xlane.xlu0 %2149
    %v2151 = vmul.f32 %v2147, %v57
    %v2152 = vmul.f32 %v2150, %v57
    %v2153 = vsub.f32 %v2143, %v2151
    %v2154 = vsub.f32 %v2144, %v2152
    %v2155 = vmul.f32 %v2153, %v2153
    %v2156 = vmul.f32 %v2154, %v2154
    %v2157 = vsel %vm50, %v2155, 0.0
    %2158 = vadd.xlane.f32.xlu0 %v2157
    %v2159 = vpop.xlane.xlu0 %2158
    %v2160 = vsel %vm50, %v2156, 0.0
    %2161 = vadd.xlane.f32.xlu0 %v2160
    %v2162 = vpop.xlane.xlu0 %2161
    %v2163 = vmul.f32 %v2159, %v57
    %v2164 = vmul.f32 %v2162, %v57
    %v2165 = vadd.f32 %v2163, 1e-05
    %v2166 = vadd.f32 %v2164, 1e-05
    %v2167 = vrsqrt.pop %v2165
    %v2168 = vrsqrt.pop %v2166
    %v2169 = vmul.f32 %v2153, %v2167
    %v2170 = vmul.f32 %v2154, %v2168
    %v2171 = vlaneseq
    %v2172 = vshrl.u32 %v2171, 7
    %v2173 = vsub.s32 0, %v2172
    %v2174 = vrot.slane %v1296, %v2173
    %v2175 = vmul.f32 %v2169, %v2174
    %v2176 = vmul.f32 %v2170, %v2174
    %v2177 = vlaneseq
    %v2178 = vshrl.u32 %v2177, 7
    %v2179 = vsub.s32 0, %v2178
    %v2180 = vrot.slane %v1297, %v2179
    %v2181 = vadd.f32 %v2175, %v2180
    %v2182 = vadd.f32 %v2176, %v2180
    %v2183 = vlaneseq
    %v2184 = vshrl.u32 %v2183, 7
    %v2185 = vsub.s32 0, %v2184
    %v2186 = vrot.slane %v1298, %v2185
    %v2188 = vsel %vm50, %v2181, 0
    %v2191 = vsel %vm50, %v2182, 0
    %2193 = vmatprep.subr.mxu0 0.0
    %2194 = vmatpush1.msra.mxu0 %v1282
    %2195 = vmatprep.subr.mxu0 0.0
    %2196 = vmatpush1.msra.mxu0 %v1283
    %2197 = vmatprep.subr.mxu0 0.0
    %2198 = vmatpush1.msra.mxu0 %v1284
    %2199 = vmatprep.subr.mxu0 0.0
    %2200 = vmatpush1.msra.mxu0 %v1285
    %2201 = vmatprep.subr.mxu0 0.0
    %2202 = vmatpush1.msra.mxu0 0.0
    %2203 = vmatprep.subr.mxu0 0.0
    %2204 = vmatpush1.msra.mxu0 0.0
    %2205 = vmatprep.subr.mxu0 0.0
    %2206 = vmatpush1.msra.mxu0 0.0
    %2207 = vmatprep.subr.mxu0 0.0
    %2208 = vmatpush1.msra.mxu0 0.0
    %2209 = vmatprep.subr.mxu0 0.0
    %2210 = vmatpush1.msra.mxu0 0.0
    %2211 = vmatprep.subr.mxu0 0.0
    %2212 = vmatpush1.msra.mxu0 0.0
    %2213 = vmatprep.subr.mxu0 0.0
    %2214 = vmatpush1.msra.mxu0 0.0
    %2215 = vmatprep.subr.mxu0 0.0
    %2216 = vmatpush1.msra.mxu0 0.0
    %2217 = vmatprep.subr.mxu0 0.0
    %2218 = vmatpush1.msra.mxu0 0.0
    %2219 = vmatprep.subr.mxu0 0.0
    %2220 = vmatpush1.msra.mxu0 0.0
    %2221 = vmatprep.subr.mxu0 0.0
    %2222 = vmatpush1.msra.mxu0 0.0
    %2223 = vmatprep.subr.mxu0 0.0
    %2224 = vmatpush1.msra.mxu0 0.0
    %2225 = vmatprep.subr.mxu0 0.0
    %2226 = vmatpush1.msra.mxu0 0.0
    %2227 = vmatprep.subr.mxu0 0.0
    %2228 = vmatpush1.msra.mxu0 0.0
    %2229 = vmatprep.subr.mxu0 0.0
    %2230 = vmatpush1.msra.mxu0 0.0
    %2231 = vmatprep.subr.mxu0 0.0
    %2232 = vmatpush1.msra.mxu0 0.0
    %2233 = vmatprep.subr.mxu0 0.0
    %2234 = vmatpush1.msra.mxu0 0.0
    %2235 = vmatprep.subr.mxu0 0.0
    %2236 = vmatpush1.msra.mxu0 0.0
    %2237 = vmatprep.subr.mxu0 0.0
    %2238 = vmatpush1.msra.mxu0 0.0
    %2239 = vmatprep.subr.mxu0 0.0
    %2240 = vmatpush1.msra.mxu0 0.0
    %2241 = vmatprep.subr.mxu0 0.0
    %2242 = vmatpush1.msra.mxu0 0.0
    %2243 = vmatprep.subr.mxu0 0.0
    %2244 = vmatpush1.msra.mxu0 0.0
    %2245 = vmatprep.subr.mxu0 0.0
    %2246 = vmatpush1.msra.mxu0 0.0
    %2247 = vmatprep.subr.mxu0 0.0
    %2248 = vmatpush1.msra.mxu0 0.0
    %2249 = vmatprep.subr.mxu0 0.0
    %2250 = vmatpush1.msra.mxu0 0.0
    %2251 = vmatprep.subr.mxu0 0.0
    %2252 = vmatpush1.msra.mxu0 0.0
    %2253 = vmatprep.subr.mxu0 0.0
    %2254 = vmatpush1.msra.mxu0 0.0
    %2255 = vmatprep.subr.mxu0 0.0
    %2256 = vmatpush1.msra.mxu0 0.0
    %2257 = vmatprep.mubr.f32.mxu0 0.0
    %2258 = vmatmul.mubr.f32.gmra.mrb[0].mxu0 %v2188
    %v2259 = vpop.f32.mrb[0].mxu0
    %v2260 = vadd.f32 %v2186, %v2259
    %v2261 = vpop.f32.mrb[0].mxu0
    %2262 = vmatprep.mubr.f32.mxu0 0.0
    %2263 = vmatmul.mubr.f32.gmra.mrb[0].mxu0 %v2191
    %v2264 = vpop.f32.mrb[0].mxu0
    %v2265 = vadd.f32 %v2186, %v2264
    %v2266 = vpop.f32.mrb[0].mxu0
    %2267 = vdwg.mxu0
    %v2268 = vmax.f32 %v2260, 0.0
    %v2269 = vmax.f32 %v2265, 0.0
    %v2270 = vlaneseq
    %v2271 = vshrl.u32 %v2270, 7
    %v2272 = vsub.s32 0, %v2271
    %v2273 = vrot.slane %v1299, %v2272
    %v2275 = vsel %vm598, %v2268, 0
    %v2278 = vsel %vm598, %v2269, 0
    %2280 = vmatprep.subr.mxu0 0.0
    %2281 = vmatpush1.msra.mxu0 %v1286
    %2282 = vmatprep.subr.mxu0 0.0
    %2283 = vmatpush1.msra.mxu0 %v1287
    %2284 = vmatprep.subr.mxu0 0.0
    %2285 = vmatpush1.msra.mxu0 %v1288
    %2286 = vmatprep.subr.mxu0 0.0
    %2287 = vmatpush1.msra.mxu0 %v1289
    %2288 = vmatprep.subr.mxu0 0.0
    %2289 = vmatpush1.msra.mxu0 %v1290
    %2290 = vmatprep.subr.mxu0 0.0
    %2291 = vmatpush1.msra.mxu0 %v1291
    %2292 = vmatprep.subr.mxu0 0.0
    %2293 = vmatpush1.msra.mxu0 %v1292
    %2294 = vmatprep.subr.mxu0 0.0
    %2295 = vmatpush1.msra.mxu0 %v1293
    %2296 = vmatprep.subr.mxu0 0.0
    %2297 = vmatpush1.msra.mxu0 0.0
    %2298 = vmatprep.subr.mxu0 0.0
    %2299 = vmatpush1.msra.mxu0 0.0
    %2300 = vmatprep.subr.mxu0 0.0
    %2301 = vmatpush1.msra.mxu0 0.0
    %2302 = vmatprep.subr.mxu0 0.0
    %2303 = vmatpush1.msra.mxu0 0.0
    %2304 = vmatprep.subr.mxu0 0.0
    %2305 = vmatpush1.msra.mxu0 0.0
    %2306 = vmatprep.subr.mxu0 0.0
    %2307 = vmatpush1.msra.mxu0 0.0
    %2308 = vmatprep.subr.mxu0 0.0
    %2309 = vmatpush1.msra.mxu0 0.0
    %2310 = vmatprep.subr.mxu0 0.0
    %2311 = vmatpush1.msra.mxu0 0.0
    %2312 = vmatprep.subr.mxu0 0.0
    %2313 = vmatpush1.msra.mxu0 0.0
    %2314 = vmatprep.subr.mxu0 0.0
    %2315 = vmatpush1.msra.mxu0 0.0
    %2316 = vmatprep.subr.mxu0 0.0
    %2317 = vmatpush1.msra.mxu0 0.0
    %2318 = vmatprep.subr.mxu0 0.0
    %2319 = vmatpush1.msra.mxu0 0.0
    %2320 = vmatprep.subr.mxu0 0.0
    %2321 = vmatpush1.msra.mxu0 0.0
    %2322 = vmatprep.subr.mxu0 0.0
    %2323 = vmatpush1.msra.mxu0 0.0
    %2324 = vmatprep.subr.mxu0 0.0
    %2325 = vmatpush1.msra.mxu0 0.0
    %2326 = vmatprep.subr.mxu0 0.0
    %2327 = vmatpush1.msra.mxu0 0.0
    %2328 = vmatprep.subr.mxu0 0.0
    %2329 = vmatpush1.msra.mxu0 0.0
    %2330 = vmatprep.subr.mxu0 0.0
    %2331 = vmatpush1.msra.mxu0 0.0
    %2332 = vmatprep.subr.mxu0 0.0
    %2333 = vmatpush1.msra.mxu0 0.0
    %2334 = vmatprep.subr.mxu0 0.0
    %2335 = vmatpush1.msra.mxu0 0.0
    %2336 = vmatprep.subr.mxu0 0.0
    %2337 = vmatpush1.msra.mxu0 0.0
    %2338 = vmatprep.subr.mxu0 0.0
    %2339 = vmatpush1.msra.mxu0 0.0
    %2340 = vmatprep.subr.mxu0 0.0
    %2341 = vmatpush1.msra.mxu0 0.0
    %2342 = vmatprep.subr.mxu0 0.0
    %2343 = vmatpush1.msra.mxu0 0.0
    %2344 = vmatprep.mubr.f32.mxu0 0.0
    %2345 = vmatmul.mubr.f32.gmra.mrb[0].mxu0 %v2275
    %v2346 = vpop.f32.mrb[0].mxu0
    %v2347 = vadd.f32 %v2273, %v2346
    %v2348 = vpop.f32.mrb[0].mxu0
    %2349 = vmatprep.mubr.f32.mxu0 0.0
    %2350 = vmatmul.mubr.f32.gmra.mrb[0].mxu0 %v2278
    %v2351 = vpop.f32.mrb[0].mxu0
    %v2352 = vadd.f32 %v2273, %v2351
    %v2353 = vpop.f32.mrb[0].mxu0
    %2354 = vdwg.mxu0
    %v2355 = vadd.f32 %v2181, %v2347
    %v2356 = vadd.f32 %v2182, %v2352
    %v2357 = vsel %vm50, %v2355, 0.0
    %2358 = vadd.xlane.f32.xlu0 %v2357
    %v2359 = vpop.xlane.xlu0 %2358
    %v2360 = vsel %vm50, %v2356, 0.0
    %2361 = vadd.xlane.f32.xlu0 %v2360
    %v2362 = vpop.xlane.xlu0 %2361
    %v2363 = vmul.f32 %v2359, %v57
    %v2364 = vmul.f32 %v2362, %v57
    %v2365 = vsub.f32 %v2355, %v2363
    %v2366 = vsub.f32 %v2356, %v2364
    %v2367 = vmul.f32 %v2365, %v2365
    %v2368 = vmul.f32 %v2366, %v2366
    %v2369 = vsel %vm50, %v2367, 0.0
    %2370 = vadd.xlane.f32.xlu0 %v2369
    %v2371 = vpop.xlane.xlu0 %2370
    %v2372 = vsel %vm50, %v2368, 0.0
    %2373 = vadd.xlane.f32.xlu0 %v2372
    %v2374 = vpop.xlane.xlu0 %2373
    %v2375 = vmul.f32 %v2371, %v57
    %v2376 = vmul.f32 %v2374, %v57
    %v2377 = vadd.f32 %v2375, 1e-05
    %v2378 = vadd.f32 %v2376, 1e-05
    %v2379 = vrsqrt.pop %v2377
    %v2380 = vrsqrt.pop %v2378
    %v2381 = vmul.f32 %v2365, %v2379
    %v2382 = vmul.f32 %v2366, %v2380
    %v2383 = vlaneseq
    %v2384 = vshrl.u32 %v2383, 7
    %v2385 = vsub.s32 0, %v2384
    %v2386 = vrot.slane %v1300, %v2385
    %v2387 = vmul.f32 %v2381, %v2386
    %v2388 = vmul.f32 %v2382, %v2386
    %v2389 = vlaneseq
    %v2390 = vshrl.u32 %v2389, 7
    %v2391 = vsub.s32 0, %v2390
    %v2392 = vrot.slane %v1301, %v2391
    %v2393 = vadd.f32 %v2387, %v2392
    %v2394 = vadd.f32 %v2388, %v2392
    %v2396 = vsel %vm203, %v24, 0
    %2398 = vmatprep.subr.mxu0 0.0
    %2399 = vmatpush1.msra.mxu0 %v2393
    %2400 = vmatprep.subr.mxu0 0.0
    %2401 = vmatpush1.msra.mxu0 %v2394
    %2402 = vmatprep.subr.mxu0 0.0
    %2403 = vmatpush1.msra.mxu0 0.0
    %2404 = vmatprep.subr.mxu0 0.0
    %2405 = vmatpush1.msra.mxu0 0.0
    %2406 = vmatprep.subr.mxu0 0.0
    %2407 = vmatpush1.msra.mxu0 0.0
    %2408 = vmatprep.subr.mxu0 0.0
    %2409 = vmatpush1.msra.mxu0 0.0
    %2410 = vmatprep.subr.mxu0 0.0
    %2411 = vmatpush1.msra.mxu0 0.0
    %2412 = vmatprep.subr.mxu0 0.0
    %2413 = vmatpush1.msra.mxu0 0.0
    %2414 = vmatprep.subr.mxu0 0.0
    %2415 = vmatpush1.msra.mxu0 0.0
    %2416 = vmatprep.subr.mxu0 0.0
    %2417 = vmatpush1.msra.mxu0 0.0
    %2418 = vmatprep.subr.mxu0 0.0
    %2419 = vmatpush1.msra.mxu0 0.0
    %2420 = vmatprep.subr.mxu0 0.0
    %2421 = vmatpush1.msra.mxu0 0.0
    %2422 = vmatprep.subr.mxu0 0.0
    %2423 = vmatpush1.msra.mxu0 0.0
    %2424 = vmatprep.subr.mxu0 0.0
    %2425 = vmatpush1.msra.mxu0 0.0
    %2426 = vmatprep.subr.mxu0 0.0
    %2427 = vmatpush1.msra.mxu0 0.0
    %2428 = vmatprep.subr.mxu0 0.0
    %2429 = vmatpush1.msra.mxu0 0.0
    %2430 = vmatprep.subr.mxu0 0.0
    %2431 = vmatpush1.msra.mxu0 0.0
    %2432 = vmatprep.subr.mxu0 0.0
    %2433 = vmatpush1.msra.mxu0 0.0
    %2434 = vmatprep.subr.mxu0 0.0
    %2435 = vmatpush1.msra.mxu0 0.0
    %2436 = vmatprep.subr.mxu0 0.0
    %2437 = vmatpush1.msra.mxu0 0.0
    %2438 = vmatprep.subr.mxu0 0.0
    %2439 = vmatpush1.msra.mxu0 0.0
    %2440 = vmatprep.subr.mxu0 0.0
    %2441 = vmatpush1.msra.mxu0 0.0
    %2442 = vmatprep.subr.mxu0 0.0
    %2443 = vmatpush1.msra.mxu0 0.0
    %2444 = vmatprep.subr.mxu0 0.0
    %2445 = vmatpush1.msra.mxu0 0.0
    %2446 = vmatprep.subr.mxu0 0.0
    %2447 = vmatpush1.msra.mxu0 0.0
    %2448 = vmatprep.subr.mxu0 0.0
    %2449 = vmatpush1.msra.mxu0 0.0
    %2450 = vmatprep.subr.mxu0 0.0
    %2451 = vmatpush1.msra.mxu0 0.0
    %2452 = vmatprep.subr.mxu0 0.0
    %2453 = vmatpush1.msra.mxu0 0.0
    %2454 = vmatprep.subr.mxu0 0.0
    %2455 = vmatpush1.msra.mxu0 0.0
    %2456 = vmatprep.subr.mxu0 0.0
    %2457 = vmatpush1.msra.mxu0 0.0
    %2458 = vmatprep.subr.mxu0 0.0
    %2459 = vmatpush1.msra.mxu0 0.0
    %2460 = vmatprep.subr.mxu0 0.0
    %2461 = vmatpush1.msra.mxu0 0.0
    %2462 = vmatprep.mubr.f32.mxu0 0.0
    %2463 = vmatmul.mubr.f32.gmra.mrb[0].mxu0 %v2396
    %v2464 = vpop.f32.mrb[0].mxu0
    %v2465 = vadd.f32 0.0, %v2464
    %v2466 = vpop.f32.mrb[0].mxu0
    %2467 = vdwg.mxu0
    %v2468 = vlaneseq
    %v2469 = vshrl.u32 %v2468, 7
    %v2470 = vsub.s32 0, %v2469
    %v2471 = vrot.slane %v45, %v2470
    %v2473 = vsel %vm50, %v2465, 0
    %2475 = vmatprep.subr.mxu0 0.0
    %2476 = vmatpush1.msra.mxu0 %v46
    %2477 = vmatprep.subr.mxu0 0.0
    %2478 = vmatpush1.msra.mxu0 %v47
    %2479 = vmatprep.subr.mxu0 0.0
    %2480 = vmatpush1.msra.mxu0 %v48
    %2481 = vmatprep.subr.mxu0 0.0
    %2482 = vmatpush1.msra.mxu0 %v49
    %2483 = vmatprep.subr.mxu0 0.0
    %2484 = vmatpush1.msra.mxu0 0.0
    %2485 = vmatprep.subr.mxu0 0.0
    %2486 = vmatpush1.msra.mxu0 0.0
    %2487 = vmatprep.subr.mxu0 0.0
    %2488 = vmatpush1.msra.mxu0 0.0
    %2489 = vmatprep.subr.mxu0 0.0
    %2490 = vmatpush1.msra.mxu0 0.0
    %2491 = vmatprep.subr.mxu0 0.0
    %2492 = vmatpush1.msra.mxu0 0.0
    %2493 = vmatprep.subr.mxu0 0.0
    %2494 = vmatpush1.msra.mxu0 0.0
    %2495 = vmatprep.subr.mxu0 0.0
    %2496 = vmatpush1.msra.mxu0 0.0
    %2497 = vmatprep.subr.mxu0 0.0
    %2498 = vmatpush1.msra.mxu0 0.0
    %2499 = vmatprep.subr.mxu0 0.0
    %2500 = vmatpush1.msra.mxu0 0.0
    %2501 = vmatprep.subr.mxu0 0.0
    %2502 = vmatpush1.msra.mxu0 0.0
    %2503 = vmatprep.subr.mxu0 0.0
    %2504 = vmatpush1.msra.mxu0 0.0
    %2505 = vmatprep.subr.mxu0 0.0
    %2506 = vmatpush1.msra.mxu0 0.0
    %2507 = vmatprep.subr.mxu0 0.0
    %2508 = vmatpush1.msra.mxu0 0.0
    %2509 = vmatprep.subr.mxu0 0.0
    %2510 = vmatpush1.msra.mxu0 0.0
    %2511 = vmatprep.subr.mxu0 0.0
    %2512 = vmatpush1.msra.mxu0 0.0
    %2513 = vmatprep.subr.mxu0 0.0
    %2514 = vmatpush1.msra.mxu0 0.0
    %2515 = vmatprep.subr.mxu0 0.0
    %2516 = vmatpush1.msra.mxu0 0.0
    %2517 = vmatprep.subr.mxu0 0.0
    %2518 = vmatpush1.msra.mxu0 0.0
    %2519 = vmatprep.subr.mxu0 0.0
    %2520 = vmatpush1.msra.mxu0 0.0
    %2521 = vmatprep.subr.mxu0 0.0
    %2522 = vmatpush1.msra.mxu0 0.0
    %2523 = vmatprep.subr.mxu0 0.0
    %2524 = vmatpush1.msra.mxu0 0.0
    %2525 = vmatprep.subr.mxu0 0.0
    %2526 = vmatpush1.msra.mxu0 0.0
    %2527 = vmatprep.subr.mxu0 0.0
    %2528 = vmatpush1.msra.mxu0 0.0
    %2529 = vmatprep.subr.mxu0 0.0
    %2530 = vmatpush1.msra.mxu0 0.0
    %2531 = vmatprep.subr.mxu0 0.0
    %2532 = vmatpush1.msra.mxu0 0.0
    %2533 = vmatprep.subr.mxu0 0.0
    %2534 = vmatpush1.msra.mxu0 0.0
    %2535 = vmatprep.subr.mxu0 0.0
    %2536 = vmatpush1.msra.mxu0 0.0
    %2537 = vmatprep.subr.mxu0 0.0
    %2538 = vmatpush1.msra.mxu0 0.0
    %2539 = vmatprep.mubr.f32.mxu0 0.0
    %2540 = vmatmul.mubr.f32.gmra.mrb[0].mxu0 %v2473
    %v2541 = vpop.f32.mrb[0].mxu0
    %v2542 = vadd.f32 %v2471, %v2541
    %v2543 = vpop.f32.mrb[0].mxu0
    %2544 = vdwg.mxu0
    %vm2545 = vcmask 9216
    %2546 = vst.msk [vmem:[#allocation2] sm:$0x3] %vm2545, %v2542
    // Predicated region
    $region10: #{_forward_core.1} parent=1 // pred_check
      _
    $region11: #{_forward_core.1} parent=1 // pred_check_branch
      %2548 = sbr.rel (0) target = $region13
    $region12: #{_forward_core.1} parent=1 // pred_region
      %s2550 = ssub.s32 32, 32
      %2551 = vsyncadd [#allocation3], %s2550
      %s2553 = sshll.u32 [#allocation2], 4
      %s2554 = int_to_ptr.vmem [resolvable:$true] %s2553
      %2556 = dma.vmem_to_hbm [thread:$0]  %s2554, 32, %s2, [#allocation3]
    $region13: #{_forward_core.1} parent=1 // pred_fallthru
      _
    // Predicated region
    $region14: #{_forward_core.1} parent=1 // pred_check
      _
    $region15: #{_forward_core.1} parent=1 // pred_check_branch
      %2558 = sbr.rel (0) target = $region17
    $region16: #{_forward_core.1} parent=1 // pred_region
      _
    $region17: #{_forward_core.1} parent=1 // pred_fallthru
      _
    // Predicated region
    $region18: #{_forward_core.1} parent=1 // pred_check
      _
    $region19: #{_forward_core.1} parent=1 // pred_check_branch
      %2560 = sbr.rel (0) target = $region21
    $region20: #{_forward_core.1} parent=1 // pred_region
      %2561 = dma.done [#allocation3], 32
    $region21: #{_forward_core.1} parent=1 // pred_fallthru
      _
    // Predicated region
    $region22: #{_forward_core.1} parent=1 // pred_check
      _
    $region23: #{_forward_core.1} parent=1 // pred_check_branch
      %2563 = sbr.rel (0) target = $region25
    $region24: #{_forward_core.1} parent=1 // pred_region
      _
    $region25: #{_forward_core.1} parent=1 // pred_fallthru
      _
    %2564 = vsyncpa [#allocation3], 1

</llo_original>
